<compile_context>
chip_gen: v7x
topology: tpu7x:2x2x1
jax: 0.10.0
libtpu: 0.0.40
codegen_flags: <defaults>
</compile_context>

<pallas_src>
import math
from functools import partial

import numpy as np
import jax
import jax.numpy as jnp
from jax import lax
from jax.experimental import pallas as pl
from jax.experimental.pallas import tpu as pltpu


def _round_up(n, m):
    return ((n + m - 1) // m) * m


def _pick_h_tile(h, target=8):
    """Largest divisor of h that is <= target (so grid blocks tile H exactly)."""
    th = min(target, h)
    while h % th:
        th -= 1
    return th


def _dft_mats(width, kpad):
    """DFT / ortho-irfft matrices for the first K = width//2+1 bins, zero-padded to kpad.

    fc[k, w]  =  cos(2*pi*k*w/W)                     (forward Re)
    fs[k, w]  = -sin(2*pi*k*w/W)                     (forward Im, minus sign baked in)
    ic[w, k]  =  wk * cos(2*pi*k*w/W) / sqrt(W)      (inverse, multiplies Re spec)
    isn[w, k] = -wk * sin(2*pi*k*w/W) / sqrt(W)      (inverse, multiplies Im spec)
    with wk = 2 except DC (and Nyquist for even W) = 1 (hermitian fold + ortho norm).
    """
    k_full = width // 2 + 1
    w = np.arange(width, dtype=np.float64)
    k = np.arange(k_full, dtype=np.float64)
    ang = 2.0 * np.pi * np.outer(k, w) / width                      # (K, W)

    fc = np.zeros((kpad, width), np.float32)
    fs = np.zeros((kpad, width), np.float32)
    fc[:k_full] = np.cos(ang)
    fs[:k_full] = -np.sin(ang)

    wk = np.full((k_full,), 2.0)
    wk[0] = 1.0
    if width % 2 == 0:
        wk[-1] = 1.0
    ic = np.zeros((width, kpad), np.float32)
    isn = np.zeros((width, kpad), np.float32)
    ic[:, :k_full] = (wk[None, :] * np.cos(ang.T)) / math.sqrt(width)
    isn[:, :k_full] = (-wk[None, :] * np.sin(ang.T)) / math.sqrt(width)
    return fc, fs, ic, isn


def _swin_pc_kernel(x_ref, fc_ref, fs_ref, ic_ref, is_ref, w_ref, b_ref, o_ref,
                    *, eps, thr):
    """x_ref/o_ref: (1,TH,W,C); fc/fs_ref: (KP,W); ic/is_ref: (W,KP); w/b_ref: (1,C)."""
    _, TH, W, C = x_ref.shape
    KP = fc_ref.shape[0]
    inv_sqrt_w = 1.0 / math.sqrt(W)

    # ---- LayerNorm over channels (lane axis), no affine; f32 VPU math -----------------
    x = x_ref[...].reshape(TH, W, C).astype(jnp.float32)
    mean = jnp.mean(x, axis=-1, keepdims=True)
    xc = x - mean
    var = jnp.mean(xc * xc, axis=-1, keepdims=True)
    norm = xc * lax.rsqrt(var + eps)

    # ---- forward DFT over W: batched MXU matmuls, channels stay on lanes ---------------
    fc = jnp.broadcast_to(fc_ref[...], (TH, KP, W))
    fs = jnp.broadcast_to(fs_ref[...], (TH, KP, W))
    re_p = jnp.einsum('hkw,hwc->hkc', fc, x, preferred_element_type=jnp.float32)
    im_p = jnp.einsum('hkw,hwc->hkc', fs, x, preferred_element_type=jnp.float32)
    re_n = jnp.einsum('hkw,hwc->hkc', fc, norm, preferred_element_type=jnp.float32)
    im_n = jnp.einsum('hkw,hwc->hkc', fs, norm, preferred_element_type=jnp.float32)

    # ---- amp / phase algebra (cos/sin of atan2 computed without trig) -----------------
    # Padded bins (k >= K) have re = im = 0 -> re_c = thr, rsqrt stays finite, and the
    # zero-padded inverse columns kill their contribution.  Requires thr > 0.
    amp = jnp.sqrt(jnp.maximum(re_n * re_n + im_n * im_n, thr))        # replace_denormals
    re_c = jnp.where(jnp.abs(re_p) < thr, thr, re_p)                   # replace_denormals
    scale = amp * lax.rsqrt(re_c * re_c + im_p * im_p) * inv_sqrt_w
    s_re = scale * re_c                                 # amp * cos(phase) / sqrt(W)
    s_im = scale * im_p                                 # amp * sin(phase) / sqrt(W)

    # ---- ortho irfft over the first K bins (batched MXU matmuls) ----------------------
    ic = jnp.broadcast_to(ic_ref[...], (TH, W, KP))
    isn = jnp.broadcast_to(is_ref[...], (TH, W, KP))
    y = (jnp.einsum('hwk,hkc->hwc', ic, s_re, preferred_element_type=jnp.float32)
         + jnp.einsum('hwk,hkc->hwc', isn, s_im, preferred_element_type=jnp.float32))

    # ---- per-channel affine, write back channels-last ---------------------------------
    y = y * w_ref[...].reshape(1, 1, C) + b_ref[...].reshape(1, 1, C)
    o_ref[...] = y.reshape(1, TH, W, C).astype(o_ref.dtype)


def swin_pc_forward(x, weight, bias, *, eps=1e-5, thr=1e-10, h_tile=8):
    """x: (B, H, W, C) channels-last; weight/bias: (C,). Returns (B, H, W, C) in x.dtype."""
    B, H, W, C = x.shape
    K = W // 2 + 1
    KP = _round_up(K, 8)                      # spectral dim lives on sublanes -> pad to 8
    TH = _pick_h_tile(H, h_tile)

    fc_np, fs_np, ic_np, is_np = _dft_mats(W, KP)
    fc = jnp.asarray(fc_np)                   # (KP, W) f32
    fs = jnp.asarray(fs_np)                   # (KP, W) f32
    ic = jnp.asarray(ic_np)                   # (W, KP) f32
    isn = jnp.asarray(is_np)                  # (W, KP) f32
    w2 = weight.astype(jnp.float32).reshape(1, C)
    b2 = bias.astype(jnp.float32).reshape(1, C)

    return pl.pallas_call(
        partial(_swin_pc_kernel, eps=eps, thr=thr),
        grid=(B, H // TH),
        out_shape=jax.ShapeDtypeStruct((B, H, W, C), x.dtype),
        in_specs=[
            pl.BlockSpec((1, TH, W, C), lambda b, h: (b, h, 0, 0)),
            pl.BlockSpec((KP, W), lambda b, h: (0, 0)),
            pl.BlockSpec((KP, W), lambda b, h: (0, 0)),
            pl.BlockSpec((W, KP), lambda b, h: (0, 0)),
            pl.BlockSpec((W, KP), lambda b, h: (0, 0)),
            pl.BlockSpec((1, C), lambda b, h: (0, 0)),
            pl.BlockSpec((1, C), lambda b, h: (0, 0)),
        ],
        out_specs=pl.BlockSpec((1, TH, W, C), lambda b, h: (b, h, 0, 0)),
        compiler_params=pltpu.CompilerParams(
            dimension_semantics=("parallel", "parallel"),
            vmem_limit_bytes=32 * 1024 * 1024),
    )(x, fc, fs, ic, isn, w2, b2)


# ------------------------- pure-numpy reference (for self-check) -----------------------

def _replace_denormals_np(v, thr):
    return np.where(np.abs(v) < thr, thr, v)


def swin_pc_reference_np(x, weight, bias, eps=1e-5, thr=1e-10):
    x = np.asarray(x, np.float64)
    weight = np.asarray(weight, np.float64)
    bias = np.asarray(bias, np.float64)
    mean = x.mean(-1, keepdims=True)
    var = ((x - mean) ** 2).mean(-1, keepdims=True)
    norm = (x - mean) / np.sqrt(var + eps)
    xp = np.transpose(x, (0, 3, 1, 2))
    npm = np.transpose(norm, (0, 3, 1, 2))
    fx = np.fft.fft(xp, axis=-1)
    fn = np.fft.fft(npm, axis=-1)
    phase = np.arctan2(np.imag(fx), _replace_denormals_np(np.real(fx), thr))
    amp = np.sqrt(_replace_denormals_np(np.real(fn) ** 2 + np.imag(fn) ** 2, thr))
    W = xp.shape[-1]
    spec = (np.cos(phase) + 1j * np.sin(phase)) * amp / math.sqrt(W)
    res = np.fft.irfft(spec[..., : W // 2 + 1], n=W, norm='ortho', axis=-1)
    res = np.transpose(res, (0, 2, 3, 1))
    return res * weight + bias


if __name__ == "__main__":
    key = jax.random.PRNGKey(0)
    kx, kw, kb = jax.random.split(key, 3)
    B, H, W, C = 2, 16, 16, 32
    x = jax.random.normal(kx, (B, H, W, C), jnp.float32)
    weight = 1.0 + 0.1 * jax.random.normal(kw, (C,), jnp.float32)
    bias = 0.1 * jax.random.normal(kb, (C,), jnp.float32)

    out = jax.jit(swin_pc_forward)(x, weight, bias)
    out = jax.block_until_ready(out)

    assert out.shape == (B, H, W, C)
    assert bool(jnp.all(jnp.isfinite(out)))

    ref = swin_pc_reference_np(np.asarray(x), np.asarray(weight), np.asarray(bias))
    mae = float(np.mean(np.abs(np.asarray(out, np.float64) - ref)))
    assert mae < 5e-2, f"mean abs err too large: {mae}"
    print("KERNEL_OK")
</pallas_src>

<mosaic_0001>
module attributes {stable_mosaic.version = 11 : i64} {
  func.func @_swin_pc_kernel(%arg0: i32, %arg1: i32, %arg2: memref<1x8x16x32xf32, #tpu.memory_space<vmem>>, %arg3: memref<16x16xf32, #tpu.memory_space<vmem>>, %arg4: memref<16x16xf32, #tpu.memory_space<vmem>>, %arg5: memref<16x16xf32, #tpu.memory_space<vmem>>, %arg6: memref<16x16xf32, #tpu.memory_space<vmem>>, %arg7: memref<1x32xf32, #tpu.memory_space<vmem>>, %arg8: memref<1x32xf32, #tpu.memory_space<vmem>>, %arg9: memref<1x8x16x32xf32, #tpu.memory_space<vmem>>) attributes {dimension_semantics = [#tpu.dimension_semantics<parallel>, #tpu.dimension_semantics<parallel>], iteration_bounds = array<i64: 2, 2>, scalar_prefetch = 0 : i64, scratch_operands = 0 : i64, tpu.core_type = #tpu.core_type<tc>, window_params = [{transform_indices = @transform_0, window_bounds = array<i64: 1, 8, 16, 32>}, {pipeline_mode = #tpu.pipeline_mode<synchronous>, transform_indices = @transform_1, window_bounds = array<i64: 16, 16>}, {pipeline_mode = #tpu.pipeline_mode<synchronous>, transform_indices = @transform_2, window_bounds = array<i64: 16, 16>}, {pipeline_mode = #tpu.pipeline_mode<synchronous>, transform_indices = @transform_3, window_bounds = array<i64: 16, 16>}, {pipeline_mode = #tpu.pipeline_mode<synchronous>, transform_indices = @transform_4, window_bounds = array<i64: 16, 16>}, {pipeline_mode = #tpu.pipeline_mode<synchronous>, transform_indices = @transform_5, window_bounds = array<i64: 1, 32>}, {pipeline_mode = #tpu.pipeline_mode<synchronous>, transform_indices = @transform_6, window_bounds = array<i64: 1, 32>}, {transform_indices = @transform_7, window_bounds = array<i64: 1, 8, 16, 32>}]} {
    %c0 = arith.constant 0 : index
    %c0_0 = arith.constant 0 : index
    %c0_1 = arith.constant 0 : index
    %c0_2 = arith.constant 0 : index
    %0 = vector.load %arg2[%c0, %c0_0, %c0_1, %c0_2] : memref<1x8x16x32xf32, #tpu.memory_space<vmem>>, vector<1x8x16x32xf32>
    %1 = vector.shape_cast %0 : vector<1x8x16x32xf32> to vector<8x16x32xf32>
    %cst = arith.constant dense<0.000000e+00> : vector<8x16xf32>
    %2 = vector.multi_reduction <add>, %1, %cst [2] : vector<8x16x32xf32> to vector<8x16xf32>
    %3 = vector.shape_cast %2 : vector<8x16xf32> to vector<8x16x1xf32>
    %cst_3 = arith.constant 3.200000e+01 : f32
    %4 = vector.broadcast %cst_3 : f32 to vector<8x16x1xf32>
    %5 = arith.divf %3, %4 : vector<8x16x1xf32>
    %6 = vector.broadcast %5 : vector<8x16x1xf32> to vector<8x16x32xf32>
    %7 = arith.subf %1, %6 : vector<8x16x32xf32>
    %8 = arith.mulf %7, %7 : vector<8x16x32xf32>
    %cst_4 = arith.constant dense<0.000000e+00> : vector<8x16xf32>
    %9 = vector.multi_reduction <add>, %8, %cst_4 [2] : vector<8x16x32xf32> to vector<8x16xf32>
    %10 = vector.shape_cast %9 : vector<8x16xf32> to vector<8x16x1xf32>
    %cst_5 = arith.constant 3.200000e+01 : f32
    %11 = vector.broadcast %cst_5 : f32 to vector<8x16x1xf32>
    %12 = arith.divf %10, %11 : vector<8x16x1xf32>
    %cst_6 = arith.constant 9.99999974E-6 : f32
    %13 = vector.broadcast %cst_6 : f32 to vector<8x16x1xf32>
    %14 = arith.addf %12, %13 : vector<8x16x1xf32>
    %15 = math.rsqrt %14 : vector<8x16x1xf32>
    %16 = vector.broadcast %15 : vector<8x16x1xf32> to vector<8x16x32xf32>
    %17 = arith.mulf %7, %16 : vector<8x16x32xf32>
    %c0_7 = arith.constant 0 : index
    %c0_8 = arith.constant 0 : index
    %18 = vector.load %arg3[%c0_7, %c0_8] : memref<16x16xf32, #tpu.memory_space<vmem>>, vector<16x16xf32>
    %19 = vector.shape_cast %18 : vector<16x16xf32> to vector<1x16x16xf32>
    %20 = vector.broadcast %19 : vector<1x16x16xf32> to vector<8x16x16xf32>
    %c0_9 = arith.constant 0 : index
    %c0_10 = arith.constant 0 : index
    %21 = vector.load %arg4[%c0_9, %c0_10] : memref<16x16xf32, #tpu.memory_space<vmem>>, vector<16x16xf32>
    %22 = vector.shape_cast %21 : vector<16x16xf32> to vector<1x16x16xf32>
    %23 = vector.broadcast %22 : vector<1x16x16xf32> to vector<8x16x16xf32>
    "tpu.trace_start"() <{level = 10 : i32, message = "hkw,hwc->hkc"}> : () -> ()
    %cst_11 = arith.constant dense<0.000000e+00> : vector<8x16x32xf32>
    %24 = tpu.matmul %20, %1, %cst_11 {dimension_numbers = #tpu.dot_dimension_numbers<[2], [1], [1], [2], [0, 0, 0, 1, 1, 2], [0], [0]>} : vector<8x16x16xf32>, vector<8x16x32xf32>, vector<8x16x32xf32> -> vector<8x16x32xf32>
    %cst_12 = arith.constant dense<0.000000e+00> : vector<8x16x32xf32>
    %25 = tpu.matmul %23, %1, %cst_12 {dimension_numbers = #tpu.dot_dimension_numbers<[2], [1], [1], [2], [0, 0, 0, 1, 1, 2], [0], [0]>} : vector<8x16x16xf32>, vector<8x16x32xf32>, vector<8x16x32xf32> -> vector<8x16x32xf32>
    %cst_13 = arith.constant dense<0.000000e+00> : vector<8x16x32xf32>
    %26 = tpu.matmul %20, %17, %cst_13 {dimension_numbers = #tpu.dot_dimension_numbers<[2], [1], [1], [2], [0, 0, 0, 1, 1, 2], [0], [0]>} : vector<8x16x16xf32>, vector<8x16x32xf32>, vector<8x16x32xf32> -> vector<8x16x32xf32>
    %cst_14 = arith.constant dense<0.000000e+00> : vector<8x16x32xf32>
    %27 = tpu.matmul %23, %17, %cst_14 {dimension_numbers = #tpu.dot_dimension_numbers<[2], [1], [1], [2], [0, 0, 0, 1, 1, 2], [0], [0]>} : vector<8x16x16xf32>, vector<8x16x32xf32>, vector<8x16x32xf32> -> vector<8x16x32xf32>
    "tpu.trace_stop"() : () -> ()
    %28 = arith.mulf %26, %26 : vector<8x16x32xf32>
    %29 = arith.mulf %27, %27 : vector<8x16x32xf32>
    %30 = arith.addf %28, %29 : vector<8x16x32xf32>
    %cst_15 = arith.constant 1.000000e-10 : f32
    %31 = vector.broadcast %cst_15 : f32 to vector<8x16x32xf32>
    %32 = arith.maximumf %30, %31 : vector<8x16x32xf32>
    %33 = math.sqrt %32 : vector<8x16x32xf32>
    %34 = math.absf %24 : vector<8x16x32xf32>
    %cst_16 = arith.constant 1.000000e-10 : f32
    %35 = vector.broadcast %cst_16 : f32 to vector<8x16x32xf32>
    %36 = arith.cmpf olt, %34, %35 : vector<8x16x32xf32>
    %cst_17 = arith.constant 1.000000e-10 : f32
    %37 = vector.broadcast %cst_17 : f32 to vector<8x16x32xf32>
    %38 = arith.select %36, %37, %24 : vector<8x16x32xi1>, vector<8x16x32xf32>
    %39 = arith.mulf %38, %38 : vector<8x16x32xf32>
    %40 = arith.mulf %25, %25 : vector<8x16x32xf32>
    %41 = arith.addf %39, %40 : vector<8x16x32xf32>
    %42 = math.rsqrt %41 : vector<8x16x32xf32>
    %43 = arith.mulf %33, %42 : vector<8x16x32xf32>
    %cst_18 = arith.constant 2.500000e-01 : f32
    %44 = vector.broadcast %cst_18 : f32 to vector<8x16x32xf32>
    %45 = arith.mulf %43, %44 : vector<8x16x32xf32>
    %46 = arith.mulf %45, %38 : vector<8x16x32xf32>
    %47 = arith.mulf %45, %25 : vector<8x16x32xf32>
    %c0_19 = arith.constant 0 : index
    %c0_20 = arith.constant 0 : index
    %48 = vector.load %arg5[%c0_19, %c0_20] : memref<16x16xf32, #tpu.memory_space<vmem>>, vector<16x16xf32>
    %49 = vector.shape_cast %48 : vector<16x16xf32> to vector<1x16x16xf32>
    %50 = vector.broadcast %49 : vector<1x16x16xf32> to vector<8x16x16xf32>
    %c0_21 = arith.constant 0 : index
    %c0_22 = arith.constant 0 : index
    %51 = vector.load %arg6[%c0_21, %c0_22] : memref<16x16xf32, #tpu.memory_space<vmem>>, vector<16x16xf32>
    %52 = vector.shape_cast %51 : vector<16x16xf32> to vector<1x16x16xf32>
    %53 = vector.broadcast %52 : vector<1x16x16xf32> to vector<8x16x16xf32>
    "tpu.trace_start"() <{level = 10 : i32, message = "hwk,hkc->hwc"}> : () -> ()
    %cst_23 = arith.constant dense<0.000000e+00> : vector<8x16x32xf32>
    %54 = tpu.matmul %50, %46, %cst_23 {dimension_numbers = #tpu.dot_dimension_numbers<[2], [1], [1], [2], [0, 0, 0, 1, 1, 2], [0], [0]>} : vector<8x16x16xf32>, vector<8x16x32xf32>, vector<8x16x32xf32> -> vector<8x16x32xf32>
    %cst_24 = arith.constant dense<0.000000e+00> : vector<8x16x32xf32>
    %55 = tpu.matmul %53, %47, %cst_24 {dimension_numbers = #tpu.dot_dimension_numbers<[2], [1], [1], [2], [0, 0, 0, 1, 1, 2], [0], [0]>} : vector<8x16x16xf32>, vector<8x16x32xf32>, vector<8x16x32xf32> -> vector<8x16x32xf32>
    "tpu.trace_stop"() : () -> ()
    %56 = arith.addf %54, %55 : vector<8x16x32xf32>
    %c0_25 = arith.constant 0 : index
    %c0_26 = arith.constant 0 : index
    %57 = vector.load %arg7[%c0_25, %c0_26] : memref<1x32xf32, #tpu.memory_space<vmem>>, vector<1x32xf32>
    %58 = vector.shape_cast %57 : vector<1x32xf32> to vector<1x1x32xf32>
    %59 = vector.broadcast %58 : vector<1x1x32xf32> to vector<8x16x32xf32>
    %60 = arith.mulf %56, %59 : vector<8x16x32xf32>
    %c0_27 = arith.constant 0 : index
    %c0_28 = arith.constant 0 : index
    %61 = vector.load %arg8[%c0_27, %c0_28] : memref<1x32xf32, #tpu.memory_space<vmem>>, vector<1x32xf32>
    %62 = vector.shape_cast %61 : vector<1x32xf32> to vector<1x1x32xf32>
    %63 = vector.broadcast %62 : vector<1x1x32xf32> to vector<8x16x32xf32>
    %64 = arith.addf %60, %63 : vector<8x16x32xf32>
    %65 = vector.shape_cast %64 : vector<8x16x32xf32> to vector<1x8x16x32xf32>
    %c0_29 = arith.constant 0 : index
    %c0_30 = arith.constant 0 : index
    %c0_31 = arith.constant 0 : index
    %c0_32 = arith.constant 0 : index
    %66 = vector.load %arg9[%c0_29, %c0_30, %c0_31, %c0_32] : memref<1x8x16x32xf32, #tpu.memory_space<vmem>>, vector<1x8x16x32xf32>
    tpu.vector_store %arg9[%c0_29, %c0_30, %c0_31, %c0_32], %65 {strides = array<i32>} : memref<1x8x16x32xf32, #tpu.memory_space<vmem>>, vector<1x8x16x32xf32>,
    return
  }
  func.func @transform_0(%arg0: i32, %arg1: i32) -> (i32, i32, i32, i32) {
    %c0_i32 = arith.constant 0 : i32
    %c0_i32_0 = arith.constant 0 : i32
    %c0_i32_1 = arith.constant 0 : i32
    return %arg0, %arg1, %c0_i32, %c0_i32_0 : i32, i32, i32, i32
  }
  func.func @transform_1(%arg0: i32, %arg1: i32) -> (i32, i32) {
    %c0_i32 = arith.constant 0 : i32
    %c0_i32_0 = arith.constant 0 : i32
    %c0_i32_1 = arith.constant 0 : i32
    return %c0_i32, %c0_i32_0 : i32, i32
  }
  func.func @transform_2(%arg0: i32, %arg1: i32) -> (i32, i32) {
    %c0_i32 = arith.constant 0 : i32
    %c0_i32_0 = arith.constant 0 : i32
    %c0_i32_1 = arith.constant 0 : i32
    return %c0_i32, %c0_i32_0 : i32, i32
  }
  func.func @transform_3(%arg0: i32, %arg1: i32) -> (i32, i32) {
    %c0_i32 = arith.constant 0 : i32
    %c0_i32_0 = arith.constant 0 : i32
    %c0_i32_1 = arith.constant 0 : i32
    return %c0_i32, %c0_i32_0 : i32, i32
  }
  func.func @transform_4(%arg0: i32, %arg1: i32) -> (i32, i32) {
    %c0_i32 = arith.constant 0 : i32
    %c0_i32_0 = arith.constant 0 : i32
    %c0_i32_1 = arith.constant 0 : i32
    return %c0_i32, %c0_i32_0 : i32, i32
  }
  func.func @transform_5(%arg0: i32, %arg1: i32) -> (i32, i32) {
    %c0_i32 = arith.constant 0 : i32
    %c0_i32_0 = arith.constant 0 : i32
    %c0_i32_1 = arith.constant 0 : i32
    return %c0_i32, %c0_i32_0 : i32, i32
  }
  func.func @transform_6(%arg0: i32, %arg1: i32) -> (i32, i32) {
    %c0_i32 = arith.constant 0 : i32
    %c0_i32_0 = arith.constant 0 : i32
    %c0_i32_1 = arith.constant 0 : i32
    return %c0_i32, %c0_i32_0 : i32, i32
  }
  func.func @transform_7(%arg0: i32, %arg1: i32) -> (i32, i32, i32, i32) {
    %c0_i32 = arith.constant 0 : i32
    %c0_i32_0 = arith.constant 0 : i32
    %c0_i32_1 = arith.constant 0 : i32
    return %arg0, %arg1, %c0_i32, %c0_i32_0 : i32, i32, i32, i32
  }
}

</mosaic_0001>

<llo_original>
// kernel: swin_pc_forward.1
$region0: #{swin_pc_forward.1}
  #allocation0 [shape = 'u32[]', space=smem, size = 0x4, offset = 0x4, fixed_abs, tag = 'smem constant byte address 0x4 - core index']
  #allocation1 [shape = 'u32[144,128]{1,0:T(1,128)}', space=vmem, size = 0x12000, scoped, tag = 'internal scratch']
  %s0 = inlined_call_operand.hbm [shape: f32[2,16,16,32], index: 0, kind: input, shape index: {}]
  %s1 = inlined_call_operand.hbm [shape: f32[16,16], index: 1, kind: input, shape index: {}]
  %s2 = inlined_call_operand.hbm [shape: f32[16,16], index: 2, kind: input, shape index: {}]
  %s3 = inlined_call_operand.hbm [shape: f32[16,16], index: 3, kind: input, shape index: {}]
  %s4 = inlined_call_operand.vmem [shape: f32[16,16], index: 4, kind: input, shape index: {}]
  %s5 = inlined_call_operand.vmem [shape: f32[1,32], index: 5, kind: input, shape index: {}]
  %s6 = inlined_call_operand.vmem [shape: f32[1,32], index: 6, kind: input, shape index: {}]
  %s7 = inlined_call_operand.hbm [shape: f32[2,16,16,32], index: 7, kind: output, shape index: {}]
  %s8 = sld [smem:[#allocation0]]
  $region77: #{swin_pc_forward.1} parent=0
    _
  %s10 = ssub.s32 1, %s8
  %s11 = scalar_select 0, %s10, %s8
  $region1: #{swin_pc_forward.1} parent=0
    #allocation2 [shape = 'u8[131072]{0}', space=vmem, size = 0x20000, scoped, tag = 'input window, operand 0']
    #allocation3 [shape = 's32[2]{0}', space=sflag, size = 0x8, scoped, tag = 'scoped memory for swin_pc_forward.1']
    #allocation4 [shape = 's32[2]{0}', space=sflag, size = 0x8, scoped, tag = 'scoped memory for swin_pc_forward.1']
    #allocation5 [shape = 'u8[8192]{0}', space=vmem, size = 0x2000, scoped, tag = 'input window, operand 1, single buffered']
    #allocation6 [shape = 's32[1]{0}', space=sflag, size = 0x4, scoped, tag = 'scoped memory for swin_pc_forward.1']
    #allocation7 [shape = 'u8[8192]{0}', space=vmem, size = 0x2000, scoped, tag = 'input window, operand 2, single buffered']
    #allocation8 [shape = 'u8[8192]{0}', space=vmem, size = 0x2000, scoped, tag = 'input window, operand 3, single buffered']
    #allocation9 [shape = 's32[1]{0}', space=sflag, size = 0x4, scoped, tag = 'scoped memory for swin_pc_forward.1']
    #allocation10 [shape = 'u8[131072]{0}', space=vmem, size = 0x20000, scoped, tag = 'output window, operand 0']
    %12 = vsyncpa [#allocation3], 0
    %s13 = scalar_lea.sflag [#allocation3], 1
    %14 = vsyncpa %s13, 0
    %15 = vsyncpa [#allocation6], 0
    %16 = vsyncpa [#allocation9], 0
    %17 = vsyncpa [#allocation4], 0
    %s18 = scalar_lea.sflag [#allocation4], 1
    %19 = vsyncpa %s18, 0
    loop: start=0, step=1, limit=6
    $region2: #{swin_pc_forward.1} parent=1 // loop_pre_header
      _
    $region3: #{swin_pc_forward.1} parent=1 // loop_header
      %s21 = sphi 0, %s25
      %p22 = scmp.ge.s32.totalorder %s21, 6
      %s28 = sphi 0, %s40
      %s29 = sphi 0, %s36
      %s30 = sphi 0, %s28
      %s31 = sphi 0, %s29
      %s32 = sphi 0, %s30
      %s33 = sphi 0, %s31
      %s45 = sphi 0, %s47
      %s48 = sphi 0, %s45
      %s49 = sphi 0, %s48
      %s65 = sphi 0, %s49
      %s69 = sphi 0, %s69
      %s71 = sphi 0, %s69
      %s72 = sphi 0, %s71
      %s86 = sphi 0, %s72
      %s90 = sphi 0, %s90
      %s92 = sphi 0, %s90
      %s93 = sphi 0, %s92
      %s107 = sphi 0, %s93
      %s111 = sphi 0, %s111
      %s113 = sphi 0, %s111
      %s114 = sphi 0, %s113
      %s128 = sphi 0, %s114
      %s132 = sphi 0, %s132
      %s134 = sphi 0, %s132
      %s135 = sphi 0, %s134
      %s149 = sphi 0, %s135
      %s153 = sphi 0, %s153
      %s155 = sphi 0, %s153
      %s156 = sphi 0, %s155
      %s170 = sphi 0, %s156
      %s174 = sphi 0, %s174
      %s176 = sphi 0, %s174
      %s177 = sphi 0, %s176
      %s191 = sphi 0, %s177
      %s199 = sphi 0, %s201
      %s202 = sphi 0, %s199
      %s203 = sphi 0, %s202
      %s219 = sphi 0, %s203
    $region4: #{swin_pc_forward.1} parent=1 // loop_header_branch
      %24 = sbr.rel (%p22) target = $region8
    $region5: #{swin_pc_forward.1} parent=1 // loop_body
      %s26 = ssub.s32 %s21, 1
      %s27 = ssub.s32 %s21, 2
      %s34 = sadd.s32 1, %s29
      %p35 = scmp.ge.s32.totalorder %s34, 2
      %s36 = scalar_select %p35, 0, %s34
      %s37 = sadd.s32 1, %s28
      %s38 = scalar_select %p35, %s37, %s28
      %p39 = scmp.ge.s32.totalorder %s38, 2
      %s40 = scalar_select %p39, 0, %s38
      %s41 = ssub.s32 %s28, %s40
      %s42 = ssub.s32 %s29, %s36
      %s43 = sor.u32 %s41, %s42
      %p44 = scmp.eq.s32.totalorder %s43, 0
      %s46 = sadd.s32 %s45, 1
      %s47 = scalar_select %p44, %s45, %s46
      %p50 = pneg %p44
      %p51 = scmp.eq.s32.totalorder %s21, 3
      %p52 = por %p50, %p51
      %p53 = scmp.ne.s32.totalorder %s45, %s48
      %p54 = scmp.eq.s32.totalorder %s21, 0
      %p55 = por %p53, %p54
      %p56 = scmp.ne.s32.totalorder %s45, %s48
      %p57 = scmp.eq.s32.totalorder %s26, 3
      %p58 = por %p56, %p57
      %p59 = scmp.ne.s32.totalorder %s48, %s49
      %p60 = scmp.eq.s32.totalorder %s26, 0
      %p61 = por %p59, %p60
      %p62 = scmp.ne.s32.totalorder %s48, %s49
      %p63 = scmp.eq.s32.totalorder %s27, 3
      %p64 = por %p62, %p63
      %p66 = scmp.ne.s32.totalorder %s49, %s65
      %p67 = scmp.eq.s32.totalorder %s27, 0
      %p68 = por %p66, %p67
      %s70 = sadd.s32 %s69, 1
      %p73 = scmp.eq.s32.totalorder %s21, 3
      %p74 = scmp.ne.s32.totalorder %s69, %s71
      %p75 = scmp.eq.s32.totalorder %s21, 0
      %p76 = por %p74, %p75
      %p77 = scmp.ne.s32.totalorder %s69, %s71
      %p78 = scmp.eq.s32.totalorder %s26, 3
      %p79 = por %p77, %p78
      %p80 = scmp.ne.s32.totalorder %s71, %s72
      %p81 = scmp.eq.s32.totalorder %s26, 0
      %p82 = por %p80, %p81
      %p83 = scmp.ne.s32.totalorder %s71, %s72
      %p84 = scmp.eq.s32.totalorder %s27, 3
      %p85 = por %p83, %p84
      %p87 = scmp.ne.s32.totalorder %s72, %s86
      %p88 = scmp.eq.s32.totalorder %s27, 0
      %p89 = por %p87, %p88
      %s91 = sadd.s32 %s90, 1
      %p94 = scmp.eq.s32.totalorder %s21, 3
      %p95 = scmp.ne.s32.totalorder %s90, %s92
      %p96 = scmp.eq.s32.totalorder %s21, 0
      %p97 = por %p95, %p96
      %p98 = scmp.ne.s32.totalorder %s90, %s92
      %p99 = scmp.eq.s32.totalorder %s26, 3
      %p100 = por %p98, %p99
      %p101 = scmp.ne.s32.totalorder %s92, %s93
      %p102 = scmp.eq.s32.totalorder %s26, 0
      %p103 = por %p101, %p102
      %p104 = scmp.ne.s32.totalorder %s92, %s93
      %p105 = scmp.eq.s32.totalorder %s27, 3
      %p106 = por %p104, %p105
      %p108 = scmp.ne.s32.totalorder %s93, %s107
      %p109 = scmp.eq.s32.totalorder %s27, 0
      %p110 = por %p108, %p109
      %s112 = sadd.s32 %s111, 1
      %p115 = scmp.eq.s32.totalorder %s21, 3
      %p116 = scmp.ne.s32.totalorder %s111, %s113
      %p117 = scmp.eq.s32.totalorder %s21, 0
      %p118 = por %p116, %p117
      %p119 = scmp.ne.s32.totalorder %s111, %s113
      %p120 = scmp.eq.s32.totalorder %s26, 3
      %p121 = por %p119, %p120
      %p122 = scmp.ne.s32.totalorder %s113, %s114
      %p123 = scmp.eq.s32.totalorder %s26, 0
      %p124 = por %p122, %p123
      %p125 = scmp.ne.s32.totalorder %s113, %s114
      %p126 = scmp.eq.s32.totalorder %s27, 3
      %p127 = por %p125, %p126
      %p129 = scmp.ne.s32.totalorder %s114, %s128
      %p130 = scmp.eq.s32.totalorder %s27, 0
      %p131 = por %p129, %p130
      %s133 = sadd.s32 %s132, 1
      %p136 = scmp.eq.s32.totalorder %s21, 3
      %p137 = scmp.ne.s32.totalorder %s132, %s134
      %p138 = scmp.eq.s32.totalorder %s21, 0
      %p139 = por %p137, %p138
      %p140 = scmp.ne.s32.totalorder %s132, %s134
      %p141 = scmp.eq.s32.totalorder %s26, 3
      %p142 = por %p140, %p141
      %p143 = scmp.ne.s32.totalorder %s134, %s135
      %p144 = scmp.eq.s32.totalorder %s26, 0
      %p145 = por %p143, %p144
      %p146 = scmp.ne.s32.totalorder %s134, %s135
      %p147 = scmp.eq.s32.totalorder %s27, 3
      %p148 = por %p146, %p147
      %p150 = scmp.ne.s32.totalorder %s135, %s149
      %p151 = scmp.eq.s32.totalorder %s27, 0
      %p152 = por %p150, %p151
      %s154 = sadd.s32 %s153, 1
      %p157 = scmp.eq.s32.totalorder %s21, 3
      %p158 = scmp.ne.s32.totalorder %s153, %s155
      %p159 = scmp.eq.s32.totalorder %s21, 0
      %p160 = por %p158, %p159
      %p161 = scmp.ne.s32.totalorder %s153, %s155
      %p162 = scmp.eq.s32.totalorder %s26, 3
      %p163 = por %p161, %p162
      %p164 = scmp.ne.s32.totalorder %s155, %s156
      %p165 = scmp.eq.s32.totalorder %s26, 0
      %p166 = por %p164, %p165
      %p167 = scmp.ne.s32.totalorder %s155, %s156
      %p168 = scmp.eq.s32.totalorder %s27, 3
      %p169 = por %p167, %p168
      %p171 = scmp.ne.s32.totalorder %s156, %s170
      %p172 = scmp.eq.s32.totalorder %s27, 0
      %p173 = por %p171, %p172
      %s175 = sadd.s32 %s174, 1
      %p178 = scmp.eq.s32.totalorder %s21, 3
      %p179 = scmp.ne.s32.totalorder %s174, %s176
      %p180 = scmp.eq.s32.totalorder %s21, 0
      %p181 = por %p179, %p180
      %p182 = scmp.ne.s32.totalorder %s174, %s176
      %p183 = scmp.eq.s32.totalorder %s26, 3
      %p184 = por %p182, %p183
      %p185 = scmp.ne.s32.totalorder %s176, %s177
      %p186 = scmp.eq.s32.totalorder %s26, 0
      %p187 = por %p185, %p186
      %p188 = scmp.ne.s32.totalorder %s176, %s177
      %p189 = scmp.eq.s32.totalorder %s27, 3
      %p190 = por %p188, %p189
      %p192 = scmp.ne.s32.totalorder %s177, %s191
      %p193 = scmp.eq.s32.totalorder %s27, 0
      %p194 = por %p192, %p193
      %s195 = ssub.s32 %s28, %s40
      %s196 = ssub.s32 %s29, %s36
      %s197 = sor.u32 %s195, %s196
      %p198 = scmp.eq.s32.totalorder %s197, 0
      %s200 = sadd.s32 %s199, 1
      %s201 = scalar_select %p198, %s199, %s200
      %p204 = pneg %p198
      %p205 = scmp.eq.s32.totalorder %s21, 3
      %p206 = por %p204, %p205
      %p207 = scmp.ne.s32.totalorder %s199, %s202
      %p208 = scmp.eq.s32.totalorder %s21, 0
      %p209 = por %p207, %p208
      %p210 = scmp.ne.s32.totalorder %s199, %s202
      %p211 = scmp.eq.s32.totalorder %s26, 3
      %p212 = por %p210, %p211
      %p213 = scmp.ne.s32.totalorder %s202, %s203
      %p214 = scmp.eq.s32.totalorder %s26, 0
      %p215 = por %p213, %p214
      %p216 = scmp.ne.s32.totalorder %s202, %s203
      %p217 = scmp.eq.s32.totalorder %s27, 3
      %p218 = por %p216, %p217
      %p220 = scmp.ne.s32.totalorder %s203, %s219
      %p221 = scmp.eq.s32.totalorder %s27, 0
      %p222 = por %p220, %p221
      %p223 = scmp.le.s32.totalorder 1, %s21
      %p224 = scmp.lt.s32.totalorder %s21, 5
      %p225 = pnand %p223, %p224
      %p226 = pneg %p225
      // Predicated region
      $region9: #{swin_pc_forward.1} parent=5 // pred_check
        _
      $region10: #{swin_pc_forward.1} parent=5 // pred_check_branch
        %228 = sbr.rel (%p225) target = $region12
      $region11: #{swin_pc_forward.1} parent=5 // pred_region
        %s229 = ssub.s32 %s21, 1
        // Predicated region
        $region13: #{swin_pc_forward.1} parent=11 // pred_check
          %p230 = pneg %p82
        $region14: #{swin_pc_forward.1} parent=11 // pred_check_branch
          %232 = sbr.rel (%p230) target = $region16
        $region15: #{swin_pc_forward.1} parent=11 // pred_region
          %s234 = ssub.s32 256, 256
          %235 = vsyncadd [#allocation6], %s234
          %s236 = sshll.u32 [#allocation5], 4
          %s237 = int_to_ptr.vmem [resolvable:$true] %s236
          %242 = dma.hbm_to_vmem [thread:$0]  %s1, 256, %s237, [#allocation6], 128, 128, 8
        $region16: #{swin_pc_forward.1} parent=11 // pred_fallthru
          _
        // Predicated region
        $region17: #{swin_pc_forward.1} parent=11 // pred_check
          %p243 = pneg %p103
        $region18: #{swin_pc_forward.1} parent=11 // pred_check_branch
          %245 = sbr.rel (%p243) target = $region20
        $region19: #{swin_pc_forward.1} parent=11 // pred_region
          %s247 = ssub.s32 256, 256
          %248 = vsyncadd [#allocation6], %s247
          %s249 = sshll.u32 [#allocation7], 4
          %s250 = int_to_ptr.vmem [resolvable:$true] %s249
          %255 = dma.hbm_to_vmem [thread:$0]  %s2, 256, %s250, [#allocation6], 128, 128, 8
        $region20: #{swin_pc_forward.1} parent=11 // pred_fallthru
          _
        // Predicated region
        $region21: #{swin_pc_forward.1} parent=11 // pred_check
          %p256 = pneg %p124
        $region22: #{swin_pc_forward.1} parent=11 // pred_check_branch
          %258 = sbr.rel (%p256) target = $region24
        $region23: #{swin_pc_forward.1} parent=11 // pred_region
          %s260 = ssub.s32 256, 256
          %261 = vsyncadd [#allocation9], %s260
          %s262 = sshll.u32 [#allocation8], 4
          %s263 = int_to_ptr.vmem [resolvable:$true] %s262
          %268 = dma.hbm_to_vmem [thread:$0]  %s3, 256, %s263, [#allocation9], 128, 128, 8
        $region24: #{swin_pc_forward.1} parent=11 // pred_fallthru
          _
        // Predicated region
        $region25: #{swin_pc_forward.1} parent=11 // pred_check
          %p269 = pneg %p145
        $region26: #{swin_pc_forward.1} parent=11 // pred_check_branch
          %271 = sbr.rel (%p269) target = $region28
        $region27: #{swin_pc_forward.1} parent=11 // pred_region
          _
        $region28: #{swin_pc_forward.1} parent=11 // pred_fallthru
          _
        // Predicated region
        $region29: #{swin_pc_forward.1} parent=11 // pred_check
          %p272 = pneg %p166
        $region30: #{swin_pc_forward.1} parent=11 // pred_check_branch
          %274 = sbr.rel (%p272) target = $region32
        $region31: #{swin_pc_forward.1} parent=11 // pred_region
          _
        $region32: #{swin_pc_forward.1} parent=11 // pred_fallthru
          _
        // Predicated region
        $region33: #{swin_pc_forward.1} parent=11 // pred_check
          %p275 = pneg %p187
        $region34: #{swin_pc_forward.1} parent=11 // pred_check_branch
          %277 = sbr.rel (%p275) target = $region36
        $region35: #{swin_pc_forward.1} parent=11 // pred_region
          _
        $region36: #{swin_pc_forward.1} parent=11 // pred_fallthru
          _
      $region12: #{swin_pc_forward.1} parent=5 // pred_fallthru
        _
      %p278 = scmp.lt.s32.totalorder %s21, 4
      // Predicated region
      $region37: #{swin_pc_forward.1} parent=5 // pred_check
        %p279 = pneg %p278
      $region38: #{swin_pc_forward.1} parent=5 // pred_check_branch
        %281 = sbr.rel (%p279) target = $region40
      $region39: #{swin_pc_forward.1} parent=5 // pred_region
        // Predicated region
        $region41: #{swin_pc_forward.1} parent=39 // pred_check
          %p282 = pneg %p55
        $region42: #{swin_pc_forward.1} parent=39 // pred_check_branch
          %284 = sbr.rel (%p282) target = $region44
        $region43: #{swin_pc_forward.1} parent=39 // pred_region
          %s285 = sand.u32 %s45, 1
          %s286 = scalar_lea.sflag [#allocation3], %s285
          %s287 = sand.u32 %s45, 1
          %s288 = smul.addr %s287, 128
          %s289 = scalar_lea.vmem [#allocation2], %s288
          %s290 = smul.u32 8, %s29
          %s292 = ssub.s32 2048, 2048
          %293 = vsyncadd %s286, %s292
          %s294 = smul.addr %s290, 2
          %s295 = smul.addr %s28, 32
          %s296 = sadd.s32 %s294, %s295
          %s297 = smul.addr %s296, 128
          %s298 = scalar_lea.hbm %s0, %s297
          %s299 = sshll.u32 %s289, 4
          %s300 = int_to_ptr.vmem [resolvable:$true] %s299
          %305 = dma.hbm_to_vmem [thread:$0]  %s298, 2048, %s300, %s286, 128, 128, 8
        $region44: #{swin_pc_forward.1} parent=39 // pred_fallthru
          _
      $region40: #{swin_pc_forward.1} parent=5 // pred_fallthru
        _
      %p306 = scmp.le.s32.totalorder 1, %s21
      %p307 = scmp.lt.s32.totalorder %s21, 5
      %p308 = pnand %p306, %p307
      %p309 = pneg %p308
      // Predicated region
      $region45: #{swin_pc_forward.1} parent=5 // pred_check
        _
      $region46: #{swin_pc_forward.1} parent=5 // pred_check_branch
        %311 = sbr.rel (%p308) target = $region48
      $region47: #{swin_pc_forward.1} parent=5 // pred_region
        %s312 = ssub.s32 %s21, 1
        %s313 = sand.u32 %s48, 1
        %s314 = scalar_lea.sflag [#allocation3], %s313
        %s315 = sand.u32 %s48, 1
        %s316 = smul.addr %s315, 128
        %s317 = scalar_lea.vmem [#allocation2], %s316
        // Predicated region
        $region49: #{swin_pc_forward.1} parent=47 // pred_check
          %p318 = pneg %p61
        $region50: #{swin_pc_forward.1} parent=47 // pred_check_branch
          %320 = sbr.rel (%p318) target = $region52
        $region51: #{swin_pc_forward.1} parent=47 // pred_region
          %321 = dma.done %s314, 2048
        $region52: #{swin_pc_forward.1} parent=47 // pred_fallthru
          _
        // Predicated region
        $region53: #{swin_pc_forward.1} parent=47 // pred_check
          %p322 = pneg %p82
        $region54: #{swin_pc_forward.1} parent=47 // pred_check_branch
          %324 = sbr.rel (%p322) target = $region56
        $region55: #{swin_pc_forward.1} parent=47 // pred_region
          %325 = dma.done [#allocation6], 256
        $region56: #{swin_pc_forward.1} parent=47 // pred_fallthru
          _
        // Predicated region
        $region57: #{swin_pc_forward.1} parent=47 // pred_check
          %p326 = pneg %p103
        $region58: #{swin_pc_forward.1} parent=47 // pred_check_branch
          %328 = sbr.rel (%p326) target = $region60
        $region59: #{swin_pc_forward.1} parent=47 // pred_region
          %329 = dma.done [#allocation6], 256
        $region60: #{swin_pc_forward.1} parent=47 // pred_fallthru
          _
        // Predicated region
        $region61: #{swin_pc_forward.1} parent=47 // pred_check
          %p330 = pneg %p124
        $region62: #{swin_pc_forward.1} parent=47 // pred_check_branch
          %332 = sbr.rel (%p330) target = $region64
        $region63: #{swin_pc_forward.1} parent=47 // pred_region
          %333 = dma.done [#allocation9], 256
        $region64: #{swin_pc_forward.1} parent=47 // pred_fallthru
          _
        %s334 = sand.u32 %s48, 1
        %s335 = scalar_lea.sflag [#allocation3], %s334
        %s336 = sand.u32 %s48, 1
        %s337 = smul.addr %s336, 128
        %s338 = scalar_lea.vmem [#allocation2], %s337
        %p339 = pneg %p61
        %p340 = pneg %p58
        %p341 = pneg %p82
        %p342 = pneg %p79
        %p343 = pneg %p103
        %p344 = pneg %p100
        %p345 = pneg %p124
        %p346 = pneg %p121
        %p347 = pneg %p145
        %p348 = pneg %p142
        %p349 = pneg %p166
        %p350 = pneg %p163
        %p351 = pneg %p187
        %p352 = pneg %p184
        %p353 = pneg %p215
        %p354 = pneg %p212
        %s355 = sand.u32 %s202, 1
        %s356 = scalar_lea.sflag [#allocation4], %s355
        %s357 = sand.u32 %s202, 1
        %s358 = smul.addr %s357, 128
        %s359 = scalar_lea.vmem [#allocation10], %s358
        %s360 = smul.u32 8, %s31
        %s361 = smul.u32 8, %s31
        %v362 = vld [vmem:[%s317] sm:$0xff]
        %v363 = vld [vmem:[%s317 + $0x8] sm:$0xff]
        %v364 = vld [vmem:[%s317 + $0x10] sm:$0xff]
        %v365 = vld [vmem:[%s317 + $0x18] sm:$0xff]
        %v366 = vld [vmem:[%s317 + $0x20] sm:$0xff]
        %v367 = vld [vmem:[%s317 + $0x28] sm:$0xff]
        %v368 = vld [vmem:[%s317 + $0x30] sm:$0xff]
        %v369 = vld [vmem:[%s317 + $0x38] sm:$0xff]
        %v370 = vld [vmem:[%s317 + $0x40] sm:$0xff]
        %v371 = vld [vmem:[%s317 + $0x48] sm:$0xff]
        %v372 = vld [vmem:[%s317 + $0x50] sm:$0xff]
        %v373 = vld [vmem:[%s317 + $0x58] sm:$0xff]
        %v374 = vld [vmem:[%s317 + $0x60] sm:$0xff]
        %v375 = vld [vmem:[%s317 + $0x68] sm:$0xff]
        %v376 = vld [vmem:[%s317 + $0x70] sm:$0xff]
        %v377 = vld [vmem:[%s317 + $0x78] sm:$0xff]
        %vm378 = vcmask 261120
        %v379 = vsel %vm378, %v362, 0.0
        %380 = vadd.xlane.f32.xlu0 %v379
        %v381 = vpop.xlane.xlu0 %380
        %v382 = vsel %vm378, %v363, 0.0
        %383 = vadd.xlane.f32.xlu0 %v382
        %v384 = vpop.xlane.xlu0 %383
        %v385 = vsel %vm378, %v364, 0.0
        %386 = vadd.xlane.f32.xlu0 %v385
        %v387 = vpop.xlane.xlu0 %386
        %v388 = vsel %vm378, %v365, 0.0
        %389 = vadd.xlane.f32.xlu0 %v388
        %v390 = vpop.xlane.xlu0 %389
        %v391 = vsel %vm378, %v366, 0.0
        %392 = vadd.xlane.f32.xlu0 %v391
        %v393 = vpop.xlane.xlu0 %392
        %v394 = vsel %vm378, %v367, 0.0
        %395 = vadd.xlane.f32.xlu0 %v394
        %v396 = vpop.xlane.xlu0 %395
        %v397 = vsel %vm378, %v368, 0.0
        %398 = vadd.xlane.f32.xlu0 %v397
        %v399 = vpop.xlane.xlu0 %398
        %v400 = vsel %vm378, %v369, 0.0
        %401 = vadd.xlane.f32.xlu0 %v400
        %v402 = vpop.xlane.xlu0 %401
        %v403 = vsel %vm378, %v370, 0.0
        %404 = vadd.xlane.f32.xlu0 %v403
        %v405 = vpop.xlane.xlu0 %404
        %v406 = vsel %vm378, %v371, 0.0
        %407 = vadd.xlane.f32.xlu0 %v406
        %v408 = vpop.xlane.xlu0 %407
        %v409 = vsel %vm378, %v372, 0.0
        %410 = vadd.xlane.f32.xlu0 %v409
        %v411 = vpop.xlane.xlu0 %410
        %v412 = vsel %vm378, %v373, 0.0
        %413 = vadd.xlane.f32.xlu0 %v412
        %v414 = vpop.xlane.xlu0 %413
        %v415 = vsel %vm378, %v374, 0.0
        %416 = vadd.xlane.f32.xlu0 %v415
        %v417 = vpop.xlane.xlu0 %416
        %v418 = vsel %vm378, %v375, 0.0
        %419 = vadd.xlane.f32.xlu0 %v418
        %v420 = vpop.xlane.xlu0 %419
        %v421 = vsel %vm378, %v376, 0.0
        %422 = vadd.xlane.f32.xlu0 %v421
        %v423 = vpop.xlane.xlu0 %422
        %v424 = vsel %vm378, %v377, 0.0
        %425 = vadd.xlane.f32.xlu0 %v424
        %v426 = vpop.xlane.xlu0 %425
        %v427 = vrcp.pop 32.0
        %v428 = vmul.f32 %v381, %v427
        %v429 = vmul.f32 %v384, %v427
        %v430 = vmul.f32 %v387, %v427
        %v431 = vmul.f32 %v390, %v427
        %v432 = vmul.f32 %v393, %v427
        %v433 = vmul.f32 %v396, %v427
        %v434 = vmul.f32 %v399, %v427
        %v435 = vmul.f32 %v402, %v427
        %v436 = vmul.f32 %v405, %v427
        %v437 = vmul.f32 %v408, %v427
        %v438 = vmul.f32 %v411, %v427
        %v439 = vmul.f32 %v414, %v427
        %v440 = vmul.f32 %v417, %v427
        %v441 = vmul.f32 %v420, %v427
        %v442 = vmul.f32 %v423, %v427
        %v443 = vmul.f32 %v426, %v427
        %v444 = vsub.f32 %v362, %v428
        %v445 = vsub.f32 %v363, %v429
        %v446 = vsub.f32 %v364, %v430
        %v447 = vsub.f32 %v365, %v431
        %v448 = vsub.f32 %v366, %v432
        %v449 = vsub.f32 %v367, %v433
        %v450 = vsub.f32 %v368, %v434
        %v451 = vsub.f32 %v369, %v435
        %v452 = vsub.f32 %v370, %v436
        %v453 = vsub.f32 %v371, %v437
        %v454 = vsub.f32 %v372, %v438
        %v455 = vsub.f32 %v373, %v439
        %v456 = vsub.f32 %v374, %v440
        %v457 = vsub.f32 %v375, %v441
        %v458 = vsub.f32 %v376, %v442
        %v459 = vsub.f32 %v377, %v443
        %v460 = vmul.f32 %v444, %v444
        %v461 = vmul.f32 %v445, %v445
        %v462 = vmul.f32 %v446, %v446
        %v463 = vmul.f32 %v447, %v447
        %v464 = vmul.f32 %v448, %v448
        %v465 = vmul.f32 %v449, %v449
        %v466 = vmul.f32 %v450, %v450
        %v467 = vmul.f32 %v451, %v451
        %v468 = vmul.f32 %v452, %v452
        %v469 = vmul.f32 %v453, %v453
        %v470 = vmul.f32 %v454, %v454
        %v471 = vmul.f32 %v455, %v455
        %v472 = vmul.f32 %v456, %v456
        %v473 = vmul.f32 %v457, %v457
        %v474 = vmul.f32 %v458, %v458
        %v475 = vmul.f32 %v459, %v459
        %v476 = vsel %vm378, %v460, 0.0
        %477 = vadd.xlane.f32.xlu0 %v476
        %v478 = vpop.xlane.xlu0 %477
        %v479 = vsel %vm378, %v461, 0.0
        %480 = vadd.xlane.f32.xlu0 %v479
        %v481 = vpop.xlane.xlu0 %480
        %v482 = vsel %vm378, %v462, 0.0
        %483 = vadd.xlane.f32.xlu0 %v482
        %v484 = vpop.xlane.xlu0 %483
        %v485 = vsel %vm378, %v463, 0.0
        %486 = vadd.xlane.f32.xlu0 %v485
        %v487 = vpop.xlane.xlu0 %486
        %v488 = vsel %vm378, %v464, 0.0
        %489 = vadd.xlane.f32.xlu0 %v488
        %v490 = vpop.xlane.xlu0 %489
        %v491 = vsel %vm378, %v465, 0.0
        %492 = vadd.xlane.f32.xlu0 %v491
        %v493 = vpop.xlane.xlu0 %492
        %v494 = vsel %vm378, %v466, 0.0
        %495 = vadd.xlane.f32.xlu0 %v494
        %v496 = vpop.xlane.xlu0 %495
        %v497 = vsel %vm378, %v467, 0.0
        %498 = vadd.xlane.f32.xlu0 %v497
        %v499 = vpop.xlane.xlu0 %498
        %v500 = vsel %vm378, %v468, 0.0
        %501 = vadd.xlane.f32.xlu0 %v500
        %v502 = vpop.xlane.xlu0 %501
        %v503 = vsel %vm378, %v469, 0.0
        %504 = vadd.xlane.f32.xlu0 %v503
        %v505 = vpop.xlane.xlu0 %504
        %v506 = vsel %vm378, %v470, 0.0
        %507 = vadd.xlane.f32.xlu0 %v506
        %v508 = vpop.xlane.xlu0 %507
        %v509 = vsel %vm378, %v471, 0.0
        %510 = vadd.xlane.f32.xlu0 %v509
        %v511 = vpop.xlane.xlu0 %510
        %v512 = vsel %vm378, %v472, 0.0
        %513 = vadd.xlane.f32.xlu0 %v512
        %v514 = vpop.xlane.xlu0 %513
        %v515 = vsel %vm378, %v473, 0.0
        %516 = vadd.xlane.f32.xlu0 %v515
        %v517 = vpop.xlane.xlu0 %516
        %v518 = vsel %vm378, %v474, 0.0
        %519 = vadd.xlane.f32.xlu0 %v518
        %v520 = vpop.xlane.xlu0 %519
        %v521 = vsel %vm378, %v475, 0.0
        %522 = vadd.xlane.f32.xlu0 %v521
        %v523 = vpop.xlane.xlu0 %522
        %v524 = vmul.f32 %v478, %v427
        %v525 = vmul.f32 %v481, %v427
        %v526 = vmul.f32 %v484, %v427
        %v527 = vmul.f32 %v487, %v427
        %v528 = vmul.f32 %v490, %v427
        %v529 = vmul.f32 %v493, %v427
        %v530 = vmul.f32 %v496, %v427
        %v531 = vmul.f32 %v499, %v427
        %v532 = vmul.f32 %v502, %v427
        %v533 = vmul.f32 %v505, %v427
        %v534 = vmul.f32 %v508, %v427
        %v535 = vmul.f32 %v511, %v427
        %v536 = vmul.f32 %v514, %v427
        %v537 = vmul.f32 %v517, %v427
        %v538 = vmul.f32 %v520, %v427
        %v539 = vmul.f32 %v523, %v427
        %v540 = vadd.f32 %v524, 1e-05
        %v541 = vadd.f32 %v525, 1e-05
        %v542 = vadd.f32 %v526, 1e-05
        %v543 = vadd.f32 %v527, 1e-05
        %v544 = vadd.f32 %v528, 1e-05
        %v545 = vadd.f32 %v529, 1e-05
        %v546 = vadd.f32 %v530, 1e-05
        %v547 = vadd.f32 %v531, 1e-05
        %v548 = vadd.f32 %v532, 1e-05
        %v549 = vadd.f32 %v533, 1e-05
        %v550 = vadd.f32 %v534, 1e-05
        %v551 = vadd.f32 %v535, 1e-05
        %v552 = vadd.f32 %v536, 1e-05
        %v553 = vadd.f32 %v537, 1e-05
        %v554 = vadd.f32 %v538, 1e-05
        %v555 = vadd.f32 %v539, 1e-05
        %v556 = vrsqrt.pop %v540
        %v557 = vrsqrt.pop %v541
        %v558 = vrsqrt.pop %v542
        %v559 = vrsqrt.pop %v543
        %v560 = vrsqrt.pop %v544
        %v561 = vrsqrt.pop %v545
        %v562 = vrsqrt.pop %v546
        %v563 = vrsqrt.pop %v547
        %v564 = vrsqrt.pop %v548
        %v565 = vrsqrt.pop %v549
        %v566 = vrsqrt.pop %v550
        %v567 = vrsqrt.pop %v551
        %v568 = vrsqrt.pop %v552
        %v569 = vrsqrt.pop %v553
        %v570 = vrsqrt.pop %v554
        %v571 = vrsqrt.pop %v555
        %v572 = vmul.f32 %v444, %v556
        %v573 = vmul.f32 %v445, %v557
        %v574 = vmul.f32 %v446, %v558
        %v575 = vmul.f32 %v447, %v559
        %v576 = vmul.f32 %v448, %v560
        %v577 = vmul.f32 %v449, %v561
        %v578 = vmul.f32 %v450, %v562
        %v579 = vmul.f32 %v451, %v563
        %v580 = vmul.f32 %v452, %v564
        %v581 = vmul.f32 %v453, %v565
        %v582 = vmul.f32 %v454, %v566
        %v583 = vmul.f32 %v455, %v567
        %v584 = vmul.f32 %v456, %v568
        %v585 = vmul.f32 %v457, %v569
        %v586 = vmul.f32 %v458, %v570
        %v587 = vmul.f32 %v459, %v571
        %v588 = vld [vmem:[#allocation5] sm:$0xff]
        %v589 = vld [vmem:[#allocation5 + $0x8] sm:$0xff]
        %v590 = vld [vmem:[#allocation7] sm:$0xff]
        %v591 = vld [vmem:[#allocation7 + $0x8] sm:$0xff]
        %vm592 = vcmask 130048
        %v594 = vsel %vm592, %v588, 0
        %v597 = vsel %vm592, %v589, 0
        %599 = vmatprep.subr.mxu0 0.0
        %600 = vmatpush1.msra.mxu0 %v362
        %601 = vmatprep.subr.mxu0 0.0
        %602 = vmatpush1.msra.mxu0 %v363
        %603 = vmatprep.subr.mxu0 0.0
        %604 = vmatpush1.msra.mxu0 0.0
        %605 = vmatprep.subr.mxu0 0.0
        %606 = vmatpush1.msra.mxu0 0.0
        %607 = vmatprep.subr.mxu0 0.0
        %608 = vmatpush1.msra.mxu0 0.0
        %609 = vmatprep.subr.mxu0 0.0
        %610 = vmatpush1.msra.mxu0 0.0
        %611 = vmatprep.subr.mxu0 0.0
        %612 = vmatpush1.msra.mxu0 0.0
        %613 = vmatprep.subr.mxu0 0.0
        %614 = vmatpush1.msra.mxu0 0.0
        %615 = vmatprep.subr.mxu0 0.0
        %616 = vmatpush1.msra.mxu0 0.0
        %617 = vmatprep.subr.mxu0 0.0
        %618 = vmatpush1.msra.mxu0 0.0
        %619 = vmatprep.subr.mxu0 0.0
        %620 = vmatpush1.msra.mxu0 0.0
        %621 = vmatprep.subr.mxu0 0.0
        %622 = vmatpush1.msra.mxu0 0.0
        %623 = vmatprep.subr.mxu0 0.0
        %624 = vmatpush1.msra.mxu0 0.0
        %625 = vmatprep.subr.mxu0 0.0
        %626 = vmatpush1.msra.mxu0 0.0
        %627 = vmatprep.subr.mxu0 0.0
        %628 = vmatpush1.msra.mxu0 0.0
        %629 = vmatprep.subr.mxu0 0.0
        %630 = vmatpush1.msra.mxu0 0.0
        %631 = vmatprep.subr.mxu0 0.0
        %632 = vmatpush1.msra.mxu0 0.0
        %633 = vmatprep.subr.mxu0 0.0
        %634 = vmatpush1.msra.mxu0 0.0
        %635 = vmatprep.subr.mxu0 0.0
        %636 = vmatpush1.msra.mxu0 0.0
        %637 = vmatprep.subr.mxu0 0.0
        %638 = vmatpush1.msra.mxu0 0.0
        %639 = vmatprep.subr.mxu0 0.0
        %640 = vmatpush1.msra.mxu0 0.0
        %641 = vmatprep.subr.mxu0 0.0
        %642 = vmatpush1.msra.mxu0 0.0
        %643 = vmatprep.subr.mxu0 0.0
        %644 = vmatpush1.msra.mxu0 0.0
        %645 = vmatprep.subr.mxu0 0.0
        %646 = vmatpush1.msra.mxu0 0.0
        %647 = vmatprep.subr.mxu0 0.0
        %648 = vmatpush1.msra.mxu0 0.0
        %649 = vmatprep.subr.mxu0 0.0
        %650 = vmatpush1.msra.mxu0 0.0
        %651 = vmatprep.subr.mxu0 0.0
        %652 = vmatpush1.msra.mxu0 0.0
        %653 = vmatprep.subr.mxu0 0.0
        %654 = vmatpush1.msra.mxu0 0.0
        %655 = vmatprep.subr.mxu0 0.0
        %656 = vmatpush1.msra.mxu0 0.0
        %657 = vmatprep.subr.mxu0 0.0
        %658 = vmatpush1.msra.mxu0 0.0
        %659 = vmatprep.subr.mxu0 0.0
        %660 = vmatpush1.msra.mxu0 0.0
        %661 = vmatprep.subr.mxu0 0.0
        %662 = vmatpush1.msra.mxu0 0.0
        %663 = vmatprep.mubr.f32.mxu0 0.0
        %664 = vmatmul.mubr.f32.gmra.mrb[0].mxu0 %v594
        %v665 = vpop.f32.mrb[0].mxu0
        %v666 = vadd.f32 0.0, %v665
        %v667 = vpop.f32.mrb[0].mxu0
        %668 = vmatprep.mubr.f32.mxu0 0.0
        %669 = vmatmul.mubr.f32.gmra.mrb[0].mxu0 %v597
        %v670 = vpop.f32.mrb[0].mxu0
        %v671 = vadd.f32 0.0, %v670
        %v672 = vpop.f32.mrb[0].mxu0
        %673 = vdwg.mxu0
        %674 = vmatprep.subr.mxu0 0.0
        %675 = vmatpush1.msra.mxu0 %v364
        %676 = vmatprep.subr.mxu0 0.0
        %677 = vmatpush1.msra.mxu0 %v365
        %678 = vmatprep.subr.mxu0 0.0
        %679 = vmatpush1.msra.mxu0 0.0
        %680 = vmatprep.subr.mxu0 0.0
        %681 = vmatpush1.msra.mxu0 0.0
        %682 = vmatprep.subr.mxu0 0.0
        %683 = vmatpush1.msra.mxu0 0.0
        %684 = vmatprep.subr.mxu0 0.0
        %685 = vmatpush1.msra.mxu0 0.0
        %686 = vmatprep.subr.mxu0 0.0
        %687 = vmatpush1.msra.mxu0 0.0
        %688 = vmatprep.subr.mxu0 0.0
        %689 = vmatpush1.msra.mxu0 0.0
        %690 = vmatprep.subr.mxu0 0.0
        %691 = vmatpush1.msra.mxu0 0.0
        %692 = vmatprep.subr.mxu0 0.0
        %693 = vmatpush1.msra.mxu0 0.0
        %694 = vmatprep.subr.mxu0 0.0
        %695 = vmatpush1.msra.mxu0 0.0
        %696 = vmatprep.subr.mxu0 0.0
        %697 = vmatpush1.msra.mxu0 0.0
        %698 = vmatprep.subr.mxu0 0.0
        %699 = vmatpush1.msra.mxu0 0.0
        %700 = vmatprep.subr.mxu0 0.0
        %701 = vmatpush1.msra.mxu0 0.0
        %702 = vmatprep.subr.mxu0 0.0
        %703 = vmatpush1.msra.mxu0 0.0
        %704 = vmatprep.subr.mxu0 0.0
        %705 = vmatpush1.msra.mxu0 0.0
        %706 = vmatprep.subr.mxu0 0.0
        %707 = vmatpush1.msra.mxu0 0.0
        %708 = vmatprep.subr.mxu0 0.0
        %709 = vmatpush1.msra.mxu0 0.0
        %710 = vmatprep.subr.mxu0 0.0
        %711 = vmatpush1.msra.mxu0 0.0
        %712 = vmatprep.subr.mxu0 0.0
        %713 = vmatpush1.msra.mxu0 0.0
        %714 = vmatprep.subr.mxu0 0.0
        %715 = vmatpush1.msra.mxu0 0.0
        %716 = vmatprep.subr.mxu0 0.0
        %717 = vmatpush1.msra.mxu0 0.0
        %718 = vmatprep.subr.mxu0 0.0
        %719 = vmatpush1.msra.mxu0 0.0
        %720 = vmatprep.subr.mxu0 0.0
        %721 = vmatpush1.msra.mxu0 0.0
        %722 = vmatprep.subr.mxu0 0.0
        %723 = vmatpush1.msra.mxu0 0.0
        %724 = vmatprep.subr.mxu0 0.0
        %725 = vmatpush1.msra.mxu0 0.0
        %726 = vmatprep.subr.mxu0 0.0
        %727 = vmatpush1.msra.mxu0 0.0
        %728 = vmatprep.subr.mxu0 0.0
        %729 = vmatpush1.msra.mxu0 0.0
        %730 = vmatprep.subr.mxu0 0.0
        %731 = vmatpush1.msra.mxu0 0.0
        %732 = vmatprep.subr.mxu0 0.0
        %733 = vmatpush1.msra.mxu0 0.0
        %734 = vmatprep.subr.mxu0 0.0
        %735 = vmatpush1.msra.mxu0 0.0
        %736 = vmatprep.subr.mxu0 0.0
        %737 = vmatpush1.msra.mxu0 0.0
        %738 = vmatprep.mubr.f32.mxu0 0.0
        %739 = vmatmul.mubr.f32.gmra.mrb[0].mxu0 %v594
        %v740 = vpop.f32.mrb[0].mxu0
        %v741 = vadd.f32 0.0, %v740
        %v742 = vpop.f32.mrb[0].mxu0
        %743 = vmatprep.mubr.f32.mxu0 0.0
        %744 = vmatmul.mubr.f32.gmra.mrb[0].mxu0 %v597
        %v745 = vpop.f32.mrb[0].mxu0
        %v746 = vadd.f32 0.0, %v745
        %v747 = vpop.f32.mrb[0].mxu0
        %748 = vdwg.mxu0
        %749 = vmatprep.subr.mxu0 0.0
        %750 = vmatpush1.msra.mxu0 %v366
        %751 = vmatprep.subr.mxu0 0.0
        %752 = vmatpush1.msra.mxu0 %v367
        %753 = vmatprep.subr.mxu0 0.0
        %754 = vmatpush1.msra.mxu0 0.0
        %755 = vmatprep.subr.mxu0 0.0
        %756 = vmatpush1.msra.mxu0 0.0
        %757 = vmatprep.subr.mxu0 0.0
        %758 = vmatpush1.msra.mxu0 0.0
        %759 = vmatprep.subr.mxu0 0.0
        %760 = vmatpush1.msra.mxu0 0.0
        %761 = vmatprep.subr.mxu0 0.0
        %762 = vmatpush1.msra.mxu0 0.0
        %763 = vmatprep.subr.mxu0 0.0
        %764 = vmatpush1.msra.mxu0 0.0
        %765 = vmatprep.subr.mxu0 0.0
        %766 = vmatpush1.msra.mxu0 0.0
        %767 = vmatprep.subr.mxu0 0.0
        %768 = vmatpush1.msra.mxu0 0.0
        %769 = vmatprep.subr.mxu0 0.0
        %770 = vmatpush1.msra.mxu0 0.0
        %771 = vmatprep.subr.mxu0 0.0
        %772 = vmatpush1.msra.mxu0 0.0
        %773 = vmatprep.subr.mxu0 0.0
        %774 = vmatpush1.msra.mxu0 0.0
        %775 = vmatprep.subr.mxu0 0.0
        %776 = vmatpush1.msra.mxu0 0.0
        %777 = vmatprep.subr.mxu0 0.0
        %778 = vmatpush1.msra.mxu0 0.0
        %779 = vmatprep.subr.mxu0 0.0
        %780 = vmatpush1.msra.mxu0 0.0
        %781 = vmatprep.subr.mxu0 0.0
        %782 = vmatpush1.msra.mxu0 0.0
        %783 = vmatprep.subr.mxu0 0.0
        %784 = vmatpush1.msra.mxu0 0.0
        %785 = vmatprep.subr.mxu0 0.0
        %786 = vmatpush1.msra.mxu0 0.0
        %787 = vmatprep.subr.mxu0 0.0
        %788 = vmatpush1.msra.mxu0 0.0
        %789 = vmatprep.subr.mxu0 0.0
        %790 = vmatpush1.msra.mxu0 0.0
        %791 = vmatprep.subr.mxu0 0.0
        %792 = vmatpush1.msra.mxu0 0.0
        %793 = vmatprep.subr.mxu0 0.0
        %794 = vmatpush1.msra.mxu0 0.0
        %795 = vmatprep.subr.mxu0 0.0
        %796 = vmatpush1.msra.mxu0 0.0
        %797 = vmatprep.subr.mxu0 0.0
        %798 = vmatpush1.msra.mxu0 0.0
        %799 = vmatprep.subr.mxu0 0.0
        %800 = vmatpush1.msra.mxu0 0.0
        %801 = vmatprep.subr.mxu0 0.0
        %802 = vmatpush1.msra.mxu0 0.0
        %803 = vmatprep.subr.mxu0 0.0
        %804 = vmatpush1.msra.mxu0 0.0
        %805 = vmatprep.subr.mxu0 0.0
        %806 = vmatpush1.msra.mxu0 0.0
        %807 = vmatprep.subr.mxu0 0.0
        %808 = vmatpush1.msra.mxu0 0.0
        %809 = vmatprep.subr.mxu0 0.0
        %810 = vmatpush1.msra.mxu0 0.0
        %811 = vmatprep.subr.mxu0 0.0
        %812 = vmatpush1.msra.mxu0 0.0
        %813 = vmatprep.mubr.f32.mxu0 0.0
        %814 = vmatmul.mubr.f32.gmra.mrb[0].mxu0 %v594
        %v815 = vpop.f32.mrb[0].mxu0
        %v816 = vadd.f32 0.0, %v815
        %v817 = vpop.f32.mrb[0].mxu0
        %818 = vmatprep.mubr.f32.mxu0 0.0
        %819 = vmatmul.mubr.f32.gmra.mrb[0].mxu0 %v597
        %v820 = vpop.f32.mrb[0].mxu0
        %v821 = vadd.f32 0.0, %v820
        %v822 = vpop.f32.mrb[0].mxu0
        %823 = vdwg.mxu0
        %824 = vmatprep.subr.mxu0 0.0
        %825 = vmatpush1.msra.mxu0 %v368
        %826 = vmatprep.subr.mxu0 0.0
        %827 = vmatpush1.msra.mxu0 %v369
        %828 = vmatprep.subr.mxu0 0.0
        %829 = vmatpush1.msra.mxu0 0.0
        %830 = vmatprep.subr.mxu0 0.0
        %831 = vmatpush1.msra.mxu0 0.0
        %832 = vmatprep.subr.mxu0 0.0
        %833 = vmatpush1.msra.mxu0 0.0
        %834 = vmatprep.subr.mxu0 0.0
        %835 = vmatpush1.msra.mxu0 0.0
        %836 = vmatprep.subr.mxu0 0.0
        %837 = vmatpush1.msra.mxu0 0.0
        %838 = vmatprep.subr.mxu0 0.0
        %839 = vmatpush1.msra.mxu0 0.0
        %840 = vmatprep.subr.mxu0 0.0
        %841 = vmatpush1.msra.mxu0 0.0
        %842 = vmatprep.subr.mxu0 0.0
        %843 = vmatpush1.msra.mxu0 0.0
        %844 = vmatprep.subr.mxu0 0.0
        %845 = vmatpush1.msra.mxu0 0.0
        %846 = vmatprep.subr.mxu0 0.0
        %847 = vmatpush1.msra.mxu0 0.0
        %848 = vmatprep.subr.mxu0 0.0
        %849 = vmatpush1.msra.mxu0 0.0
        %850 = vmatprep.subr.mxu0 0.0
        %851 = vmatpush1.msra.mxu0 0.0
        %852 = vmatprep.subr.mxu0 0.0
        %853 = vmatpush1.msra.mxu0 0.0
        %854 = vmatprep.subr.mxu0 0.0
        %855 = vmatpush1.msra.mxu0 0.0
        %856 = vmatprep.subr.mxu0 0.0
        %857 = vmatpush1.msra.mxu0 0.0
        %858 = vmatprep.subr.mxu0 0.0
        %859 = vmatpush1.msra.mxu0 0.0
        %860 = vmatprep.subr.mxu0 0.0
        %861 = vmatpush1.msra.mxu0 0.0
        %862 = vmatprep.subr.mxu0 0.0
        %863 = vmatpush1.msra.mxu0 0.0
        %864 = vmatprep.subr.mxu0 0.0
        %865 = vmatpush1.msra.mxu0 0.0
        %866 = vmatprep.subr.mxu0 0.0
        %867 = vmatpush1.msra.mxu0 0.0
        %868 = vmatprep.subr.mxu0 0.0
        %869 = vmatpush1.msra.mxu0 0.0
        %870 = vmatprep.subr.mxu0 0.0
        %871 = vmatpush1.msra.mxu0 0.0
        %872 = vmatprep.subr.mxu0 0.0
        %873 = vmatpush1.msra.mxu0 0.0
        %874 = vmatprep.subr.mxu0 0.0
        %875 = vmatpush1.msra.mxu0 0.0
        %876 = vmatprep.subr.mxu0 0.0
        %877 = vmatpush1.msra.mxu0 0.0
        %878 = vmatprep.subr.mxu0 0.0
        %879 = vmatpush1.msra.mxu0 0.0
        %880 = vmatprep.subr.mxu0 0.0
        %881 = vmatpush1.msra.mxu0 0.0
        %882 = vmatprep.subr.mxu0 0.0
        %883 = vmatpush1.msra.mxu0 0.0
        %884 = vmatprep.subr.mxu0 0.0
        %885 = vmatpush1.msra.mxu0 0.0
        %886 = vmatprep.subr.mxu0 0.0
        %887 = vmatpush1.msra.mxu0 0.0
        %888 = vmatprep.mubr.f32.mxu0 0.0
        %889 = vmatmul.mubr.f32.gmra.mrb[0].mxu0 %v594
        %v890 = vpop.f32.mrb[0].mxu0
        %v891 = vadd.f32 0.0, %v890
        %v892 = vpop.f32.mrb[0].mxu0
        %893 = vmatprep.mubr.f32.mxu0 0.0
        %894 = vmatmul.mubr.f32.gmra.mrb[0].mxu0 %v597
        %v895 = vpop.f32.mrb[0].mxu0
        %v896 = vadd.f32 0.0, %v895
        %v897 = vpop.f32.mrb[0].mxu0
        %898 = vdwg.mxu0
        %899 = vmatprep.subr.mxu0 0.0
        %900 = vmatpush1.msra.mxu0 %v370
        %901 = vmatprep.subr.mxu0 0.0
        %902 = vmatpush1.msra.mxu0 %v371
        %903 = vmatprep.subr.mxu0 0.0
        %904 = vmatpush1.msra.mxu0 0.0
        %905 = vmatprep.subr.mxu0 0.0
        %906 = vmatpush1.msra.mxu0 0.0
        %907 = vmatprep.subr.mxu0 0.0
        %908 = vmatpush1.msra.mxu0 0.0
        %909 = vmatprep.subr.mxu0 0.0
        %910 = vmatpush1.msra.mxu0 0.0
        %911 = vmatprep.subr.mxu0 0.0
        %912 = vmatpush1.msra.mxu0 0.0
        %913 = vmatprep.subr.mxu0 0.0
        %914 = vmatpush1.msra.mxu0 0.0
        %915 = vmatprep.subr.mxu0 0.0
        %916 = vmatpush1.msra.mxu0 0.0
        %917 = vmatprep.subr.mxu0 0.0
        %918 = vmatpush1.msra.mxu0 0.0
        %919 = vmatprep.subr.mxu0 0.0
        %920 = vmatpush1.msra.mxu0 0.0
        %921 = vmatprep.subr.mxu0 0.0
        %922 = vmatpush1.msra.mxu0 0.0
        %923 = vmatprep.subr.mxu0 0.0
        %924 = vmatpush1.msra.mxu0 0.0
        %925 = vmatprep.subr.mxu0 0.0
        %926 = vmatpush1.msra.mxu0 0.0
        %927 = vmatprep.subr.mxu0 0.0
        %928 = vmatpush1.msra.mxu0 0.0
        %929 = vmatprep.subr.mxu0 0.0
        %930 = vmatpush1.msra.mxu0 0.0
        %931 = vmatprep.subr.mxu0 0.0
        %932 = vmatpush1.msra.mxu0 0.0
        %933 = vmatprep.subr.mxu0 0.0
        %934 = vmatpush1.msra.mxu0 0.0
        %935 = vmatprep.subr.mxu0 0.0
        %936 = vmatpush1.msra.mxu0 0.0
        %937 = vmatprep.subr.mxu0 0.0
        %938 = vmatpush1.msra.mxu0 0.0
        %939 = vmatprep.subr.mxu0 0.0
        %940 = vmatpush1.msra.mxu0 0.0
        %941 = vmatprep.subr.mxu0 0.0
        %942 = vmatpush1.msra.mxu0 0.0
        %943 = vmatprep.subr.mxu0 0.0
        %944 = vmatpush1.msra.mxu0 0.0
        %945 = vmatprep.subr.mxu0 0.0
        %946 = vmatpush1.msra.mxu0 0.0
        %947 = vmatprep.subr.mxu0 0.0
        %948 = vmatpush1.msra.mxu0 0.0
        %949 = vmatprep.subr.mxu0 0.0
        %950 = vmatpush1.msra.mxu0 0.0
        %951 = vmatprep.subr.mxu0 0.0
        %952 = vmatpush1.msra.mxu0 0.0
        %953 = vmatprep.subr.mxu0 0.0
        %954 = vmatpush1.msra.mxu0 0.0
        %955 = vmatprep.subr.mxu0 0.0
        %956 = vmatpush1.msra.mxu0 0.0
        %957 = vmatprep.subr.mxu0 0.0
        %958 = vmatpush1.msra.mxu0 0.0
        %959 = vmatprep.subr.mxu0 0.0
        %960 = vmatpush1.msra.mxu0 0.0
        %961 = vmatprep.subr.mxu0 0.0
        %962 = vmatpush1.msra.mxu0 0.0
        %963 = vmatprep.mubr.f32.mxu0 0.0
        %964 = vmatmul.mubr.f32.gmra.mrb[0].mxu0 %v594
        %v965 = vpop.f32.mrb[0].mxu0
        %v966 = vadd.f32 0.0, %v965
        %v967 = vpop.f32.mrb[0].mxu0
        %968 = vmatprep.mubr.f32.mxu0 0.0
        %969 = vmatmul.mubr.f32.gmra.mrb[0].mxu0 %v597
        %v970 = vpop.f32.mrb[0].mxu0
        %v971 = vadd.f32 0.0, %v970
        %v972 = vpop.f32.mrb[0].mxu0
        %973 = vdwg.mxu0
        %974 = vmatprep.subr.mxu0 0.0
        %975 = vmatpush1.msra.mxu0 %v372
        %976 = vmatprep.subr.mxu0 0.0
        %977 = vmatpush1.msra.mxu0 %v373
        %978 = vmatprep.subr.mxu0 0.0
        %979 = vmatpush1.msra.mxu0 0.0
        %980 = vmatprep.subr.mxu0 0.0
        %981 = vmatpush1.msra.mxu0 0.0
        %982 = vmatprep.subr.mxu0 0.0
        %983 = vmatpush1.msra.mxu0 0.0
        %984 = vmatprep.subr.mxu0 0.0
        %985 = vmatpush1.msra.mxu0 0.0
        %986 = vmatprep.subr.mxu0 0.0
        %987 = vmatpush1.msra.mxu0 0.0
        %988 = vmatprep.subr.mxu0 0.0
        %989 = vmatpush1.msra.mxu0 0.0
        %990 = vmatprep.subr.mxu0 0.0
        %991 = vmatpush1.msra.mxu0 0.0
        %992 = vmatprep.subr.mxu0 0.0
        %993 = vmatpush1.msra.mxu0 0.0
        %994 = vmatprep.subr.mxu0 0.0
        %995 = vmatpush1.msra.mxu0 0.0
        %996 = vmatprep.subr.mxu0 0.0
        %997 = vmatpush1.msra.mxu0 0.0
        %998 = vmatprep.subr.mxu0 0.0
        %999 = vmatpush1.msra.mxu0 0.0
        %1000 = vmatprep.subr.mxu0 0.0
        %1001 = vmatpush1.msra.mxu0 0.0
        %1002 = vmatprep.subr.mxu0 0.0
        %1003 = vmatpush1.msra.mxu0 0.0
        %1004 = vmatprep.subr.mxu0 0.0
        %1005 = vmatpush1.msra.mxu0 0.0
        %1006 = vmatprep.subr.mxu0 0.0
        %1007 = vmatpush1.msra.mxu0 0.0
        %1008 = vmatprep.subr.mxu0 0.0
        %1009 = vmatpush1.msra.mxu0 0.0
        %1010 = vmatprep.subr.mxu0 0.0
        %1011 = vmatpush1.msra.mxu0 0.0
        %1012 = vmatprep.subr.mxu0 0.0
        %1013 = vmatpush1.msra.mxu0 0.0
        %1014 = vmatprep.subr.mxu0 0.0
        %1015 = vmatpush1.msra.mxu0 0.0
        %1016 = vmatprep.subr.mxu0 0.0
        %1017 = vmatpush1.msra.mxu0 0.0
        %1018 = vmatprep.subr.mxu0 0.0
        %1019 = vmatpush1.msra.mxu0 0.0
        %1020 = vmatprep.subr.mxu0 0.0
        %1021 = vmatpush1.msra.mxu0 0.0
        %1022 = vmatprep.subr.mxu0 0.0
        %1023 = vmatpush1.msra.mxu0 0.0
        %1024 = vmatprep.subr.mxu0 0.0
        %1025 = vmatpush1.msra.mxu0 0.0
        %1026 = vmatprep.subr.mxu0 0.0
        %1027 = vmatpush1.msra.mxu0 0.0
        %1028 = vmatprep.subr.mxu0 0.0
        %1029 = vmatpush1.msra.mxu0 0.0
        %1030 = vmatprep.subr.mxu0 0.0
        %1031 = vmatpush1.msra.mxu0 0.0
        %1032 = vmatprep.subr.mxu0 0.0
        %1033 = vmatpush1.msra.mxu0 0.0
        %1034 = vmatprep.subr.mxu0 0.0
        %1035 = vmatpush1.msra.mxu0 0.0
        %1036 = vmatprep.subr.mxu0 0.0
        %1037 = vmatpush1.msra.mxu0 0.0
        %1038 = vmatprep.mubr.f32.mxu0 0.0
        %1039 = vmatmul.mubr.f32.gmra.mrb[0].mxu0 %v594
        %v1040 = vpop.f32.mrb[0].mxu0
        %v1041 = vadd.f32 0.0, %v1040
        %v1042 = vpop.f32.mrb[0].mxu0
        %1043 = vmatprep.mubr.f32.mxu0 0.0
        %1044 = vmatmul.mubr.f32.gmra.mrb[0].mxu0 %v597
        %v1045 = vpop.f32.mrb[0].mxu0
        %v1046 = vadd.f32 0.0, %v1045
        %v1047 = vpop.f32.mrb[0].mxu0
        %1048 = vdwg.mxu0
        %1049 = vmatprep.subr.mxu0 0.0
        %1050 = vmatpush1.msra.mxu0 %v374
        %1051 = vmatprep.subr.mxu0 0.0
        %1052 = vmatpush1.msra.mxu0 %v375
        %1053 = vmatprep.subr.mxu0 0.0
        %1054 = vmatpush1.msra.mxu0 0.0
        %1055 = vmatprep.subr.mxu0 0.0
        %1056 = vmatpush1.msra.mxu0 0.0
        %1057 = vmatprep.subr.mxu0 0.0
        %1058 = vmatpush1.msra.mxu0 0.0
        %1059 = vmatprep.subr.mxu0 0.0
        %1060 = vmatpush1.msra.mxu0 0.0
        %1061 = vmatprep.subr.mxu0 0.0
        %1062 = vmatpush1.msra.mxu0 0.0
        %1063 = vmatprep.subr.mxu0 0.0
        %1064 = vmatpush1.msra.mxu0 0.0
        %1065 = vmatprep.subr.mxu0 0.0
        %1066 = vmatpush1.msra.mxu0 0.0
        %1067 = vmatprep.subr.mxu0 0.0
        %1068 = vmatpush1.msra.mxu0 0.0
        %1069 = vmatprep.subr.mxu0 0.0
        %1070 = vmatpush1.msra.mxu0 0.0
        %1071 = vmatprep.subr.mxu0 0.0
        %1072 = vmatpush1.msra.mxu0 0.0
        %1073 = vmatprep.subr.mxu0 0.0
        %1074 = vmatpush1.msra.mxu0 0.0
        %1075 = vmatprep.subr.mxu0 0.0
        %1076 = vmatpush1.msra.mxu0 0.0
        %1077 = vmatprep.subr.mxu0 0.0
        %1078 = vmatpush1.msra.mxu0 0.0
        %1079 = vmatprep.subr.mxu0 0.0
        %1080 = vmatpush1.msra.mxu0 0.0
        %1081 = vmatprep.subr.mxu0 0.0
        %1082 = vmatpush1.msra.mxu0 0.0
        %1083 = vmatprep.subr.mxu0 0.0
        %1084 = vmatpush1.msra.mxu0 0.0
        %1085 = vmatprep.subr.mxu0 0.0
        %1086 = vmatpush1.msra.mxu0 0.0
        %1087 = vmatprep.subr.mxu0 0.0
        %1088 = vmatpush1.msra.mxu0 0.0
        %1089 = vmatprep.subr.mxu0 0.0
        %1090 = vmatpush1.msra.mxu0 0.0
        %1091 = vmatprep.subr.mxu0 0.0
        %1092 = vmatpush1.msra.mxu0 0.0
        %1093 = vmatprep.subr.mxu0 0.0
        %1094 = vmatpush1.msra.mxu0 0.0
        %1095 = vmatprep.subr.mxu0 0.0
        %1096 = vmatpush1.msra.mxu0 0.0
        %1097 = vmatprep.subr.mxu0 0.0
        %1098 = vmatpush1.msra.mxu0 0.0
        %1099 = vmatprep.subr.mxu0 0.0
        %1100 = vmatpush1.msra.mxu0 0.0
        %1101 = vmatprep.subr.mxu0 0.0
        %1102 = vmatpush1.msra.mxu0 0.0
        %1103 = vmatprep.subr.mxu0 0.0
        %1104 = vmatpush1.msra.mxu0 0.0
        %1105 = vmatprep.subr.mxu0 0.0
        %1106 = vmatpush1.msra.mxu0 0.0
        %1107 = vmatprep.subr.mxu0 0.0
        %1108 = vmatpush1.msra.mxu0 0.0
        %1109 = vmatprep.subr.mxu0 0.0
        %1110 = vmatpush1.msra.mxu0 0.0
        %1111 = vmatprep.subr.mxu0 0.0
        %1112 = vmatpush1.msra.mxu0 0.0
        %1113 = vmatprep.mubr.f32.mxu0 0.0
        %1114 = vmatmul.mubr.f32.gmra.mrb[0].mxu0 %v594
        %v1115 = vpop.f32.mrb[0].mxu0
        %v1116 = vadd.f32 0.0, %v1115
        %v1117 = vpop.f32.mrb[0].mxu0
        %1118 = vmatprep.mubr.f32.mxu0 0.0
        %1119 = vmatmul.mubr.f32.gmra.mrb[0].mxu0 %v597
        %v1120 = vpop.f32.mrb[0].mxu0
        %v1121 = vadd.f32 0.0, %v1120
        %v1122 = vpop.f32.mrb[0].mxu0
        %1123 = vdwg.mxu0
        %1124 = vmatprep.subr.mxu0 0.0
        %1125 = vmatpush1.msra.mxu0 %v376
        %1126 = vmatprep.subr.mxu0 0.0
        %1127 = vmatpush1.msra.mxu0 %v377
        %1128 = vmatprep.subr.mxu0 0.0
        %1129 = vmatpush1.msra.mxu0 0.0
        %1130 = vmatprep.subr.mxu0 0.0
        %1131 = vmatpush1.msra.mxu0 0.0
        %1132 = vmatprep.subr.mxu0 0.0
        %1133 = vmatpush1.msra.mxu0 0.0
        %1134 = vmatprep.subr.mxu0 0.0
        %1135 = vmatpush1.msra.mxu0 0.0
        %1136 = vmatprep.subr.mxu0 0.0
        %1137 = vmatpush1.msra.mxu0 0.0
        %1138 = vmatprep.subr.mxu0 0.0
        %1139 = vmatpush1.msra.mxu0 0.0
        %1140 = vmatprep.subr.mxu0 0.0
        %1141 = vmatpush1.msra.mxu0 0.0
        %1142 = vmatprep.subr.mxu0 0.0
        %1143 = vmatpush1.msra.mxu0 0.0
        %1144 = vmatprep.subr.mxu0 0.0
        %1145 = vmatpush1.msra.mxu0 0.0
        %1146 = vmatprep.subr.mxu0 0.0
        %1147 = vmatpush1.msra.mxu0 0.0
        %1148 = vmatprep.subr.mxu0 0.0
        %1149 = vmatpush1.msra.mxu0 0.0
        %1150 = vmatprep.subr.mxu0 0.0
        %1151 = vmatpush1.msra.mxu0 0.0
        %1152 = vmatprep.subr.mxu0 0.0
        %1153 = vmatpush1.msra.mxu0 0.0
        %1154 = vmatprep.subr.mxu0 0.0
        %1155 = vmatpush1.msra.mxu0 0.0
        %1156 = vmatprep.subr.mxu0 0.0
        %1157 = vmatpush1.msra.mxu0 0.0
        %1158 = vmatprep.subr.mxu0 0.0
        %1159 = vmatpush1.msra.mxu0 0.0
        %1160 = vmatprep.subr.mxu0 0.0
        %1161 = vmatpush1.msra.mxu0 0.0
        %1162 = vmatprep.subr.mxu0 0.0
        %1163 = vmatpush1.msra.mxu0 0.0
        %1164 = vmatprep.subr.mxu0 0.0
        %1165 = vmatpush1.msra.mxu0 0.0
        %1166 = vmatprep.subr.mxu0 0.0
        %1167 = vmatpush1.msra.mxu0 0.0
        %1168 = vmatprep.subr.mxu0 0.0
        %1169 = vmatpush1.msra.mxu0 0.0
        %1170 = vmatprep.subr.mxu0 0.0
        %1171 = vmatpush1.msra.mxu0 0.0
        %1172 = vmatprep.subr.mxu0 0.0
        %1173 = vmatpush1.msra.mxu0 0.0
        %1174 = vmatprep.subr.mxu0 0.0
        %1175 = vmatpush1.msra.mxu0 0.0
        %1176 = vmatprep.subr.mxu0 0.0
        %1177 = vmatpush1.msra.mxu0 0.0
        %1178 = vmatprep.subr.mxu0 0.0
        %1179 = vmatpush1.msra.mxu0 0.0
        %1180 = vmatprep.subr.mxu0 0.0
        %1181 = vmatpush1.msra.mxu0 0.0
        %1182 = vmatprep.subr.mxu0 0.0
        %1183 = vmatpush1.msra.mxu0 0.0
        %1184 = vmatprep.subr.mxu0 0.0
        %1185 = vmatpush1.msra.mxu0 0.0
        %1186 = vmatprep.subr.mxu0 0.0
        %1187 = vmatpush1.msra.mxu0 0.0
        %1188 = vmatprep.mubr.f32.mxu0 0.0
        %1189 = vmatmul.mubr.f32.gmra.mrb[0].mxu0 %v594
        %v1190 = vpop.f32.mrb[0].mxu0
        %v1191 = vadd.f32 0.0, %v1190
        %v1192 = vpop.f32.mrb[0].mxu0
        %1193 = vmatprep.mubr.f32.mxu0 0.0
        %1194 = vmatmul.mubr.f32.gmra.mrb[0].mxu0 %v597
        %v1195 = vpop.f32.mrb[0].mxu0
        %v1196 = vadd.f32 0.0, %v1195
        %v1197 = vpop.f32.mrb[0].mxu0
        %1198 = vdwg.mxu0
        %v1200 = vsel %vm592, %v590, 0
        %v1203 = vsel %vm592, %v591, 0
        %1205 = vmatprep.subr.mxu0 0.0
        %1206 = vmatpush1.msra.mxu0 %v362
        %1207 = vmatprep.subr.mxu0 0.0
        %1208 = vmatpush1.msra.mxu0 %v363
        %1209 = vmatprep.subr.mxu0 0.0
        %1210 = vmatpush1.msra.mxu0 0.0
        %1211 = vmatprep.subr.mxu0 0.0
        %1212 = vmatpush1.msra.mxu0 0.0
        %1213 = vmatprep.subr.mxu0 0.0
        %1214 = vmatpush1.msra.mxu0 0.0
        %1215 = vmatprep.subr.mxu0 0.0
        %1216 = vmatpush1.msra.mxu0 0.0
        %1217 = vmatprep.subr.mxu0 0.0
        %1218 = vmatpush1.msra.mxu0 0.0
        %1219 = vmatprep.subr.mxu0 0.0
        %1220 = vmatpush1.msra.mxu0 0.0
        %1221 = vmatprep.subr.mxu0 0.0
        %1222 = vmatpush1.msra.mxu0 0.0
        %1223 = vmatprep.subr.mxu0 0.0
        %1224 = vmatpush1.msra.mxu0 0.0
        %1225 = vmatprep.subr.mxu0 0.0
        %1226 = vmatpush1.msra.mxu0 0.0
        %1227 = vmatprep.subr.mxu0 0.0
        %1228 = vmatpush1.msra.mxu0 0.0
        %1229 = vmatprep.subr.mxu0 0.0
        %1230 = vmatpush1.msra.mxu0 0.0
        %1231 = vmatprep.subr.mxu0 0.0
        %1232 = vmatpush1.msra.mxu0 0.0
        %1233 = vmatprep.subr.mxu0 0.0
        %1234 = vmatpush1.msra.mxu0 0.0
        %1235 = vmatprep.subr.mxu0 0.0
        %1236 = vmatpush1.msra.mxu0 0.0
        %1237 = vmatprep.subr.mxu0 0.0
        %1238 = vmatpush1.msra.mxu0 0.0
        %1239 = vmatprep.subr.mxu0 0.0
        %1240 = vmatpush1.msra.mxu0 0.0
        %1241 = vmatprep.subr.mxu0 0.0
        %1242 = vmatpush1.msra.mxu0 0.0
        %1243 = vmatprep.subr.mxu0 0.0
        %1244 = vmatpush1.msra.mxu0 0.0
        %1245 = vmatprep.subr.mxu0 0.0
        %1246 = vmatpush1.msra.mxu0 0.0
        %1247 = vmatprep.subr.mxu0 0.0
        %1248 = vmatpush1.msra.mxu0 0.0
        %1249 = vmatprep.subr.mxu0 0.0
        %1250 = vmatpush1.msra.mxu0 0.0
        %1251 = vmatprep.subr.mxu0 0.0
        %1252 = vmatpush1.msra.mxu0 0.0
        %1253 = vmatprep.subr.mxu0 0.0
        %1254 = vmatpush1.msra.mxu0 0.0
        %1255 = vmatprep.subr.mxu0 0.0
        %1256 = vmatpush1.msra.mxu0 0.0
        %1257 = vmatprep.subr.mxu0 0.0
        %1258 = vmatpush1.msra.mxu0 0.0
        %1259 = vmatprep.subr.mxu0 0.0
        %1260 = vmatpush1.msra.mxu0 0.0
        %1261 = vmatprep.subr.mxu0 0.0
        %1262 = vmatpush1.msra.mxu0 0.0
        %1263 = vmatprep.subr.mxu0 0.0
        %1264 = vmatpush1.msra.mxu0 0.0
        %1265 = vmatprep.subr.mxu0 0.0
        %1266 = vmatpush1.msra.mxu0 0.0
        %1267 = vmatprep.subr.mxu0 0.0
        %1268 = vmatpush1.msra.mxu0 0.0
        %1269 = vmatprep.mubr.f32.mxu0 0.0
        %1270 = vmatmul.mubr.f32.gmra.mrb[0].mxu0 %v1200
        %v1271 = vpop.f32.mrb[0].mxu0
        %v1272 = vadd.f32 0.0, %v1271
        %v1273 = vpop.f32.mrb[0].mxu0
        %1274 = vmatprep.mubr.f32.mxu0 0.0
        %1275 = vmatmul.mubr.f32.gmra.mrb[0].mxu0 %v1203
        %v1276 = vpop.f32.mrb[0].mxu0
        %v1277 = vadd.f32 0.0, %v1276
        %v1278 = vpop.f32.mrb[0].mxu0
        %1279 = vdwg.mxu0
        %1280 = vmatprep.subr.mxu0 0.0
        %1281 = vmatpush1.msra.mxu0 %v364
        %1282 = vmatprep.subr.mxu0 0.0
        %1283 = vmatpush1.msra.mxu0 %v365
        %1284 = vmatprep.subr.mxu0 0.0
        %1285 = vmatpush1.msra.mxu0 0.0
        %1286 = vmatprep.subr.mxu0 0.0
        %1287 = vmatpush1.msra.mxu0 0.0
        %1288 = vmatprep.subr.mxu0 0.0
        %1289 = vmatpush1.msra.mxu0 0.0
        %1290 = vmatprep.subr.mxu0 0.0
        %1291 = vmatpush1.msra.mxu0 0.0
        %1292 = vmatprep.subr.mxu0 0.0
        %1293 = vmatpush1.msra.mxu0 0.0
        %1294 = vmatprep.subr.mxu0 0.0
        %1295 = vmatpush1.msra.mxu0 0.0
        %1296 = vmatprep.subr.mxu0 0.0
        %1297 = vmatpush1.msra.mxu0 0.0
        %1298 = vmatprep.subr.mxu0 0.0
        %1299 = vmatpush1.msra.mxu0 0.0
        %1300 = vmatprep.subr.mxu0 0.0
        %1301 = vmatpush1.msra.mxu0 0.0
        %1302 = vmatprep.subr.mxu0 0.0
        %1303 = vmatpush1.msra.mxu0 0.0
        %1304 = vmatprep.subr.mxu0 0.0
        %1305 = vmatpush1.msra.mxu0 0.0
        %1306 = vmatprep.subr.mxu0 0.0
        %1307 = vmatpush1.msra.mxu0 0.0
        %1308 = vmatprep.subr.mxu0 0.0
        %1309 = vmatpush1.msra.mxu0 0.0
        %1310 = vmatprep.subr.mxu0 0.0
        %1311 = vmatpush1.msra.mxu0 0.0
        %1312 = vmatprep.subr.mxu0 0.0
        %1313 = vmatpush1.msra.mxu0 0.0
        %1314 = vmatprep.subr.mxu0 0.0
        %1315 = vmatpush1.msra.mxu0 0.0
        %1316 = vmatprep.subr.mxu0 0.0
        %1317 = vmatpush1.msra.mxu0 0.0
        %1318 = vmatprep.subr.mxu0 0.0
        %1319 = vmatpush1.msra.mxu0 0.0
        %1320 = vmatprep.subr.mxu0 0.0
        %1321 = vmatpush1.msra.mxu0 0.0
        %1322 = vmatprep.subr.mxu0 0.0
        %1323 = vmatpush1.msra.mxu0 0.0
        %1324 = vmatprep.subr.mxu0 0.0
        %1325 = vmatpush1.msra.mxu0 0.0
        %1326 = vmatprep.subr.mxu0 0.0
        %1327 = vmatpush1.msra.mxu0 0.0
        %1328 = vmatprep.subr.mxu0 0.0
        %1329 = vmatpush1.msra.mxu0 0.0
        %1330 = vmatprep.subr.mxu0 0.0
        %1331 = vmatpush1.msra.mxu0 0.0
        %1332 = vmatprep.subr.mxu0 0.0
        %1333 = vmatpush1.msra.mxu0 0.0
        %1334 = vmatprep.subr.mxu0 0.0
        %1335 = vmatpush1.msra.mxu0 0.0
        %1336 = vmatprep.subr.mxu0 0.0
        %1337 = vmatpush1.msra.mxu0 0.0
        %1338 = vmatprep.subr.mxu0 0.0
        %1339 = vmatpush1.msra.mxu0 0.0
        %1340 = vmatprep.subr.mxu0 0.0
        %1341 = vmatpush1.msra.mxu0 0.0
        %1342 = vmatprep.subr.mxu0 0.0
        %1343 = vmatpush1.msra.mxu0 0.0
        %1344 = vmatprep.mubr.f32.mxu0 0.0
        %1345 = vmatmul.mubr.f32.gmra.mrb[0].mxu0 %v1200
        %v1346 = vpop.f32.mrb[0].mxu0
        %v1347 = vadd.f32 0.0, %v1346
        %v1348 = vpop.f32.mrb[0].mxu0
        %1349 = vmatprep.mubr.f32.mxu0 0.0
        %1350 = vmatmul.mubr.f32.gmra.mrb[0].mxu0 %v1203
        %v1351 = vpop.f32.mrb[0].mxu0
        %v1352 = vadd.f32 0.0, %v1351
        %v1353 = vpop.f32.mrb[0].mxu0
        %1354 = vdwg.mxu0
        %1355 = vmatprep.subr.mxu0 0.0
        %1356 = vmatpush1.msra.mxu0 %v366
        %1357 = vmatprep.subr.mxu0 0.0
        %1358 = vmatpush1.msra.mxu0 %v367
        %1359 = vmatprep.subr.mxu0 0.0
        %1360 = vmatpush1.msra.mxu0 0.0
        %1361 = vmatprep.subr.mxu0 0.0
        %1362 = vmatpush1.msra.mxu0 0.0
        %1363 = vmatprep.subr.mxu0 0.0
        %1364 = vmatpush1.msra.mxu0 0.0
        %1365 = vmatprep.subr.mxu0 0.0
        %1366 = vmatpush1.msra.mxu0 0.0
        %1367 = vmatprep.subr.mxu0 0.0
        %1368 = vmatpush1.msra.mxu0 0.0
        %1369 = vmatprep.subr.mxu0 0.0
        %1370 = vmatpush1.msra.mxu0 0.0
        %1371 = vmatprep.subr.mxu0 0.0
        %1372 = vmatpush1.msra.mxu0 0.0
        %1373 = vmatprep.subr.mxu0 0.0
        %1374 = vmatpush1.msra.mxu0 0.0
        %1375 = vmatprep.subr.mxu0 0.0
        %1376 = vmatpush1.msra.mxu0 0.0
        %1377 = vmatprep.subr.mxu0 0.0
        %1378 = vmatpush1.msra.mxu0 0.0
        %1379 = vmatprep.subr.mxu0 0.0
        %1380 = vmatpush1.msra.mxu0 0.0
        %1381 = vmatprep.subr.mxu0 0.0
        %1382 = vmatpush1.msra.mxu0 0.0
        %1383 = vmatprep.subr.mxu0 0.0
        %1384 = vmatpush1.msra.mxu0 0.0
        %1385 = vmatprep.subr.mxu0 0.0
        %1386 = vmatpush1.msra.mxu0 0.0
        %1387 = vmatprep.subr.mxu0 0.0
        %1388 = vmatpush1.msra.mxu0 0.0
        %1389 = vmatprep.subr.mxu0 0.0
        %1390 = vmatpush1.msra.mxu0 0.0
        %1391 = vmatprep.subr.mxu0 0.0
        %1392 = vmatpush1.msra.mxu0 0.0
        %1393 = vmatprep.subr.mxu0 0.0
        %1394 = vmatpush1.msra.mxu0 0.0
        %1395 = vmatprep.subr.mxu0 0.0
        %1396 = vmatpush1.msra.mxu0 0.0
        %1397 = vmatprep.subr.mxu0 0.0
        %1398 = vmatpush1.msra.mxu0 0.0
        %1399 = vmatprep.subr.mxu0 0.0
        %1400 = vmatpush1.msra.mxu0 0.0
        %1401 = vmatprep.subr.mxu0 0.0
        %1402 = vmatpush1.msra.mxu0 0.0
        %1403 = vmatprep.subr.mxu0 0.0
        %1404 = vmatpush1.msra.mxu0 0.0
        %1405 = vmatprep.subr.mxu0 0.0
        %1406 = vmatpush1.msra.mxu0 0.0
        %1407 = vmatprep.subr.mxu0 0.0
        %1408 = vmatpush1.msra.mxu0 0.0
        %1409 = vmatprep.subr.mxu0 0.0
        %1410 = vmatpush1.msra.mxu0 0.0
        %1411 = vmatprep.subr.mxu0 0.0
        %1412 = vmatpush1.msra.mxu0 0.0
        %1413 = vmatprep.subr.mxu0 0.0
        %1414 = vmatpush1.msra.mxu0 0.0
        %1415 = vmatprep.subr.mxu0 0.0
        %1416 = vmatpush1.msra.mxu0 0.0
        %1417 = vmatprep.subr.mxu0 0.0
        %1418 = vmatpush1.msra.mxu0 0.0
        %1419 = vmatprep.mubr.f32.mxu0 0.0
        %1420 = vmatmul.mubr.f32.gmra.mrb[0].mxu0 %v1200
        %v1421 = vpop.f32.mrb[0].mxu0
        %v1422 = vadd.f32 0.0, %v1421
        %v1423 = vpop.f32.mrb[0].mxu0
        %1424 = vmatprep.mubr.f32.mxu0 0.0
        %1425 = vmatmul.mubr.f32.gmra.mrb[0].mxu0 %v1203
        %v1426 = vpop.f32.mrb[0].mxu0
        %v1427 = vadd.f32 0.0, %v1426
        %v1428 = vpop.f32.mrb[0].mxu0
        %1429 = vdwg.mxu0
        %1430 = vmatprep.subr.mxu0 0.0
        %1431 = vmatpush1.msra.mxu0 %v368
        %1432 = vmatprep.subr.mxu0 0.0
        %1433 = vmatpush1.msra.mxu0 %v369
        %1434 = vmatprep.subr.mxu0 0.0
        %1435 = vmatpush1.msra.mxu0 0.0
        %1436 = vmatprep.subr.mxu0 0.0
        %1437 = vmatpush1.msra.mxu0 0.0
        %1438 = vmatprep.subr.mxu0 0.0
        %1439 = vmatpush1.msra.mxu0 0.0
        %1440 = vmatprep.subr.mxu0 0.0
        %1441 = vmatpush1.msra.mxu0 0.0
        %1442 = vmatprep.subr.mxu0 0.0
        %1443 = vmatpush1.msra.mxu0 0.0
        %1444 = vmatprep.subr.mxu0 0.0
        %1445 = vmatpush1.msra.mxu0 0.0
        %1446 = vmatprep.subr.mxu0 0.0
        %1447 = vmatpush1.msra.mxu0 0.0
        %1448 = vmatprep.subr.mxu0 0.0
        %1449 = vmatpush1.msra.mxu0 0.0
        %1450 = vmatprep.subr.mxu0 0.0
        %1451 = vmatpush1.msra.mxu0 0.0
        %1452 = vmatprep.subr.mxu0 0.0
        %1453 = vmatpush1.msra.mxu0 0.0
        %1454 = vmatprep.subr.mxu0 0.0
        %1455 = vmatpush1.msra.mxu0 0.0
        %1456 = vmatprep.subr.mxu0 0.0
        %1457 = vmatpush1.msra.mxu0 0.0
        %1458 = vmatprep.subr.mxu0 0.0
        %1459 = vmatpush1.msra.mxu0 0.0
        %1460 = vmatprep.subr.mxu0 0.0
        %1461 = vmatpush1.msra.mxu0 0.0
        %1462 = vmatprep.subr.mxu0 0.0
        %1463 = vmatpush1.msra.mxu0 0.0
        %1464 = vmatprep.subr.mxu0 0.0
        %1465 = vmatpush1.msra.mxu0 0.0
        %1466 = vmatprep.subr.mxu0 0.0
        %1467 = vmatpush1.msra.mxu0 0.0
        %1468 = vmatprep.subr.mxu0 0.0
        %1469 = vmatpush1.msra.mxu0 0.0
        %1470 = vmatprep.subr.mxu0 0.0
        %1471 = vmatpush1.msra.mxu0 0.0
        %1472 = vmatprep.subr.mxu0 0.0
        %1473 = vmatpush1.msra.mxu0 0.0
        %1474 = vmatprep.subr.mxu0 0.0
        %1475 = vmatpush1.msra.mxu0 0.0
        %1476 = vmatprep.subr.mxu0 0.0
        %1477 = vmatpush1.msra.mxu0 0.0
        %1478 = vmatprep.subr.mxu0 0.0
        %1479 = vmatpush1.msra.mxu0 0.0
        %1480 = vmatprep.subr.mxu0 0.0
        %1481 = vmatpush1.msra.mxu0 0.0
        %1482 = vmatprep.subr.mxu0 0.0
        %1483 = vmatpush1.msra.mxu0 0.0
        %1484 = vmatprep.subr.mxu0 0.0
        %1485 = vmatpush1.msra.mxu0 0.0
        %1486 = vmatprep.subr.mxu0 0.0
        %1487 = vmatpush1.msra.mxu0 0.0
        %1488 = vmatprep.subr.mxu0 0.0
        %1489 = vmatpush1.msra.mxu0 0.0
        %1490 = vmatprep.subr.mxu0 0.0
        %1491 = vmatpush1.msra.mxu0 0.0
        %1492 = vmatprep.subr.mxu0 0.0
        %1493 = vmatpush1.msra.mxu0 0.0
        %1494 = vmatprep.mubr.f32.mxu0 0.0
        %1495 = vmatmul.mubr.f32.gmra.mrb[0].mxu0 %v1200
        %v1496 = vpop.f32.mrb[0].mxu0
        %v1497 = vadd.f32 0.0, %v1496
        %v1498 = vpop.f32.mrb[0].mxu0
        %1499 = vmatprep.mubr.f32.mxu0 0.0
        %1500 = vmatmul.mubr.f32.gmra.mrb[0].mxu0 %v1203
        %v1501 = vpop.f32.mrb[0].mxu0
        %v1502 = vadd.f32 0.0, %v1501
        %v1503 = vpop.f32.mrb[0].mxu0
        %1504 = vdwg.mxu0
        %1505 = vmatprep.subr.mxu0 0.0
        %1506 = vmatpush1.msra.mxu0 %v370
        %1507 = vmatprep.subr.mxu0 0.0
        %1508 = vmatpush1.msra.mxu0 %v371
        %1509 = vmatprep.subr.mxu0 0.0
        %1510 = vmatpush1.msra.mxu0 0.0
        %1511 = vmatprep.subr.mxu0 0.0
        %1512 = vmatpush1.msra.mxu0 0.0
        %1513 = vmatprep.subr.mxu0 0.0
        %1514 = vmatpush1.msra.mxu0 0.0
        %1515 = vmatprep.subr.mxu0 0.0
        %1516 = vmatpush1.msra.mxu0 0.0
        %1517 = vmatprep.subr.mxu0 0.0
        %1518 = vmatpush1.msra.mxu0 0.0
        %1519 = vmatprep.subr.mxu0 0.0
        %1520 = vmatpush1.msra.mxu0 0.0
        %1521 = vmatprep.subr.mxu0 0.0
        %1522 = vmatpush1.msra.mxu0 0.0
        %1523 = vmatprep.subr.mxu0 0.0
        %1524 = vmatpush1.msra.mxu0 0.0
        %1525 = vmatprep.subr.mxu0 0.0
        %1526 = vmatpush1.msra.mxu0 0.0
        %1527 = vmatprep.subr.mxu0 0.0
        %1528 = vmatpush1.msra.mxu0 0.0
        %1529 = vmatprep.subr.mxu0 0.0
        %1530 = vmatpush1.msra.mxu0 0.0
        %1531 = vmatprep.subr.mxu0 0.0
        %1532 = vmatpush1.msra.mxu0 0.0
        %1533 = vmatprep.subr.mxu0 0.0
        %1534 = vmatpush1.msra.mxu0 0.0
        %1535 = vmatprep.subr.mxu0 0.0
        %1536 = vmatpush1.msra.mxu0 0.0
        %1537 = vmatprep.subr.mxu0 0.0
        %1538 = vmatpush1.msra.mxu0 0.0
        %1539 = vmatprep.subr.mxu0 0.0
        %1540 = vmatpush1.msra.mxu0 0.0
        %1541 = vmatprep.subr.mxu0 0.0
        %1542 = vmatpush1.msra.mxu0 0.0
        %1543 = vmatprep.subr.mxu0 0.0
        %1544 = vmatpush1.msra.mxu0 0.0
        %1545 = vmatprep.subr.mxu0 0.0
        %1546 = vmatpush1.msra.mxu0 0.0
        %1547 = vmatprep.subr.mxu0 0.0
        %1548 = vmatpush1.msra.mxu0 0.0
        %1549 = vmatprep.subr.mxu0 0.0
        %1550 = vmatpush1.msra.mxu0 0.0
        %1551 = vmatprep.subr.mxu0 0.0
        %1552 = vmatpush1.msra.mxu0 0.0
        %1553 = vmatprep.subr.mxu0 0.0
        %1554 = vmatpush1.msra.mxu0 0.0
        %1555 = vmatprep.subr.mxu0 0.0
        %1556 = vmatpush1.msra.mxu0 0.0
        %1557 = vmatprep.subr.mxu0 0.0
        %1558 = vmatpush1.msra.mxu0 0.0
        %1559 = vmatprep.subr.mxu0 0.0
        %1560 = vmatpush1.msra.mxu0 0.0
        %1561 = vmatprep.subr.mxu0 0.0
        %1562 = vmatpush1.msra.mxu0 0.0
        %1563 = vmatprep.subr.mxu0 0.0
        %1564 = vmatpush1.msra.mxu0 0.0
        %1565 = vmatprep.subr.mxu0 0.0
        %1566 = vmatpush1.msra.mxu0 0.0
        %1567 = vmatprep.subr.mxu0 0.0
        %1568 = vmatpush1.msra.mxu0 0.0
        %1569 = vmatprep.mubr.f32.mxu0 0.0
        %1570 = vmatmul.mubr.f32.gmra.mrb[0].mxu0 %v1200
        %v1571 = vpop.f32.mrb[0].mxu0
        %v1572 = vadd.f32 0.0, %v1571
        %v1573 = vpop.f32.mrb[0].mxu0
        %1574 = vmatprep.mubr.f32.mxu0 0.0
        %1575 = vmatmul.mubr.f32.gmra.mrb[0].mxu0 %v1203
        %v1576 = vpop.f32.mrb[0].mxu0
        %v1577 = vadd.f32 0.0, %v1576
        %v1578 = vpop.f32.mrb[0].mxu0
        %1579 = vdwg.mxu0
        %1580 = vmatprep.subr.mxu0 0.0
        %1581 = vmatpush1.msra.mxu0 %v372
        %1582 = vmatprep.subr.mxu0 0.0
        %1583 = vmatpush1.msra.mxu0 %v373
        %1584 = vmatprep.subr.mxu0 0.0
        %1585 = vmatpush1.msra.mxu0 0.0
        %1586 = vmatprep.subr.mxu0 0.0
        %1587 = vmatpush1.msra.mxu0 0.0
        %1588 = vmatprep.subr.mxu0 0.0
        %1589 = vmatpush1.msra.mxu0 0.0
        %1590 = vmatprep.subr.mxu0 0.0
        %1591 = vmatpush1.msra.mxu0 0.0
        %1592 = vmatprep.subr.mxu0 0.0
        %1593 = vmatpush1.msra.mxu0 0.0
        %1594 = vmatprep.subr.mxu0 0.0
        %1595 = vmatpush1.msra.mxu0 0.0
        %1596 = vmatprep.subr.mxu0 0.0
        %1597 = vmatpush1.msra.mxu0 0.0
        %1598 = vmatprep.subr.mxu0 0.0
        %1599 = vmatpush1.msra.mxu0 0.0
        %1600 = vmatprep.subr.mxu0 0.0
        %1601 = vmatpush1.msra.mxu0 0.0
        %1602 = vmatprep.subr.mxu0 0.0
        %1603 = vmatpush1.msra.mxu0 0.0
        %1604 = vmatprep.subr.mxu0 0.0
        %1605 = vmatpush1.msra.mxu0 0.0
        %1606 = vmatprep.subr.mxu0 0.0
        %1607 = vmatpush1.msra.mxu0 0.0
        %1608 = vmatprep.subr.mxu0 0.0
        %1609 = vmatpush1.msra.mxu0 0.0
        %1610 = vmatprep.subr.mxu0 0.0
        %1611 = vmatpush1.msra.mxu0 0.0
        %1612 = vmatprep.subr.mxu0 0.0
        %1613 = vmatpush1.msra.mxu0 0.0
        %1614 = vmatprep.subr.mxu0 0.0
        %1615 = vmatpush1.msra.mxu0 0.0
        %1616 = vmatprep.subr.mxu0 0.0
        %1617 = vmatpush1.msra.mxu0 0.0
        %1618 = vmatprep.subr.mxu0 0.0
        %1619 = vmatpush1.msra.mxu0 0.0
        %1620 = vmatprep.subr.mxu0 0.0
        %1621 = vmatpush1.msra.mxu0 0.0
        %1622 = vmatprep.subr.mxu0 0.0
        %1623 = vmatpush1.msra.mxu0 0.0
        %1624 = vmatprep.subr.mxu0 0.0
        %1625 = vmatpush1.msra.mxu0 0.0
        %1626 = vmatprep.subr.mxu0 0.0
        %1627 = vmatpush1.msra.mxu0 0.0
        %1628 = vmatprep.subr.mxu0 0.0
        %1629 = vmatpush1.msra.mxu0 0.0
        %1630 = vmatprep.subr.mxu0 0.0
        %1631 = vmatpush1.msra.mxu0 0.0
        %1632 = vmatprep.subr.mxu0 0.0
        %1633 = vmatpush1.msra.mxu0 0.0
        %1634 = vmatprep.subr.mxu0 0.0
        %1635 = vmatpush1.msra.mxu0 0.0
        %1636 = vmatprep.subr.mxu0 0.0
        %1637 = vmatpush1.msra.mxu0 0.0
        %1638 = vmatprep.subr.mxu0 0.0
        %1639 = vmatpush1.msra.mxu0 0.0
        %1640 = vmatprep.subr.mxu0 0.0
        %1641 = vmatpush1.msra.mxu0 0.0
        %1642 = vmatprep.subr.mxu0 0.0
        %1643 = vmatpush1.msra.mxu0 0.0
        %1644 = vmatprep.mubr.f32.mxu0 0.0
        %1645 = vmatmul.mubr.f32.gmra.mrb[0].mxu0 %v1200
        %v1646 = vpop.f32.mrb[0].mxu0
        %v1647 = vadd.f32 0.0, %v1646
        %v1648 = vpop.f32.mrb[0].mxu0
        %1649 = vmatprep.mubr.f32.mxu0 0.0
        %1650 = vmatmul.mubr.f32.gmra.mrb[0].mxu0 %v1203
        %v1651 = vpop.f32.mrb[0].mxu0
        %v1652 = vadd.f32 0.0, %v1651
        %v1653 = vpop.f32.mrb[0].mxu0
        %1654 = vdwg.mxu0
        %1655 = vmatprep.subr.mxu0 0.0
        %1656 = vmatpush1.msra.mxu0 %v374
        %1657 = vmatprep.subr.mxu0 0.0
        %1658 = vmatpush1.msra.mxu0 %v375
        %1659 = vmatprep.subr.mxu0 0.0
        %1660 = vmatpush1.msra.mxu0 0.0
        %1661 = vmatprep.subr.mxu0 0.0
        %1662 = vmatpush1.msra.mxu0 0.0
        %1663 = vmatprep.subr.mxu0 0.0
        %1664 = vmatpush1.msra.mxu0 0.0
        %1665 = vmatprep.subr.mxu0 0.0
        %1666 = vmatpush1.msra.mxu0 0.0
        %1667 = vmatprep.subr.mxu0 0.0
        %1668 = vmatpush1.msra.mxu0 0.0
        %1669 = vmatprep.subr.mxu0 0.0
        %1670 = vmatpush1.msra.mxu0 0.0
        %1671 = vmatprep.subr.mxu0 0.0
        %1672 = vmatpush1.msra.mxu0 0.0
        %1673 = vmatprep.subr.mxu0 0.0
        %1674 = vmatpush1.msra.mxu0 0.0
        %1675 = vmatprep.subr.mxu0 0.0
        %1676 = vmatpush1.msra.mxu0 0.0
        %1677 = vmatprep.subr.mxu0 0.0
        %1678 = vmatpush1.msra.mxu0 0.0
        %1679 = vmatprep.subr.mxu0 0.0
        %1680 = vmatpush1.msra.mxu0 0.0
        %1681 = vmatprep.subr.mxu0 0.0
        %1682 = vmatpush1.msra.mxu0 0.0
        %1683 = vmatprep.subr.mxu0 0.0
        %1684 = vmatpush1.msra.mxu0 0.0
        %1685 = vmatprep.subr.mxu0 0.0
        %1686 = vmatpush1.msra.mxu0 0.0
        %1687 = vmatprep.subr.mxu0 0.0
        %1688 = vmatpush1.msra.mxu0 0.0
        %1689 = vmatprep.subr.mxu0 0.0
        %1690 = vmatpush1.msra.mxu0 0.0
        %1691 = vmatprep.subr.mxu0 0.0
        %1692 = vmatpush1.msra.mxu0 0.0
        %1693 = vmatprep.subr.mxu0 0.0
        %1694 = vmatpush1.msra.mxu0 0.0
        %1695 = vmatprep.subr.mxu0 0.0
        %1696 = vmatpush1.msra.mxu0 0.0
        %1697 = vmatprep.subr.mxu0 0.0
        %1698 = vmatpush1.msra.mxu0 0.0
        %1699 = vmatprep.subr.mxu0 0.0
        %1700 = vmatpush1.msra.mxu0 0.0
        %1701 = vmatprep.subr.mxu0 0.0
        %1702 = vmatpush1.msra.mxu0 0.0
        %1703 = vmatprep.subr.mxu0 0.0
        %1704 = vmatpush1.msra.mxu0 0.0
        %1705 = vmatprep.subr.mxu0 0.0
        %1706 = vmatpush1.msra.mxu0 0.0
        %1707 = vmatprep.subr.mxu0 0.0
        %1708 = vmatpush1.msra.mxu0 0.0
        %1709 = vmatprep.subr.mxu0 0.0
        %1710 = vmatpush1.msra.mxu0 0.0
        %1711 = vmatprep.subr.mxu0 0.0
        %1712 = vmatpush1.msra.mxu0 0.0
        %1713 = vmatprep.subr.mxu0 0.0
        %1714 = vmatpush1.msra.mxu0 0.0
        %1715 = vmatprep.subr.mxu0 0.0
        %1716 = vmatpush1.msra.mxu0 0.0
        %1717 = vmatprep.subr.mxu0 0.0
        %1718 = vmatpush1.msra.mxu0 0.0
        %1719 = vmatprep.mubr.f32.mxu0 0.0
        %1720 = vmatmul.mubr.f32.gmra.mrb[0].mxu0 %v1200
        %v1721 = vpop.f32.mrb[0].mxu0
        %v1722 = vadd.f32 0.0, %v1721
        %v1723 = vpop.f32.mrb[0].mxu0
        %1724 = vmatprep.mubr.f32.mxu0 0.0
        %1725 = vmatmul.mubr.f32.gmra.mrb[0].mxu0 %v1203
        %v1726 = vpop.f32.mrb[0].mxu0
        %v1727 = vadd.f32 0.0, %v1726
        %v1728 = vpop.f32.mrb[0].mxu0
        %1729 = vdwg.mxu0
        %1730 = vmatprep.subr.mxu0 0.0
        %1731 = vmatpush1.msra.mxu0 %v376
        %1732 = vmatprep.subr.mxu0 0.0
        %1733 = vmatpush1.msra.mxu0 %v377
        %1734 = vmatprep.subr.mxu0 0.0
        %1735 = vmatpush1.msra.mxu0 0.0
        %1736 = vmatprep.subr.mxu0 0.0
        %1737 = vmatpush1.msra.mxu0 0.0
        %1738 = vmatprep.subr.mxu0 0.0
        %1739 = vmatpush1.msra.mxu0 0.0
        %1740 = vmatprep.subr.mxu0 0.0
        %1741 = vmatpush1.msra.mxu0 0.0
        %1742 = vmatprep.subr.mxu0 0.0
        %1743 = vmatpush1.msra.mxu0 0.0
        %1744 = vmatprep.subr.mxu0 0.0
        %1745 = vmatpush1.msra.mxu0 0.0
        %1746 = vmatprep.subr.mxu0 0.0
        %1747 = vmatpush1.msra.mxu0 0.0
        %1748 = vmatprep.subr.mxu0 0.0
        %1749 = vmatpush1.msra.mxu0 0.0
        %1750 = vmatprep.subr.mxu0 0.0
        %1751 = vmatpush1.msra.mxu0 0.0
        %1752 = vmatprep.subr.mxu0 0.0
        %1753 = vmatpush1.msra.mxu0 0.0
        %1754 = vmatprep.subr.mxu0 0.0
        %1755 = vmatpush1.msra.mxu0 0.0
        %1756 = vmatprep.subr.mxu0 0.0
        %1757 = vmatpush1.msra.mxu0 0.0
        %1758 = vmatprep.subr.mxu0 0.0
        %1759 = vmatpush1.msra.mxu0 0.0
        %1760 = vmatprep.subr.mxu0 0.0
        %1761 = vmatpush1.msra.mxu0 0.0
        %1762 = vmatprep.subr.mxu0 0.0
        %1763 = vmatpush1.msra.mxu0 0.0
        %1764 = vmatprep.subr.mxu0 0.0
        %1765 = vmatpush1.msra.mxu0 0.0
        %1766 = vmatprep.subr.mxu0 0.0
        %1767 = vmatpush1.msra.mxu0 0.0
        %1768 = vmatprep.subr.mxu0 0.0
        %1769 = vmatpush1.msra.mxu0 0.0
        %1770 = vmatprep.subr.mxu0 0.0
        %1771 = vmatpush1.msra.mxu0 0.0
        %1772 = vmatprep.subr.mxu0 0.0
        %1773 = vmatpush1.msra.mxu0 0.0
        %1774 = vmatprep.subr.mxu0 0.0
        %1775 = vmatpush1.msra.mxu0 0.0
        %1776 = vmatprep.subr.mxu0 0.0
        %1777 = vmatpush1.msra.mxu0 0.0
        %1778 = vmatprep.subr.mxu0 0.0
        %1779 = vmatpush1.msra.mxu0 0.0
        %1780 = vmatprep.subr.mxu0 0.0
        %1781 = vmatpush1.msra.mxu0 0.0
        %1782 = vmatprep.subr.mxu0 0.0
        %1783 = vmatpush1.msra.mxu0 0.0
        %1784 = vmatprep.subr.mxu0 0.0
        %1785 = vmatpush1.msra.mxu0 0.0
        %1786 = vmatprep.subr.mxu0 0.0
        %1787 = vmatpush1.msra.mxu0 0.0
        %1788 = vmatprep.subr.mxu0 0.0
        %1789 = vmatpush1.msra.mxu0 0.0
        %1790 = vmatprep.subr.mxu0 0.0
        %1791 = vmatpush1.msra.mxu0 0.0
        %1792 = vmatprep.subr.mxu0 0.0
        %1793 = vmatpush1.msra.mxu0 0.0
        %1794 = vmatprep.mubr.f32.mxu0 0.0
        %1795 = vmatmul.mubr.f32.gmra.mrb[0].mxu0 %v1200
        %v1796 = vpop.f32.mrb[0].mxu0
        %v1797 = vadd.f32 0.0, %v1796
        %v1798 = vpop.f32.mrb[0].mxu0
        %1799 = vmatprep.mubr.f32.mxu0 0.0
        %1800 = vmatmul.mubr.f32.gmra.mrb[0].mxu0 %v1203
        %v1801 = vpop.f32.mrb[0].mxu0
        %v1802 = vadd.f32 0.0, %v1801
        %v1803 = vpop.f32.mrb[0].mxu0
        %1804 = vdwg.mxu0
        %1805 = vmatprep.subr.mxu0 0.0
        %1806 = vmatpush1.msra.mxu0 %v572
        %1807 = vmatprep.subr.mxu0 0.0
        %1808 = vmatpush1.msra.mxu0 %v573
        %1809 = vmatprep.subr.mxu0 0.0
        %1810 = vmatpush1.msra.mxu0 0.0
        %1811 = vmatprep.subr.mxu0 0.0
        %1812 = vmatpush1.msra.mxu0 0.0
        %1813 = vmatprep.subr.mxu0 0.0
        %1814 = vmatpush1.msra.mxu0 0.0
        %1815 = vmatprep.subr.mxu0 0.0
        %1816 = vmatpush1.msra.mxu0 0.0
        %1817 = vmatprep.subr.mxu0 0.0
        %1818 = vmatpush1.msra.mxu0 0.0
        %1819 = vmatprep.subr.mxu0 0.0
        %1820 = vmatpush1.msra.mxu0 0.0
        %1821 = vmatprep.subr.mxu0 0.0
        %1822 = vmatpush1.msra.mxu0 0.0
        %1823 = vmatprep.subr.mxu0 0.0
        %1824 = vmatpush1.msra.mxu0 0.0
        %1825 = vmatprep.subr.mxu0 0.0
        %1826 = vmatpush1.msra.mxu0 0.0
        %1827 = vmatprep.subr.mxu0 0.0
        %1828 = vmatpush1.msra.mxu0 0.0
        %1829 = vmatprep.subr.mxu0 0.0
        %1830 = vmatpush1.msra.mxu0 0.0
        %1831 = vmatprep.subr.mxu0 0.0
        %1832 = vmatpush1.msra.mxu0 0.0
        %1833 = vmatprep.subr.mxu0 0.0
        %1834 = vmatpush1.msra.mxu0 0.0
        %1835 = vmatprep.subr.mxu0 0.0
        %1836 = vmatpush1.msra.mxu0 0.0
        %1837 = vmatprep.subr.mxu0 0.0
        %1838 = vmatpush1.msra.mxu0 0.0
        %1839 = vmatprep.subr.mxu0 0.0
        %1840 = vmatpush1.msra.mxu0 0.0
        %1841 = vmatprep.subr.mxu0 0.0
        %1842 = vmatpush1.msra.mxu0 0.0
        %1843 = vmatprep.subr.mxu0 0.0
        %1844 = vmatpush1.msra.mxu0 0.0
        %1845 = vmatprep.subr.mxu0 0.0
        %1846 = vmatpush1.msra.mxu0 0.0
        %1847 = vmatprep.subr.mxu0 0.0
        %1848 = vmatpush1.msra.mxu0 0.0
        %1849 = vmatprep.subr.mxu0 0.0
        %1850 = vmatpush1.msra.mxu0 0.0
        %1851 = vmatprep.subr.mxu0 0.0
        %1852 = vmatpush1.msra.mxu0 0.0
        %1853 = vmatprep.subr.mxu0 0.0
        %1854 = vmatpush1.msra.mxu0 0.0
        %1855 = vmatprep.subr.mxu0 0.0
        %1856 = vmatpush1.msra.mxu0 0.0
        %1857 = vmatprep.subr.mxu0 0.0
        %1858 = vmatpush1.msra.mxu0 0.0
        %1859 = vmatprep.subr.mxu0 0.0
        %1860 = vmatpush1.msra.mxu0 0.0
        %1861 = vmatprep.subr.mxu0 0.0
        %1862 = vmatpush1.msra.mxu0 0.0
        %1863 = vmatprep.subr.mxu0 0.0
        %1864 = vmatpush1.msra.mxu0 0.0
        %1865 = vmatprep.subr.mxu0 0.0
        %1866 = vmatpush1.msra.mxu0 0.0
        %1867 = vmatprep.subr.mxu0 0.0
        %1868 = vmatpush1.msra.mxu0 0.0
        %1869 = vmatprep.mubr.f32.mxu0 0.0
        %1870 = vmatmul.mubr.f32.gmra.mrb[0].mxu0 %v594
        %v1871 = vpop.f32.mrb[0].mxu0
        %v1872 = vadd.f32 0.0, %v1871
        %v1873 = vpop.f32.mrb[0].mxu0
        %1874 = vmatprep.mubr.f32.mxu0 0.0
        %1875 = vmatmul.mubr.f32.gmra.mrb[0].mxu0 %v597
        %v1876 = vpop.f32.mrb[0].mxu0
        %v1877 = vadd.f32 0.0, %v1876
        %v1878 = vpop.f32.mrb[0].mxu0
        %1879 = vdwg.mxu0
        %1880 = vmatprep.subr.mxu0 0.0
        %1881 = vmatpush1.msra.mxu0 %v574
        %1882 = vmatprep.subr.mxu0 0.0
        %1883 = vmatpush1.msra.mxu0 %v575
        %1884 = vmatprep.subr.mxu0 0.0
        %1885 = vmatpush1.msra.mxu0 0.0
        %1886 = vmatprep.subr.mxu0 0.0
        %1887 = vmatpush1.msra.mxu0 0.0
        %1888 = vmatprep.subr.mxu0 0.0
        %1889 = vmatpush1.msra.mxu0 0.0
        %1890 = vmatprep.subr.mxu0 0.0
        %1891 = vmatpush1.msra.mxu0 0.0
        %1892 = vmatprep.subr.mxu0 0.0
        %1893 = vmatpush1.msra.mxu0 0.0
        %1894 = vmatprep.subr.mxu0 0.0
        %1895 = vmatpush1.msra.mxu0 0.0
        %1896 = vmatprep.subr.mxu0 0.0
        %1897 = vmatpush1.msra.mxu0 0.0
        %1898 = vmatprep.subr.mxu0 0.0
        %1899 = vmatpush1.msra.mxu0 0.0
        %1900 = vmatprep.subr.mxu0 0.0
        %1901 = vmatpush1.msra.mxu0 0.0
        %1902 = vmatprep.subr.mxu0 0.0
        %1903 = vmatpush1.msra.mxu0 0.0
        %1904 = vmatprep.subr.mxu0 0.0
        %1905 = vmatpush1.msra.mxu0 0.0
        %1906 = vmatprep.subr.mxu0 0.0
        %1907 = vmatpush1.msra.mxu0 0.0
        %1908 = vmatprep.subr.mxu0 0.0
        %1909 = vmatpush1.msra.mxu0 0.0
        %1910 = vmatprep.subr.mxu0 0.0
        %1911 = vmatpush1.msra.mxu0 0.0
        %1912 = vmatprep.subr.mxu0 0.0
        %1913 = vmatpush1.msra.mxu0 0.0
        %1914 = vmatprep.subr.mxu0 0.0
        %1915 = vmatpush1.msra.mxu0 0.0
        %1916 = vmatprep.subr.mxu0 0.0
        %1917 = vmatpush1.msra.mxu0 0.0
        %1918 = vmatprep.subr.mxu0 0.0
        %1919 = vmatpush1.msra.mxu0 0.0
        %1920 = vmatprep.subr.mxu0 0.0
        %1921 = vmatpush1.msra.mxu0 0.0
        %1922 = vmatprep.subr.mxu0 0.0
        %1923 = vmatpush1.msra.mxu0 0.0
        %1924 = vmatprep.subr.mxu0 0.0
        %1925 = vmatpush1.msra.mxu0 0.0
        %1926 = vmatprep.subr.mxu0 0.0
        %1927 = vmatpush1.msra.mxu0 0.0
        %1928 = vmatprep.subr.mxu0 0.0
        %1929 = vmatpush1.msra.mxu0 0.0
        %1930 = vmatprep.subr.mxu0 0.0
        %1931 = vmatpush1.msra.mxu0 0.0
        %1932 = vmatprep.subr.mxu0 0.0
        %1933 = vmatpush1.msra.mxu0 0.0
        %1934 = vmatprep.subr.mxu0 0.0
        %1935 = vmatpush1.msra.mxu0 0.0
        %1936 = vmatprep.subr.mxu0 0.0
        %1937 = vmatpush1.msra.mxu0 0.0
        %1938 = vmatprep.subr.mxu0 0.0
        %1939 = vmatpush1.msra.mxu0 0.0
        %1940 = vmatprep.subr.mxu0 0.0
        %1941 = vmatpush1.msra.mxu0 0.0
        %1942 = vmatprep.subr.mxu0 0.0
        %1943 = vmatpush1.msra.mxu0 0.0
        %1944 = vmatprep.mubr.f32.mxu0 0.0
        %1945 = vmatmul.mubr.f32.gmra.mrb[0].mxu0 %v594
        %v1946 = vpop.f32.mrb[0].mxu0
        %v1947 = vadd.f32 0.0, %v1946
        %v1948 = vpop.f32.mrb[0].mxu0
        %1949 = vmatprep.mubr.f32.mxu0 0.0
        %1950 = vmatmul.mubr.f32.gmra.mrb[0].mxu0 %v597
        %v1951 = vpop.f32.mrb[0].mxu0
        %v1952 = vadd.f32 0.0, %v1951
        %v1953 = vpop.f32.mrb[0].mxu0
        %1954 = vdwg.mxu0
        %1955 = vmatprep.subr.mxu0 0.0
        %1956 = vmatpush1.msra.mxu0 %v576
        %1957 = vmatprep.subr.mxu0 0.0
        %1958 = vmatpush1.msra.mxu0 %v577
        %1959 = vmatprep.subr.mxu0 0.0
        %1960 = vmatpush1.msra.mxu0 0.0
        %1961 = vmatprep.subr.mxu0 0.0
        %1962 = vmatpush1.msra.mxu0 0.0
        %1963 = vmatprep.subr.mxu0 0.0
        %1964 = vmatpush1.msra.mxu0 0.0
        %1965 = vmatprep.subr.mxu0 0.0
        %1966 = vmatpush1.msra.mxu0 0.0
        %1967 = vmatprep.subr.mxu0 0.0
        %1968 = vmatpush1.msra.mxu0 0.0
        %1969 = vmatprep.subr.mxu0 0.0
        %1970 = vmatpush1.msra.mxu0 0.0
        %1971 = vmatprep.subr.mxu0 0.0
        %1972 = vmatpush1.msra.mxu0 0.0
        %1973 = vmatprep.subr.mxu0 0.0
        %1974 = vmatpush1.msra.mxu0 0.0
        %1975 = vmatprep.subr.mxu0 0.0
        %1976 = vmatpush1.msra.mxu0 0.0
        %1977 = vmatprep.subr.mxu0 0.0
        %1978 = vmatpush1.msra.mxu0 0.0
        %1979 = vmatprep.subr.mxu0 0.0
        %1980 = vmatpush1.msra.mxu0 0.0
        %1981 = vmatprep.subr.mxu0 0.0
        %1982 = vmatpush1.msra.mxu0 0.0
        %1983 = vmatprep.subr.mxu0 0.0
        %1984 = vmatpush1.msra.mxu0 0.0
        %1985 = vmatprep.subr.mxu0 0.0
        %1986 = vmatpush1.msra.mxu0 0.0
        %1987 = vmatprep.subr.mxu0 0.0
        %1988 = vmatpush1.msra.mxu0 0.0
        %1989 = vmatprep.subr.mxu0 0.0
        %1990 = vmatpush1.msra.mxu0 0.0
        %1991 = vmatprep.subr.mxu0 0.0
        %1992 = vmatpush1.msra.mxu0 0.0
        %1993 = vmatprep.subr.mxu0 0.0
        %1994 = vmatpush1.msra.mxu0 0.0
        %1995 = vmatprep.subr.mxu0 0.0
        %1996 = vmatpush1.msra.mxu0 0.0
        %1997 = vmatprep.subr.mxu0 0.0
        %1998 = vmatpush1.msra.mxu0 0.0
        %1999 = vmatprep.subr.mxu0 0.0
        %2000 = vmatpush1.msra.mxu0 0.0
        %2001 = vmatprep.subr.mxu0 0.0
        %2002 = vmatpush1.msra.mxu0 0.0
        %2003 = vmatprep.subr.mxu0 0.0
        %2004 = vmatpush1.msra.mxu0 0.0
        %2005 = vmatprep.subr.mxu0 0.0
        %2006 = vmatpush1.msra.mxu0 0.0
        %2007 = vmatprep.subr.mxu0 0.0
        %2008 = vmatpush1.msra.mxu0 0.0
        %2009 = vmatprep.subr.mxu0 0.0
        %2010 = vmatpush1.msra.mxu0 0.0
        %2011 = vmatprep.subr.mxu0 0.0
        %2012 = vmatpush1.msra.mxu0 0.0
        %2013 = vmatprep.subr.mxu0 0.0
        %2014 = vmatpush1.msra.mxu0 0.0
        %2015 = vmatprep.subr.mxu0 0.0
        %2016 = vmatpush1.msra.mxu0 0.0
        %2017 = vmatprep.subr.mxu0 0.0
        %2018 = vmatpush1.msra.mxu0 0.0
        %2019 = vmatprep.mubr.f32.mxu0 0.0
        %2020 = vmatmul.mubr.f32.gmra.mrb[0].mxu0 %v594
        %v2021 = vpop.f32.mrb[0].mxu0
        %v2022 = vadd.f32 0.0, %v2021
        %v2023 = vpop.f32.mrb[0].mxu0
        %2024 = vmatprep.mubr.f32.mxu0 0.0
        %2025 = vmatmul.mubr.f32.gmra.mrb[0].mxu0 %v597
        %v2026 = vpop.f32.mrb[0].mxu0
        %v2027 = vadd.f32 0.0, %v2026
        %v2028 = vpop.f32.mrb[0].mxu0
        %2029 = vdwg.mxu0
        %2030 = vmatprep.subr.mxu0 0.0
        %2031 = vmatpush1.msra.mxu0 %v578
        %2032 = vmatprep.subr.mxu0 0.0
        %2033 = vmatpush1.msra.mxu0 %v579
        %2034 = vmatprep.subr.mxu0 0.0
        %2035 = vmatpush1.msra.mxu0 0.0
        %2036 = vmatprep.subr.mxu0 0.0
        %2037 = vmatpush1.msra.mxu0 0.0
        %2038 = vmatprep.subr.mxu0 0.0
        %2039 = vmatpush1.msra.mxu0 0.0
        %2040 = vmatprep.subr.mxu0 0.0
        %2041 = vmatpush1.msra.mxu0 0.0
        %2042 = vmatprep.subr.mxu0 0.0
        %2043 = vmatpush1.msra.mxu0 0.0
        %2044 = vmatprep.subr.mxu0 0.0
        %2045 = vmatpush1.msra.mxu0 0.0
        %2046 = vmatprep.subr.mxu0 0.0
        %2047 = vmatpush1.msra.mxu0 0.0
        %2048 = vmatprep.subr.mxu0 0.0
        %2049 = vmatpush1.msra.mxu0 0.0
        %2050 = vmatprep.subr.mxu0 0.0
        %2051 = vmatpush1.msra.mxu0 0.0
        %2052 = vmatprep.subr.mxu0 0.0
        %2053 = vmatpush1.msra.mxu0 0.0
        %2054 = vmatprep.subr.mxu0 0.0
        %2055 = vmatpush1.msra.mxu0 0.0
        %2056 = vmatprep.subr.mxu0 0.0
        %2057 = vmatpush1.msra.mxu0 0.0
        %2058 = vmatprep.subr.mxu0 0.0
        %2059 = vmatpush1.msra.mxu0 0.0
        %2060 = vmatprep.subr.mxu0 0.0
        %2061 = vmatpush1.msra.mxu0 0.0
        %2062 = vmatprep.subr.mxu0 0.0
        %2063 = vmatpush1.msra.mxu0 0.0
        %2064 = vmatprep.subr.mxu0 0.0
        %2065 = vmatpush1.msra.mxu0 0.0
        %2066 = vmatprep.subr.mxu0 0.0
        %2067 = vmatpush1.msra.mxu0 0.0
        %2068 = vmatprep.subr.mxu0 0.0
        %2069 = vmatpush1.msra.mxu0 0.0
        %2070 = vmatprep.subr.mxu0 0.0
        %2071 = vmatpush1.msra.mxu0 0.0
        %2072 = vmatprep.subr.mxu0 0.0
        %2073 = vmatpush1.msra.mxu0 0.0
        %2074 = vmatprep.subr.mxu0 0.0
        %2075 = vmatpush1.msra.mxu0 0.0
        %2076 = vmatprep.subr.mxu0 0.0
        %2077 = vmatpush1.msra.mxu0 0.0
        %2078 = vmatprep.subr.mxu0 0.0
        %2079 = vmatpush1.msra.mxu0 0.0
        %2080 = vmatprep.subr.mxu0 0.0
        %2081 = vmatpush1.msra.mxu0 0.0
        %2082 = vmatprep.subr.mxu0 0.0
        %2083 = vmatpush1.msra.mxu0 0.0
        %2084 = vmatprep.subr.mxu0 0.0
        %2085 = vmatpush1.msra.mxu0 0.0
        %2086 = vmatprep.subr.mxu0 0.0
        %2087 = vmatpush1.msra.mxu0 0.0
        %2088 = vmatprep.subr.mxu0 0.0
        %2089 = vmatpush1.msra.mxu0 0.0
        %2090 = vmatprep.subr.mxu0 0.0
        %2091 = vmatpush1.msra.mxu0 0.0
        %2092 = vmatprep.subr.mxu0 0.0
        %2093 = vmatpush1.msra.mxu0 0.0
        %2094 = vmatprep.mubr.f32.mxu0 0.0
        %2095 = vmatmul.mubr.f32.gmra.mrb[0].mxu0 %v594
        %v2096 = vpop.f32.mrb[0].mxu0
        %v2097 = vadd.f32 0.0, %v2096
        %v2098 = vpop.f32.mrb[0].mxu0
        %2099 = vmatprep.mubr.f32.mxu0 0.0
        %2100 = vmatmul.mubr.f32.gmra.mrb[0].mxu0 %v597
        %v2101 = vpop.f32.mrb[0].mxu0
        %v2102 = vadd.f32 0.0, %v2101
        %v2103 = vpop.f32.mrb[0].mxu0
        %2104 = vdwg.mxu0
        %2105 = vmatprep.subr.mxu0 0.0
        %2106 = vmatpush1.msra.mxu0 %v580
        %2107 = vmatprep.subr.mxu0 0.0
        %2108 = vmatpush1.msra.mxu0 %v581
        %2109 = vmatprep.subr.mxu0 0.0
        %2110 = vmatpush1.msra.mxu0 0.0
        %2111 = vmatprep.subr.mxu0 0.0
        %2112 = vmatpush1.msra.mxu0 0.0
        %2113 = vmatprep.subr.mxu0 0.0
        %2114 = vmatpush1.msra.mxu0 0.0
        %2115 = vmatprep.subr.mxu0 0.0
        %2116 = vmatpush1.msra.mxu0 0.0
        %2117 = vmatprep.subr.mxu0 0.0
        %2118 = vmatpush1.msra.mxu0 0.0
        %2119 = vmatprep.subr.mxu0 0.0
        %2120 = vmatpush1.msra.mxu0 0.0
        %2121 = vmatprep.subr.mxu0 0.0
        %2122 = vmatpush1.msra.mxu0 0.0
        %2123 = vmatprep.subr.mxu0 0.0
        %2124 = vmatpush1.msra.mxu0 0.0
        %2125 = vmatprep.subr.mxu0 0.0
        %2126 = vmatpush1.msra.mxu0 0.0
        %2127 = vmatprep.subr.mxu0 0.0
        %2128 = vmatpush1.msra.mxu0 0.0
        %2129 = vmatprep.subr.mxu0 0.0
        %2130 = vmatpush1.msra.mxu0 0.0
        %2131 = vmatprep.subr.mxu0 0.0
        %2132 = vmatpush1.msra.mxu0 0.0
        %2133 = vmatprep.subr.mxu0 0.0
        %2134 = vmatpush1.msra.mxu0 0.0
        %2135 = vmatprep.subr.mxu0 0.0
        %2136 = vmatpush1.msra.mxu0 0.0
        %2137 = vmatprep.subr.mxu0 0.0
        %2138 = vmatpush1.msra.mxu0 0.0
        %2139 = vmatprep.subr.mxu0 0.0
        %2140 = vmatpush1.msra.mxu0 0.0
        %2141 = vmatprep.subr.mxu0 0.0
        %2142 = vmatpush1.msra.mxu0 0.0
        %2143 = vmatprep.subr.mxu0 0.0
        %2144 = vmatpush1.msra.mxu0 0.0
        %2145 = vmatprep.subr.mxu0 0.0
        %2146 = vmatpush1.msra.mxu0 0.0
        %2147 = vmatprep.subr.mxu0 0.0
        %2148 = vmatpush1.msra.mxu0 0.0
        %2149 = vmatprep.subr.mxu0 0.0
        %2150 = vmatpush1.msra.mxu0 0.0
        %2151 = vmatprep.subr.mxu0 0.0
        %2152 = vmatpush1.msra.mxu0 0.0
        %2153 = vmatprep.subr.mxu0 0.0
        %2154 = vmatpush1.msra.mxu0 0.0
        %2155 = vmatprep.subr.mxu0 0.0
        %2156 = vmatpush1.msra.mxu0 0.0
        %2157 = vmatprep.subr.mxu0 0.0
        %2158 = vmatpush1.msra.mxu0 0.0
        %2159 = vmatprep.subr.mxu0 0.0
        %2160 = vmatpush1.msra.mxu0 0.0
        %2161 = vmatprep.subr.mxu0 0.0
        %2162 = vmatpush1.msra.mxu0 0.0
        %2163 = vmatprep.subr.mxu0 0.0
        %2164 = vmatpush1.msra.mxu0 0.0
        %2165 = vmatprep.subr.mxu0 0.0
        %2166 = vmatpush1.msra.mxu0 0.0
        %2167 = vmatprep.subr.mxu0 0.0
        %2168 = vmatpush1.msra.mxu0 0.0
        %2169 = vmatprep.mubr.f32.mxu0 0.0
        %2170 = vmatmul.mubr.f32.gmra.mrb[0].mxu0 %v594
        %v2171 = vpop.f32.mrb[0].mxu0
        %v2172 = vadd.f32 0.0, %v2171
        %v2173 = vpop.f32.mrb[0].mxu0
        %2174 = vmatprep.mubr.f32.mxu0 0.0
        %2175 = vmatmul.mubr.f32.gmra.mrb[0].mxu0 %v597
        %v2176 = vpop.f32.mrb[0].mxu0
        %v2177 = vadd.f32 0.0, %v2176
        %v2178 = vpop.f32.mrb[0].mxu0
        %2179 = vdwg.mxu0
        %2180 = vmatprep.subr.mxu0 0.0
        %2181 = vmatpush1.msra.mxu0 %v582
        %2182 = vmatprep.subr.mxu0 0.0
        %2183 = vmatpush1.msra.mxu0 %v583
        %2184 = vmatprep.subr.mxu0 0.0
        %2185 = vmatpush1.msra.mxu0 0.0
        %2186 = vmatprep.subr.mxu0 0.0
        %2187 = vmatpush1.msra.mxu0 0.0
        %2188 = vmatprep.subr.mxu0 0.0
        %2189 = vmatpush1.msra.mxu0 0.0
        %2190 = vmatprep.subr.mxu0 0.0
        %2191 = vmatpush1.msra.mxu0 0.0
        %2192 = vmatprep.subr.mxu0 0.0
        %2193 = vmatpush1.msra.mxu0 0.0
        %2194 = vmatprep.subr.mxu0 0.0
        %2195 = vmatpush1.msra.mxu0 0.0
        %2196 = vmatprep.subr.mxu0 0.0
        %2197 = vmatpush1.msra.mxu0 0.0
        %2198 = vmatprep.subr.mxu0 0.0
        %2199 = vmatpush1.msra.mxu0 0.0
        %2200 = vmatprep.subr.mxu0 0.0
        %2201 = vmatpush1.msra.mxu0 0.0
        %2202 = vmatprep.subr.mxu0 0.0
        %2203 = vmatpush1.msra.mxu0 0.0
        %2204 = vmatprep.subr.mxu0 0.0
        %2205 = vmatpush1.msra.mxu0 0.0
        %2206 = vmatprep.subr.mxu0 0.0
        %2207 = vmatpush1.msra.mxu0 0.0
        %2208 = vmatprep.subr.mxu0 0.0
        %2209 = vmatpush1.msra.mxu0 0.0
        %2210 = vmatprep.subr.mxu0 0.0
        %2211 = vmatpush1.msra.mxu0 0.0
        %2212 = vmatprep.subr.mxu0 0.0
        %2213 = vmatpush1.msra.mxu0 0.0
        %2214 = vmatprep.subr.mxu0 0.0
        %2215 = vmatpush1.msra.mxu0 0.0
        %2216 = vmatprep.subr.mxu0 0.0
        %2217 = vmatpush1.msra.mxu0 0.0
        %2218 = vmatprep.subr.mxu0 0.0
        %2219 = vmatpush1.msra.mxu0 0.0
        %2220 = vmatprep.subr.mxu0 0.0
        %2221 = vmatpush1.msra.mxu0 0.0
        %2222 = vmatprep.subr.mxu0 0.0
        %2223 = vmatpush1.msra.mxu0 0.0
        %2224 = vmatprep.subr.mxu0 0.0
        %2225 = vmatpush1.msra.mxu0 0.0
        %2226 = vmatprep.subr.mxu0 0.0
        %2227 = vmatpush1.msra.mxu0 0.0
        %2228 = vmatprep.subr.mxu0 0.0
        %2229 = vmatpush1.msra.mxu0 0.0
        %2230 = vmatprep.subr.mxu0 0.0
        %2231 = vmatpush1.msra.mxu0 0.0
        %2232 = vmatprep.subr.mxu0 0.0
        %2233 = vmatpush1.msra.mxu0 0.0
        %2234 = vmatprep.subr.mxu0 0.0
        %2235 = vmatpush1.msra.mxu0 0.0
        %2236 = vmatprep.subr.mxu0 0.0
        %2237 = vmatpush1.msra.mxu0 0.0
        %2238 = vmatprep.subr.mxu0 0.0
        %2239 = vmatpush1.msra.mxu0 0.0
        %2240 = vmatprep.subr.mxu0 0.0
        %2241 = vmatpush1.msra.mxu0 0.0
        %2242 = vmatprep.subr.mxu0 0.0
        %2243 = vmatpush1.msra.mxu0 0.0
        %2244 = vmatprep.mubr.f32.mxu0 0.0
        %2245 = vmatmul.mubr.f32.gmra.mrb[0].mxu0 %v594
        %v2246 = vpop.f32.mrb[0].mxu0
        %v2247 = vadd.f32 0.0, %v2246
        %v2248 = vpop.f32.mrb[0].mxu0
        %2249 = vmatprep.mubr.f32.mxu0 0.0
        %2250 = vmatmul.mubr.f32.gmra.mrb[0].mxu0 %v597
        %v2251 = vpop.f32.mrb[0].mxu0
        %v2252 = vadd.f32 0.0, %v2251
        %v2253 = vpop.f32.mrb[0].mxu0
        %2254 = vdwg.mxu0
        %2255 = vmatprep.subr.mxu0 0.0
        %2256 = vmatpush1.msra.mxu0 %v584
        %2257 = vmatprep.subr.mxu0 0.0
        %2258 = vmatpush1.msra.mxu0 %v585
        %2259 = vmatprep.subr.mxu0 0.0
        %2260 = vmatpush1.msra.mxu0 0.0
        %2261 = vmatprep.subr.mxu0 0.0
        %2262 = vmatpush1.msra.mxu0 0.0
        %2263 = vmatprep.subr.mxu0 0.0
        %2264 = vmatpush1.msra.mxu0 0.0
        %2265 = vmatprep.subr.mxu0 0.0
        %2266 = vmatpush1.msra.mxu0 0.0
        %2267 = vmatprep.subr.mxu0 0.0
        %2268 = vmatpush1.msra.mxu0 0.0
        %2269 = vmatprep.subr.mxu0 0.0
        %2270 = vmatpush1.msra.mxu0 0.0
        %2271 = vmatprep.subr.mxu0 0.0
        %2272 = vmatpush1.msra.mxu0 0.0
        %2273 = vmatprep.subr.mxu0 0.0
        %2274 = vmatpush1.msra.mxu0 0.0
        %2275 = vmatprep.subr.mxu0 0.0
        %2276 = vmatpush1.msra.mxu0 0.0
        %2277 = vmatprep.subr.mxu0 0.0
        %2278 = vmatpush1.msra.mxu0 0.0
        %2279 = vmatprep.subr.mxu0 0.0
        %2280 = vmatpush1.msra.mxu0 0.0
        %2281 = vmatprep.subr.mxu0 0.0
        %2282 = vmatpush1.msra.mxu0 0.0
        %2283 = vmatprep.subr.mxu0 0.0
        %2284 = vmatpush1.msra.mxu0 0.0
        %2285 = vmatprep.subr.mxu0 0.0
        %2286 = vmatpush1.msra.mxu0 0.0
        %2287 = vmatprep.subr.mxu0 0.0
        %2288 = vmatpush1.msra.mxu0 0.0
        %2289 = vmatprep.subr.mxu0 0.0
        %2290 = vmatpush1.msra.mxu0 0.0
        %2291 = vmatprep.subr.mxu0 0.0
        %2292 = vmatpush1.msra.mxu0 0.0
        %2293 = vmatprep.subr.mxu0 0.0
        %2294 = vmatpush1.msra.mxu0 0.0
        %2295 = vmatprep.subr.mxu0 0.0
        %2296 = vmatpush1.msra.mxu0 0.0
        %2297 = vmatprep.subr.mxu0 0.0
        %2298 = vmatpush1.msra.mxu0 0.0
        %2299 = vmatprep.subr.mxu0 0.0
        %2300 = vmatpush1.msra.mxu0 0.0
        %2301 = vmatprep.subr.mxu0 0.0
        %2302 = vmatpush1.msra.mxu0 0.0
        %2303 = vmatprep.subr.mxu0 0.0
        %2304 = vmatpush1.msra.mxu0 0.0
        %2305 = vmatprep.subr.mxu0 0.0
        %2306 = vmatpush1.msra.mxu0 0.0
        %2307 = vmatprep.subr.mxu0 0.0
        %2308 = vmatpush1.msra.mxu0 0.0
        %2309 = vmatprep.subr.mxu0 0.0
        %2310 = vmatpush1.msra.mxu0 0.0
        %2311 = vmatprep.subr.mxu0 0.0
        %2312 = vmatpush1.msra.mxu0 0.0
        %2313 = vmatprep.subr.mxu0 0.0
        %2314 = vmatpush1.msra.mxu0 0.0
        %2315 = vmatprep.subr.mxu0 0.0
        %2316 = vmatpush1.msra.mxu0 0.0
        %2317 = vmatprep.subr.mxu0 0.0
        %2318 = vmatpush1.msra.mxu0 0.0
        %2319 = vmatprep.mubr.f32.mxu0 0.0
        %2320 = vmatmul.mubr.f32.gmra.mrb[0].mxu0 %v594
        %v2321 = vpop.f32.mrb[0].mxu0
        %v2322 = vadd.f32 0.0, %v2321
        %v2323 = vpop.f32.mrb[0].mxu0
        %2324 = vmatprep.mubr.f32.mxu0 0.0
        %2325 = vmatmul.mubr.f32.gmra.mrb[0].mxu0 %v597
        %v2326 = vpop.f32.mrb[0].mxu0
        %v2327 = vadd.f32 0.0, %v2326
        %v2328 = vpop.f32.mrb[0].mxu0
        %2329 = vdwg.mxu0
        %2330 = vmatprep.subr.mxu0 0.0
        %2331 = vmatpush1.msra.mxu0 %v586
        %2332 = vmatprep.subr.mxu0 0.0
        %2333 = vmatpush1.msra.mxu0 %v587
        %2334 = vmatprep.subr.mxu0 0.0
        %2335 = vmatpush1.msra.mxu0 0.0
        %2336 = vmatprep.subr.mxu0 0.0
        %2337 = vmatpush1.msra.mxu0 0.0
        %2338 = vmatprep.subr.mxu0 0.0
        %2339 = vmatpush1.msra.mxu0 0.0
        %2340 = vmatprep.subr.mxu0 0.0
        %2341 = vmatpush1.msra.mxu0 0.0
        %2342 = vmatprep.subr.mxu0 0.0
        %2343 = vmatpush1.msra.mxu0 0.0
        %2344 = vmatprep.subr.mxu0 0.0
        %2345 = vmatpush1.msra.mxu0 0.0
        %2346 = vmatprep.subr.mxu0 0.0
        %2347 = vmatpush1.msra.mxu0 0.0
        %2348 = vmatprep.subr.mxu0 0.0
        %2349 = vmatpush1.msra.mxu0 0.0
        %2350 = vmatprep.subr.mxu0 0.0
        %2351 = vmatpush1.msra.mxu0 0.0
        %2352 = vmatprep.subr.mxu0 0.0
        %2353 = vmatpush1.msra.mxu0 0.0
        %2354 = vmatprep.subr.mxu0 0.0
        %2355 = vmatpush1.msra.mxu0 0.0
        %2356 = vmatprep.subr.mxu0 0.0
        %2357 = vmatpush1.msra.mxu0 0.0
        %2358 = vmatprep.subr.mxu0 0.0
        %2359 = vmatpush1.msra.mxu0 0.0
        %2360 = vmatprep.subr.mxu0 0.0
        %2361 = vmatpush1.msra.mxu0 0.0
        %2362 = vmatprep.subr.mxu0 0.0
        %2363 = vmatpush1.msra.mxu0 0.0
        %2364 = vmatprep.subr.mxu0 0.0
        %2365 = vmatpush1.msra.mxu0 0.0
        %2366 = vmatprep.subr.mxu0 0.0
        %2367 = vmatpush1.msra.mxu0 0.0
        %2368 = vmatprep.subr.mxu0 0.0
        %2369 = vmatpush1.msra.mxu0 0.0
        %2370 = vmatprep.subr.mxu0 0.0
        %2371 = vmatpush1.msra.mxu0 0.0
        %2372 = vmatprep.subr.mxu0 0.0
        %2373 = vmatpush1.msra.mxu0 0.0
        %2374 = vmatprep.subr.mxu0 0.0
        %2375 = vmatpush1.msra.mxu0 0.0
        %2376 = vmatprep.subr.mxu0 0.0
        %2377 = vmatpush1.msra.mxu0 0.0
        %2378 = vmatprep.subr.mxu0 0.0
        %2379 = vmatpush1.msra.mxu0 0.0
        %2380 = vmatprep.subr.mxu0 0.0
        %2381 = vmatpush1.msra.mxu0 0.0
        %2382 = vmatprep.subr.mxu0 0.0
        %2383 = vmatpush1.msra.mxu0 0.0
        %2384 = vmatprep.subr.mxu0 0.0
        %2385 = vmatpush1.msra.mxu0 0.0
        %2386 = vmatprep.subr.mxu0 0.0
        %2387 = vmatpush1.msra.mxu0 0.0
        %2388 = vmatprep.subr.mxu0 0.0
        %2389 = vmatpush1.msra.mxu0 0.0
        %2390 = vmatprep.subr.mxu0 0.0
        %2391 = vmatpush1.msra.mxu0 0.0
        %2392 = vmatprep.subr.mxu0 0.0
        %2393 = vmatpush1.msra.mxu0 0.0
        %2394 = vmatprep.mubr.f32.mxu0 0.0
        %2395 = vmatmul.mubr.f32.gmra.mrb[0].mxu0 %v594
        %v2396 = vpop.f32.mrb[0].mxu0
        %v2397 = vadd.f32 0.0, %v2396
        %v2398 = vpop.f32.mrb[0].mxu0
        %2399 = vmatprep.mubr.f32.mxu0 0.0
        %2400 = vmatmul.mubr.f32.gmra.mrb[0].mxu0 %v597
        %v2401 = vpop.f32.mrb[0].mxu0
        %v2402 = vadd.f32 0.0, %v2401
        %v2403 = vpop.f32.mrb[0].mxu0
        %2404 = vdwg.mxu0
        %2405 = vmatprep.subr.mxu0 0.0
        %2406 = vmatpush1.msra.mxu0 %v572
        %2407 = vmatprep.subr.mxu0 0.0
        %2408 = vmatpush1.msra.mxu0 %v573
        %2409 = vmatprep.subr.mxu0 0.0
        %2410 = vmatpush1.msra.mxu0 0.0
        %2411 = vmatprep.subr.mxu0 0.0
        %2412 = vmatpush1.msra.mxu0 0.0
        %2413 = vmatprep.subr.mxu0 0.0
        %2414 = vmatpush1.msra.mxu0 0.0
        %2415 = vmatprep.subr.mxu0 0.0
        %2416 = vmatpush1.msra.mxu0 0.0
        %2417 = vmatprep.subr.mxu0 0.0
        %2418 = vmatpush1.msra.mxu0 0.0
        %2419 = vmatprep.subr.mxu0 0.0
        %2420 = vmatpush1.msra.mxu0 0.0
        %2421 = vmatprep.subr.mxu0 0.0
        %2422 = vmatpush1.msra.mxu0 0.0
        %2423 = vmatprep.subr.mxu0 0.0
        %2424 = vmatpush1.msra.mxu0 0.0
        %2425 = vmatprep.subr.mxu0 0.0
        %2426 = vmatpush1.msra.mxu0 0.0
        %2427 = vmatprep.subr.mxu0 0.0
        %2428 = vmatpush1.msra.mxu0 0.0
        %2429 = vmatprep.subr.mxu0 0.0
        %2430 = vmatpush1.msra.mxu0 0.0
        %2431 = vmatprep.subr.mxu0 0.0
        %2432 = vmatpush1.msra.mxu0 0.0
        %2433 = vmatprep.subr.mxu0 0.0
        %2434 = vmatpush1.msra.mxu0 0.0
        %2435 = vmatprep.subr.mxu0 0.0
        %2436 = vmatpush1.msra.mxu0 0.0
        %2437 = vmatprep.subr.mxu0 0.0
        %2438 = vmatpush1.msra.mxu0 0.0
        %2439 = vmatprep.subr.mxu0 0.0
        %2440 = vmatpush1.msra.mxu0 0.0
        %2441 = vmatprep.subr.mxu0 0.0
        %2442 = vmatpush1.msra.mxu0 0.0
        %2443 = vmatprep.subr.mxu0 0.0
        %2444 = vmatpush1.msra.mxu0 0.0
        %2445 = vmatprep.subr.mxu0 0.0
        %2446 = vmatpush1.msra.mxu0 0.0
        %2447 = vmatprep.subr.mxu0 0.0
        %2448 = vmatpush1.msra.mxu0 0.0
        %2449 = vmatprep.subr.mxu0 0.0
        %2450 = vmatpush1.msra.mxu0 0.0
        %2451 = vmatprep.subr.mxu0 0.0
        %2452 = vmatpush1.msra.mxu0 0.0
        %2453 = vmatprep.subr.mxu0 0.0
        %2454 = vmatpush1.msra.mxu0 0.0
        %2455 = vmatprep.subr.mxu0 0.0
        %2456 = vmatpush1.msra.mxu0 0.0
        %2457 = vmatprep.subr.mxu0 0.0
        %2458 = vmatpush1.msra.mxu0 0.0
        %2459 = vmatprep.subr.mxu0 0.0
        %2460 = vmatpush1.msra.mxu0 0.0
        %2461 = vmatprep.subr.mxu0 0.0
        %2462 = vmatpush1.msra.mxu0 0.0
        %2463 = vmatprep.subr.mxu0 0.0
        %2464 = vmatpush1.msra.mxu0 0.0
        %2465 = vmatprep.subr.mxu0 0.0
        %2466 = vmatpush1.msra.mxu0 0.0
        %2467 = vmatprep.subr.mxu0 0.0
        %2468 = vmatpush1.msra.mxu0 0.0
        %2469 = vmatprep.mubr.f32.mxu0 0.0
        %2470 = vmatmul.mubr.f32.gmra.mrb[0].mxu0 %v1200
        %v2471 = vpop.f32.mrb[0].mxu0
        %v2472 = vadd.f32 0.0, %v2471
        %v2473 = vpop.f32.mrb[0].mxu0
        %2474 = vmatprep.mubr.f32.mxu0 0.0
        %2475 = vmatmul.mubr.f32.gmra.mrb[0].mxu0 %v1203
        %v2476 = vpop.f32.mrb[0].mxu0
        %v2477 = vadd.f32 0.0, %v2476
        %v2478 = vpop.f32.mrb[0].mxu0
        %2479 = vdwg.mxu0
        %2480 = vmatprep.subr.mxu0 0.0
        %2481 = vmatpush1.msra.mxu0 %v574
        %2482 = vmatprep.subr.mxu0 0.0
        %2483 = vmatpush1.msra.mxu0 %v575
        %2484 = vmatprep.subr.mxu0 0.0
        %2485 = vmatpush1.msra.mxu0 0.0
        %2486 = vmatprep.subr.mxu0 0.0
        %2487 = vmatpush1.msra.mxu0 0.0
        %2488 = vmatprep.subr.mxu0 0.0
        %2489 = vmatpush1.msra.mxu0 0.0
        %2490 = vmatprep.subr.mxu0 0.0
        %2491 = vmatpush1.msra.mxu0 0.0
        %2492 = vmatprep.subr.mxu0 0.0
        %2493 = vmatpush1.msra.mxu0 0.0
        %2494 = vmatprep.subr.mxu0 0.0
        %2495 = vmatpush1.msra.mxu0 0.0
        %2496 = vmatprep.subr.mxu0 0.0
        %2497 = vmatpush1.msra.mxu0 0.0
        %2498 = vmatprep.subr.mxu0 0.0
        %2499 = vmatpush1.msra.mxu0 0.0
        %2500 = vmatprep.subr.mxu0 0.0
        %2501 = vmatpush1.msra.mxu0 0.0
        %2502 = vmatprep.subr.mxu0 0.0
        %2503 = vmatpush1.msra.mxu0 0.0
        %2504 = vmatprep.subr.mxu0 0.0
        %2505 = vmatpush1.msra.mxu0 0.0
        %2506 = vmatprep.subr.mxu0 0.0
        %2507 = vmatpush1.msra.mxu0 0.0
        %2508 = vmatprep.subr.mxu0 0.0
        %2509 = vmatpush1.msra.mxu0 0.0
        %2510 = vmatprep.subr.mxu0 0.0
        %2511 = vmatpush1.msra.mxu0 0.0
        %2512 = vmatprep.subr.mxu0 0.0
        %2513 = vmatpush1.msra.mxu0 0.0
        %2514 = vmatprep.subr.mxu0 0.0
        %2515 = vmatpush1.msra.mxu0 0.0
        %2516 = vmatprep.subr.mxu0 0.0
        %2517 = vmatpush1.msra.mxu0 0.0
        %2518 = vmatprep.subr.mxu0 0.0
        %2519 = vmatpush1.msra.mxu0 0.0
        %2520 = vmatprep.subr.mxu0 0.0
        %2521 = vmatpush1.msra.mxu0 0.0
        %2522 = vmatprep.subr.mxu0 0.0
        %2523 = vmatpush1.msra.mxu0 0.0
        %2524 = vmatprep.subr.mxu0 0.0
        %2525 = vmatpush1.msra.mxu0 0.0
        %2526 = vmatprep.subr.mxu0 0.0
        %2527 = vmatpush1.msra.mxu0 0.0
        %2528 = vmatprep.subr.mxu0 0.0
        %2529 = vmatpush1.msra.mxu0 0.0
        %2530 = vmatprep.subr.mxu0 0.0
        %2531 = vmatpush1.msra.mxu0 0.0
        %2532 = vmatprep.subr.mxu0 0.0
        %2533 = vmatpush1.msra.mxu0 0.0
        %2534 = vmatprep.subr.mxu0 0.0
        %2535 = vmatpush1.msra.mxu0 0.0
        %2536 = vmatprep.subr.mxu0 0.0
        %2537 = vmatpush1.msra.mxu0 0.0
        %2538 = vmatprep.subr.mxu0 0.0
        %2539 = vmatpush1.msra.mxu0 0.0
        %2540 = vmatprep.subr.mxu0 0.0
        %2541 = vmatpush1.msra.mxu0 0.0
        %2542 = vmatprep.subr.mxu0 0.0
        %2543 = vmatpush1.msra.mxu0 0.0
        %2544 = vmatprep.mubr.f32.mxu0 0.0
        %2545 = vmatmul.mubr.f32.gmra.mrb[0].mxu0 %v1200
        %v2546 = vpop.f32.mrb[0].mxu0
        %v2547 = vadd.f32 0.0, %v2546
        %v2548 = vpop.f32.mrb[0].mxu0
        %2549 = vmatprep.mubr.f32.mxu0 0.0
        %2550 = vmatmul.mubr.f32.gmra.mrb[0].mxu0 %v1203
        %v2551 = vpop.f32.mrb[0].mxu0
        %v2552 = vadd.f32 0.0, %v2551
        %v2553 = vpop.f32.mrb[0].mxu0
        %2554 = vdwg.mxu0
        %2555 = vmatprep.subr.mxu0 0.0
        %2556 = vmatpush1.msra.mxu0 %v576
        %2557 = vmatprep.subr.mxu0 0.0
        %2558 = vmatpush1.msra.mxu0 %v577
        %2559 = vmatprep.subr.mxu0 0.0
        %2560 = vmatpush1.msra.mxu0 0.0
        %2561 = vmatprep.subr.mxu0 0.0
        %2562 = vmatpush1.msra.mxu0 0.0
        %2563 = vmatprep.subr.mxu0 0.0
        %2564 = vmatpush1.msra.mxu0 0.0
        %2565 = vmatprep.subr.mxu0 0.0
        %2566 = vmatpush1.msra.mxu0 0.0
        %2567 = vmatprep.subr.mxu0 0.0
        %2568 = vmatpush1.msra.mxu0 0.0
        %2569 = vmatprep.subr.mxu0 0.0
        %2570 = vmatpush1.msra.mxu0 0.0
        %2571 = vmatprep.subr.mxu0 0.0
        %2572 = vmatpush1.msra.mxu0 0.0
        %2573 = vmatprep.subr.mxu0 0.0
        %2574 = vmatpush1.msra.mxu0 0.0
        %2575 = vmatprep.subr.mxu0 0.0
        %2576 = vmatpush1.msra.mxu0 0.0
        %2577 = vmatprep.subr.mxu0 0.0
        %2578 = vmatpush1.msra.mxu0 0.0
        %2579 = vmatprep.subr.mxu0 0.0
        %2580 = vmatpush1.msra.mxu0 0.0
        %2581 = vmatprep.subr.mxu0 0.0
        %2582 = vmatpush1.msra.mxu0 0.0
        %2583 = vmatprep.subr.mxu0 0.0
        %2584 = vmatpush1.msra.mxu0 0.0
        %2585 = vmatprep.subr.mxu0 0.0
        %2586 = vmatpush1.msra.mxu0 0.0
        %2587 = vmatprep.subr.mxu0 0.0
        %2588 = vmatpush1.msra.mxu0 0.0
        %2589 = vmatprep.subr.mxu0 0.0
        %2590 = vmatpush1.msra.mxu0 0.0
        %2591 = vmatprep.subr.mxu0 0.0
        %2592 = vmatpush1.msra.mxu0 0.0
        %2593 = vmatprep.subr.mxu0 0.0
        %2594 = vmatpush1.msra.mxu0 0.0
        %2595 = vmatprep.subr.mxu0 0.0
        %2596 = vmatpush1.msra.mxu0 0.0
        %2597 = vmatprep.subr.mxu0 0.0
        %2598 = vmatpush1.msra.mxu0 0.0
        %2599 = vmatprep.subr.mxu0 0.0
        %2600 = vmatpush1.msra.mxu0 0.0
        %2601 = vmatprep.subr.mxu0 0.0
        %2602 = vmatpush1.msra.mxu0 0.0
        %2603 = vmatprep.subr.mxu0 0.0
        %2604 = vmatpush1.msra.mxu0 0.0
        %2605 = vmatprep.subr.mxu0 0.0
        %2606 = vmatpush1.msra.mxu0 0.0
        %2607 = vmatprep.subr.mxu0 0.0
        %2608 = vmatpush1.msra.mxu0 0.0
        %2609 = vmatprep.subr.mxu0 0.0
        %2610 = vmatpush1.msra.mxu0 0.0
        %2611 = vmatprep.subr.mxu0 0.0
        %2612 = vmatpush1.msra.mxu0 0.0
        %2613 = vmatprep.subr.mxu0 0.0
        %2614 = vmatpush1.msra.mxu0 0.0
        %2615 = vmatprep.subr.mxu0 0.0
        %2616 = vmatpush1.msra.mxu0 0.0
        %2617 = vmatprep.subr.mxu0 0.0
        %2618 = vmatpush1.msra.mxu0 0.0
        %2619 = vmatprep.mubr.f32.mxu0 0.0
        %2620 = vmatmul.mubr.f32.gmra.mrb[0].mxu0 %v1200
        %v2621 = vpop.f32.mrb[0].mxu0
        %v2622 = vadd.f32 0.0, %v2621
        %v2623 = vpop.f32.mrb[0].mxu0
        %2624 = vmatprep.mubr.f32.mxu0 0.0
        %2625 = vmatmul.mubr.f32.gmra.mrb[0].mxu0 %v1203
        %v2626 = vpop.f32.mrb[0].mxu0
        %v2627 = vadd.f32 0.0, %v2626
        %v2628 = vpop.f32.mrb[0].mxu0
        %2629 = vdwg.mxu0
        %2630 = vmatprep.subr.mxu0 0.0
        %2631 = vmatpush1.msra.mxu0 %v578
        %2632 = vmatprep.subr.mxu0 0.0
        %2633 = vmatpush1.msra.mxu0 %v579
        %2634 = vmatprep.subr.mxu0 0.0
        %2635 = vmatpush1.msra.mxu0 0.0
        %2636 = vmatprep.subr.mxu0 0.0
        %2637 = vmatpush1.msra.mxu0 0.0
        %2638 = vmatprep.subr.mxu0 0.0
        %2639 = vmatpush1.msra.mxu0 0.0
        %2640 = vmatprep.subr.mxu0 0.0
        %2641 = vmatpush1.msra.mxu0 0.0
        %2642 = vmatprep.subr.mxu0 0.0
        %2643 = vmatpush1.msra.mxu0 0.0
        %2644 = vmatprep.subr.mxu0 0.0
        %2645 = vmatpush1.msra.mxu0 0.0
        %2646 = vmatprep.subr.mxu0 0.0
        %2647 = vmatpush1.msra.mxu0 0.0
        %2648 = vmatprep.subr.mxu0 0.0
        %2649 = vmatpush1.msra.mxu0 0.0
        %2650 = vmatprep.subr.mxu0 0.0
        %2651 = vmatpush1.msra.mxu0 0.0
        %2652 = vmatprep.subr.mxu0 0.0
        %2653 = vmatpush1.msra.mxu0 0.0
        %2654 = vmatprep.subr.mxu0 0.0
        %2655 = vmatpush1.msra.mxu0 0.0
        %2656 = vmatprep.subr.mxu0 0.0
        %2657 = vmatpush1.msra.mxu0 0.0
        %2658 = vmatprep.subr.mxu0 0.0
        %2659 = vmatpush1.msra.mxu0 0.0
        %2660 = vmatprep.subr.mxu0 0.0
        %2661 = vmatpush1.msra.mxu0 0.0
        %2662 = vmatprep.subr.mxu0 0.0
        %2663 = vmatpush1.msra.mxu0 0.0
        %2664 = vmatprep.subr.mxu0 0.0
        %2665 = vmatpush1.msra.mxu0 0.0
        %2666 = vmatprep.subr.mxu0 0.0
        %2667 = vmatpush1.msra.mxu0 0.0
        %2668 = vmatprep.subr.mxu0 0.0
        %2669 = vmatpush1.msra.mxu0 0.0
        %2670 = vmatprep.subr.mxu0 0.0
        %2671 = vmatpush1.msra.mxu0 0.0
        %2672 = vmatprep.subr.mxu0 0.0
        %2673 = vmatpush1.msra.mxu0 0.0
        %2674 = vmatprep.subr.mxu0 0.0
        %2675 = vmatpush1.msra.mxu0 0.0
        %2676 = vmatprep.subr.mxu0 0.0
        %2677 = vmatpush1.msra.mxu0 0.0
        %2678 = vmatprep.subr.mxu0 0.0
        %2679 = vmatpush1.msra.mxu0 0.0
        %2680 = vmatprep.subr.mxu0 0.0
        %2681 = vmatpush1.msra.mxu0 0.0
        %2682 = vmatprep.subr.mxu0 0.0
        %2683 = vmatpush1.msra.mxu0 0.0
        %2684 = vmatprep.subr.mxu0 0.0
        %2685 = vmatpush1.msra.mxu0 0.0
        %2686 = vmatprep.subr.mxu0 0.0
        %2687 = vmatpush1.msra.mxu0 0.0
        %2688 = vmatprep.subr.mxu0 0.0
        %2689 = vmatpush1.msra.mxu0 0.0
        %2690 = vmatprep.subr.mxu0 0.0
        %2691 = vmatpush1.msra.mxu0 0.0
        %2692 = vmatprep.subr.mxu0 0.0
        %2693 = vmatpush1.msra.mxu0 0.0
        %2694 = vmatprep.mubr.f32.mxu0 0.0
        %2695 = vmatmul.mubr.f32.gmra.mrb[0].mxu0 %v1200
        %v2696 = vpop.f32.mrb[0].mxu0
        %v2697 = vadd.f32 0.0, %v2696
        %v2698 = vpop.f32.mrb[0].mxu0
        %2699 = vmatprep.mubr.f32.mxu0 0.0
        %2700 = vmatmul.mubr.f32.gmra.mrb[0].mxu0 %v1203
        %v2701 = vpop.f32.mrb[0].mxu0
        %v2702 = vadd.f32 0.0, %v2701
        %v2703 = vpop.f32.mrb[0].mxu0
        %2704 = vdwg.mxu0
        %2705 = vmatprep.subr.mxu0 0.0
        %2706 = vmatpush1.msra.mxu0 %v580
        %2707 = vmatprep.subr.mxu0 0.0
        %2708 = vmatpush1.msra.mxu0 %v581
        %2709 = vmatprep.subr.mxu0 0.0
        %2710 = vmatpush1.msra.mxu0 0.0
        %2711 = vmatprep.subr.mxu0 0.0
        %2712 = vmatpush1.msra.mxu0 0.0
        %2713 = vmatprep.subr.mxu0 0.0
        %2714 = vmatpush1.msra.mxu0 0.0
        %2715 = vmatprep.subr.mxu0 0.0
        %2716 = vmatpush1.msra.mxu0 0.0
        %2717 = vmatprep.subr.mxu0 0.0
        %2718 = vmatpush1.msra.mxu0 0.0
        %2719 = vmatprep.subr.mxu0 0.0
        %2720 = vmatpush1.msra.mxu0 0.0
        %2721 = vmatprep.subr.mxu0 0.0
        %2722 = vmatpush1.msra.mxu0 0.0
        %2723 = vmatprep.subr.mxu0 0.0
        %2724 = vmatpush1.msra.mxu0 0.0
        %2725 = vmatprep.subr.mxu0 0.0
        %2726 = vmatpush1.msra.mxu0 0.0
        %2727 = vmatprep.subr.mxu0 0.0
        %2728 = vmatpush1.msra.mxu0 0.0
        %2729 = vmatprep.subr.mxu0 0.0
        %2730 = vmatpush1.msra.mxu0 0.0
        %2731 = vmatprep.subr.mxu0 0.0
        %2732 = vmatpush1.msra.mxu0 0.0
        %2733 = vmatprep.subr.mxu0 0.0
        %2734 = vmatpush1.msra.mxu0 0.0
        %2735 = vmatprep.subr.mxu0 0.0
        %2736 = vmatpush1.msra.mxu0 0.0
        %2737 = vmatprep.subr.mxu0 0.0
        %2738 = vmatpush1.msra.mxu0 0.0
        %2739 = vmatprep.subr.mxu0 0.0
        %2740 = vmatpush1.msra.mxu0 0.0
        %2741 = vmatprep.subr.mxu0 0.0
        %2742 = vmatpush1.msra.mxu0 0.0
        %2743 = vmatprep.subr.mxu0 0.0
        %2744 = vmatpush1.msra.mxu0 0.0
        %2745 = vmatprep.subr.mxu0 0.0
        %2746 = vmatpush1.msra.mxu0 0.0
        %2747 = vmatprep.subr.mxu0 0.0
        %2748 = vmatpush1.msra.mxu0 0.0
        %2749 = vmatprep.subr.mxu0 0.0
        %2750 = vmatpush1.msra.mxu0 0.0
        %2751 = vmatprep.subr.mxu0 0.0
        %2752 = vmatpush1.msra.mxu0 0.0
        %2753 = vmatprep.subr.mxu0 0.0
        %2754 = vmatpush1.msra.mxu0 0.0
        %2755 = vmatprep.subr.mxu0 0.0
        %2756 = vmatpush1.msra.mxu0 0.0
        %2757 = vmatprep.subr.mxu0 0.0
        %2758 = vmatpush1.msra.mxu0 0.0
        %2759 = vmatprep.subr.mxu0 0.0
        %2760 = vmatpush1.msra.mxu0 0.0
        %2761 = vmatprep.subr.mxu0 0.0
        %2762 = vmatpush1.msra.mxu0 0.0
        %2763 = vmatprep.subr.mxu0 0.0
        %2764 = vmatpush1.msra.mxu0 0.0
        %2765 = vmatprep.subr.mxu0 0.0
        %2766 = vmatpush1.msra.mxu0 0.0
        %2767 = vmatprep.subr.mxu0 0.0
        %2768 = vmatpush1.msra.mxu0 0.0
        %2769 = vmatprep.mubr.f32.mxu0 0.0
        %2770 = vmatmul.mubr.f32.gmra.mrb[0].mxu0 %v1200
        %v2771 = vpop.f32.mrb[0].mxu0
        %v2772 = vadd.f32 0.0, %v2771
        %v2773 = vpop.f32.mrb[0].mxu0
        %2774 = vmatprep.mubr.f32.mxu0 0.0
        %2775 = vmatmul.mubr.f32.gmra.mrb[0].mxu0 %v1203
        %v2776 = vpop.f32.mrb[0].mxu0
        %v2777 = vadd.f32 0.0, %v2776
        %v2778 = vpop.f32.mrb[0].mxu0
        %2779 = vdwg.mxu0
        %2780 = vmatprep.subr.mxu0 0.0
        %2781 = vmatpush1.msra.mxu0 %v582
        %2782 = vmatprep.subr.mxu0 0.0
        %2783 = vmatpush1.msra.mxu0 %v583
        %2784 = vmatprep.subr.mxu0 0.0
        %2785 = vmatpush1.msra.mxu0 0.0
        %2786 = vmatprep.subr.mxu0 0.0
        %2787 = vmatpush1.msra.mxu0 0.0
        %2788 = vmatprep.subr.mxu0 0.0
        %2789 = vmatpush1.msra.mxu0 0.0
        %2790 = vmatprep.subr.mxu0 0.0
        %2791 = vmatpush1.msra.mxu0 0.0
        %2792 = vmatprep.subr.mxu0 0.0
        %2793 = vmatpush1.msra.mxu0 0.0
        %2794 = vmatprep.subr.mxu0 0.0
        %2795 = vmatpush1.msra.mxu0 0.0
        %2796 = vmatprep.subr.mxu0 0.0
        %2797 = vmatpush1.msra.mxu0 0.0
        %2798 = vmatprep.subr.mxu0 0.0
        %2799 = vmatpush1.msra.mxu0 0.0
        %2800 = vmatprep.subr.mxu0 0.0
        %2801 = vmatpush1.msra.mxu0 0.0
        %2802 = vmatprep.subr.mxu0 0.0
        %2803 = vmatpush1.msra.mxu0 0.0
        %2804 = vmatprep.subr.mxu0 0.0
        %2805 = vmatpush1.msra.mxu0 0.0
        %2806 = vmatprep.subr.mxu0 0.0
        %2807 = vmatpush1.msra.mxu0 0.0
        %2808 = vmatprep.subr.mxu0 0.0
        %2809 = vmatpush1.msra.mxu0 0.0
        %2810 = vmatprep.subr.mxu0 0.0
        %2811 = vmatpush1.msra.mxu0 0.0
        %2812 = vmatprep.subr.mxu0 0.0
        %2813 = vmatpush1.msra.mxu0 0.0
        %2814 = vmatprep.subr.mxu0 0.0
        %2815 = vmatpush1.msra.mxu0 0.0
        %2816 = vmatprep.subr.mxu0 0.0
        %2817 = vmatpush1.msra.mxu0 0.0
        %2818 = vmatprep.subr.mxu0 0.0
        %2819 = vmatpush1.msra.mxu0 0.0
        %2820 = vmatprep.subr.mxu0 0.0
        %2821 = vmatpush1.msra.mxu0 0.0
        %2822 = vmatprep.subr.mxu0 0.0
        %2823 = vmatpush1.msra.mxu0 0.0
        %2824 = vmatprep.subr.mxu0 0.0
        %2825 = vmatpush1.msra.mxu0 0.0
        %2826 = vmatprep.subr.mxu0 0.0
        %2827 = vmatpush1.msra.mxu0 0.0
        %2828 = vmatprep.subr.mxu0 0.0
        %2829 = vmatpush1.msra.mxu0 0.0
        %2830 = vmatprep.subr.mxu0 0.0
        %2831 = vmatpush1.msra.mxu0 0.0
        %2832 = vmatprep.subr.mxu0 0.0
        %2833 = vmatpush1.msra.mxu0 0.0
        %2834 = vmatprep.subr.mxu0 0.0
        %2835 = vmatpush1.msra.mxu0 0.0
        %2836 = vmatprep.subr.mxu0 0.0
        %2837 = vmatpush1.msra.mxu0 0.0
        %2838 = vmatprep.subr.mxu0 0.0
        %2839 = vmatpush1.msra.mxu0 0.0
        %2840 = vmatprep.subr.mxu0 0.0
        %2841 = vmatpush1.msra.mxu0 0.0
        %2842 = vmatprep.subr.mxu0 0.0
        %2843 = vmatpush1.msra.mxu0 0.0
        %2844 = vmatprep.mubr.f32.mxu0 0.0
        %2845 = vmatmul.mubr.f32.gmra.mrb[0].mxu0 %v1200
        %v2846 = vpop.f32.mrb[0].mxu0
        %v2847 = vadd.f32 0.0, %v2846
        %v2848 = vpop.f32.mrb[0].mxu0
        %2849 = vmatprep.mubr.f32.mxu0 0.0
        %2850 = vmatmul.mubr.f32.gmra.mrb[0].mxu0 %v1203
        %v2851 = vpop.f32.mrb[0].mxu0
        %v2852 = vadd.f32 0.0, %v2851
        %v2853 = vpop.f32.mrb[0].mxu0
        %2854 = vdwg.mxu0
        %2855 = vmatprep.subr.mxu0 0.0
        %2856 = vmatpush1.msra.mxu0 %v584
        %2857 = vmatprep.subr.mxu0 0.0
        %2858 = vmatpush1.msra.mxu0 %v585
        %2859 = vmatprep.subr.mxu0 0.0
        %2860 = vmatpush1.msra.mxu0 0.0
        %2861 = vmatprep.subr.mxu0 0.0
        %2862 = vmatpush1.msra.mxu0 0.0
        %2863 = vmatprep.subr.mxu0 0.0
        %2864 = vmatpush1.msra.mxu0 0.0
        %2865 = vmatprep.subr.mxu0 0.0
        %2866 = vmatpush1.msra.mxu0 0.0
        %2867 = vmatprep.subr.mxu0 0.0
        %2868 = vmatpush1.msra.mxu0 0.0
        %2869 = vmatprep.subr.mxu0 0.0
        %2870 = vmatpush1.msra.mxu0 0.0
        %2871 = vmatprep.subr.mxu0 0.0
        %2872 = vmatpush1.msra.mxu0 0.0
        %2873 = vmatprep.subr.mxu0 0.0
        %2874 = vmatpush1.msra.mxu0 0.0
        %2875 = vmatprep.subr.mxu0 0.0
        %2876 = vmatpush1.msra.mxu0 0.0
        %2877 = vmatprep.subr.mxu0 0.0
        %2878 = vmatpush1.msra.mxu0 0.0
        %2879 = vmatprep.subr.mxu0 0.0
        %2880 = vmatpush1.msra.mxu0 0.0
        %2881 = vmatprep.subr.mxu0 0.0
        %2882 = vmatpush1.msra.mxu0 0.0
        %2883 = vmatprep.subr.mxu0 0.0
        %2884 = vmatpush1.msra.mxu0 0.0
        %2885 = vmatprep.subr.mxu0 0.0
        %2886 = vmatpush1.msra.mxu0 0.0
        %2887 = vmatprep.subr.mxu0 0.0
        %2888 = vmatpush1.msra.mxu0 0.0
        %2889 = vmatprep.subr.mxu0 0.0
        %2890 = vmatpush1.msra.mxu0 0.0
        %2891 = vmatprep.subr.mxu0 0.0
        %2892 = vmatpush1.msra.mxu0 0.0
        %2893 = vmatprep.subr.mxu0 0.0
        %2894 = vmatpush1.msra.mxu0 0.0
        %2895 = vmatprep.subr.mxu0 0.0
        %2896 = vmatpush1.msra.mxu0 0.0
        %2897 = vmatprep.subr.mxu0 0.0
        %2898 = vmatpush1.msra.mxu0 0.0
        %2899 = vmatprep.subr.mxu0 0.0
        %2900 = vmatpush1.msra.mxu0 0.0
        %2901 = vmatprep.subr.mxu0 0.0
        %2902 = vmatpush1.msra.mxu0 0.0
        %2903 = vmatprep.subr.mxu0 0.0
        %2904 = vmatpush1.msra.mxu0 0.0
        %2905 = vmatprep.subr.mxu0 0.0
        %2906 = vmatpush1.msra.mxu0 0.0
        %2907 = vmatprep.subr.mxu0 0.0
        %2908 = vmatpush1.msra.mxu0 0.0
        %2909 = vmatprep.subr.mxu0 0.0
        %2910 = vmatpush1.msra.mxu0 0.0
        %2911 = vmatprep.subr.mxu0 0.0
        %2912 = vmatpush1.msra.mxu0 0.0
        %2913 = vmatprep.subr.mxu0 0.0
        %2914 = vmatpush1.msra.mxu0 0.0
        %2915 = vmatprep.subr.mxu0 0.0
        %2916 = vmatpush1.msra.mxu0 0.0
        %2917 = vmatprep.subr.mxu0 0.0
        %2918 = vmatpush1.msra.mxu0 0.0
        %2919 = vmatprep.mubr.f32.mxu0 0.0
        %2920 = vmatmul.mubr.f32.gmra.mrb[0].mxu0 %v1200
        %v2921 = vpop.f32.mrb[0].mxu0
        %v2922 = vadd.f32 0.0, %v2921
        %v2923 = vpop.f32.mrb[0].mxu0
        %2924 = vmatprep.mubr.f32.mxu0 0.0
        %2925 = vmatmul.mubr.f32.gmra.mrb[0].mxu0 %v1203
        %v2926 = vpop.f32.mrb[0].mxu0
        %v2927 = vadd.f32 0.0, %v2926
        %v2928 = vpop.f32.mrb[0].mxu0
        %2929 = vdwg.mxu0
        %2930 = vmatprep.subr.mxu0 0.0
        %2931 = vmatpush1.msra.mxu0 %v586
        %2932 = vmatprep.subr.mxu0 0.0
        %2933 = vmatpush1.msra.mxu0 %v587
        %2934 = vmatprep.subr.mxu0 0.0
        %2935 = vmatpush1.msra.mxu0 0.0
        %2936 = vmatprep.subr.mxu0 0.0
        %2937 = vmatpush1.msra.mxu0 0.0
        %2938 = vmatprep.subr.mxu0 0.0
        %2939 = vmatpush1.msra.mxu0 0.0
        %2940 = vmatprep.subr.mxu0 0.0
        %2941 = vmatpush1.msra.mxu0 0.0
        %2942 = vmatprep.subr.mxu0 0.0
        %2943 = vmatpush1.msra.mxu0 0.0
        %2944 = vmatprep.subr.mxu0 0.0
        %2945 = vmatpush1.msra.mxu0 0.0
        %2946 = vmatprep.subr.mxu0 0.0
        %2947 = vmatpush1.msra.mxu0 0.0
        %2948 = vmatprep.subr.mxu0 0.0
        %2949 = vmatpush1.msra.mxu0 0.0
        %2950 = vmatprep.subr.mxu0 0.0
        %2951 = vmatpush1.msra.mxu0 0.0
        %2952 = vmatprep.subr.mxu0 0.0
        %2953 = vmatpush1.msra.mxu0 0.0
        %2954 = vmatprep.subr.mxu0 0.0
        %2955 = vmatpush1.msra.mxu0 0.0
        %2956 = vmatprep.subr.mxu0 0.0
        %2957 = vmatpush1.msra.mxu0 0.0
        %2958 = vmatprep.subr.mxu0 0.0
        %2959 = vmatpush1.msra.mxu0 0.0
        %2960 = vmatprep.subr.mxu0 0.0
        %2961 = vmatpush1.msra.mxu0 0.0
        %2962 = vmatprep.subr.mxu0 0.0
        %2963 = vmatpush1.msra.mxu0 0.0
        %2964 = vmatprep.subr.mxu0 0.0
        %2965 = vmatpush1.msra.mxu0 0.0
        %2966 = vmatprep.subr.mxu0 0.0
        %2967 = vmatpush1.msra.mxu0 0.0
        %2968 = vmatprep.subr.mxu0 0.0
        %2969 = vmatpush1.msra.mxu0 0.0
        %2970 = vmatprep.subr.mxu0 0.0
        %2971 = vmatpush1.msra.mxu0 0.0
        %2972 = vmatprep.subr.mxu0 0.0
        %2973 = vmatpush1.msra.mxu0 0.0
        %2974 = vmatprep.subr.mxu0 0.0
        %2975 = vmatpush1.msra.mxu0 0.0
        %2976 = vmatprep.subr.mxu0 0.0
        %2977 = vmatpush1.msra.mxu0 0.0
        %2978 = vmatprep.subr.mxu0 0.0
        %2979 = vmatpush1.msra.mxu0 0.0
        %2980 = vmatprep.subr.mxu0 0.0
        %2981 = vmatpush1.msra.mxu0 0.0
        %2982 = vmatprep.subr.mxu0 0.0
        %2983 = vmatpush1.msra.mxu0 0.0
        %2984 = vmatprep.subr.mxu0 0.0
        %2985 = vmatpush1.msra.mxu0 0.0
        %2986 = vmatprep.subr.mxu0 0.0
        %2987 = vmatpush1.msra.mxu0 0.0
        %2988 = vmatprep.subr.mxu0 0.0
        %2989 = vmatpush1.msra.mxu0 0.0
        %2990 = vmatprep.subr.mxu0 0.0
        %2991 = vmatpush1.msra.mxu0 0.0
        %2992 = vmatprep.subr.mxu0 0.0
        %2993 = vmatpush1.msra.mxu0 0.0
        %2994 = vmatprep.mubr.f32.mxu0 0.0
        %2995 = vmatmul.mubr.f32.gmra.mrb[0].mxu0 %v1200
        %v2996 = vpop.f32.mrb[0].mxu0
        %v2997 = vadd.f32 0.0, %v2996
        %v2998 = vpop.f32.mrb[0].mxu0
        %2999 = vmatprep.mubr.f32.mxu0 0.0
        %3000 = vmatmul.mubr.f32.gmra.mrb[0].mxu0 %v1203
        %v3001 = vpop.f32.mrb[0].mxu0
        %v3002 = vadd.f32 0.0, %v3001
        %v3003 = vpop.f32.mrb[0].mxu0
        %3004 = vdwg.mxu0
        %v3005 = vmul.f32 %v1872, %v1872
        %v3006 = vmul.f32 %v1877, %v1877
        %v3007 = vmul.f32 %v1947, %v1947
        %v3008 = vmul.f32 %v1952, %v1952
        %v3009 = vmul.f32 %v2022, %v2022
        %v3010 = vmul.f32 %v2027, %v2027
        %v3011 = vmul.f32 %v2097, %v2097
        %v3012 = vmul.f32 %v2102, %v2102
        %v3013 = vmul.f32 %v2172, %v2172
        %v3014 = vmul.f32 %v2177, %v2177
        %v3015 = vmul.f32 %v2247, %v2247
        %v3016 = vmul.f32 %v2252, %v2252
        %v3017 = vmul.f32 %v2322, %v2322
        %v3018 = vmul.f32 %v2327, %v2327
        %v3019 = vmul.f32 %v2397, %v2397
        %v3020 = vmul.f32 %v2402, %v2402
        %v3021 = vmul.f32 %v2472, %v2472
        %v3022 = vmul.f32 %v2477, %v2477
        %v3023 = vmul.f32 %v2547, %v2547
        %v3024 = vmul.f32 %v2552, %v2552
        %v3025 = vmul.f32 %v2622, %v2622
        %v3026 = vmul.f32 %v2627, %v2627
        %v3027 = vmul.f32 %v2697, %v2697
        %v3028 = vmul.f32 %v2702, %v2702
        %v3029 = vmul.f32 %v2772, %v2772
        %v3030 = vmul.f32 %v2777, %v2777
        %v3031 = vmul.f32 %v2847, %v2847
        %v3032 = vmul.f32 %v2852, %v2852
        %v3033 = vmul.f32 %v2922, %v2922
        %v3034 = vmul.f32 %v2927, %v2927
        %v3035 = vmul.f32 %v2997, %v2997
        %v3036 = vmul.f32 %v3002, %v3002
        %v3037 = vadd.f32 %v3005, %v3021
        %v3038 = vadd.f32 %v3006, %v3022
        %v3039 = vadd.f32 %v3007, %v3023
        %v3040 = vadd.f32 %v3008, %v3024
        %v3041 = vadd.f32 %v3009, %v3025
        %v3042 = vadd.f32 %v3010, %v3026
        %v3043 = vadd.f32 %v3011, %v3027
        %v3044 = vadd.f32 %v3012, %v3028
        %v3045 = vadd.f32 %v3013, %v3029
        %v3046 = vadd.f32 %v3014, %v3030
        %v3047 = vadd.f32 %v3015, %v3031
        %v3048 = vadd.f32 %v3016, %v3032
        %v3049 = vadd.f32 %v3017, %v3033
        %v3050 = vadd.f32 %v3018, %v3034
        %v3051 = vadd.f32 %v3019, %v3035
        %v3052 = vadd.f32 %v3020, %v3036
        %v3053 = vmax.f32 %v3037, 1e-10
        %v3054 = vmax.f32 %v3038, 1e-10
        %v3055 = vmax.f32 %v3039, 1e-10
        %v3056 = vmax.f32 %v3040, 1e-10
        %v3057 = vmax.f32 %v3041, 1e-10
        %v3058 = vmax.f32 %v3042, 1e-10
        %v3059 = vmax.f32 %v3043, 1e-10
        %v3060 = vmax.f32 %v3044, 1e-10
        %v3061 = vmax.f32 %v3045, 1e-10
        %v3062 = vmax.f32 %v3046, 1e-10
        %v3063 = vmax.f32 %v3047, 1e-10
        %v3064 = vmax.f32 %v3048, 1e-10
        %v3065 = vmax.f32 %v3049, 1e-10
        %v3066 = vmax.f32 %v3050, 1e-10
        %v3067 = vmax.f32 %v3051, 1e-10
        %v3068 = vmax.f32 %v3052, 1e-10
        %v3069 = vrsqrt.pop %v3053
        %v3070 = vmul.f32 %v3053, %v3069
        %vm3071 = vcmp.eq.f32.partialorder %v3053, inf
        %v3072 = vsel %vm3071, %v3053, %v3070
        %vm3073 = vcmp.eq.f32.partialorder %v3053, 0.0
        %v3074 = vand.u32 %v3053, 2147483648
        %v3075 = vsel %vm3073, %v3074, %v3072
        %v3076 = vrsqrt.pop %v3054
        %v3077 = vmul.f32 %v3054, %v3076
        %vm3078 = vcmp.eq.f32.partialorder %v3054, inf
        %v3079 = vsel %vm3078, %v3054, %v3077
        %vm3080 = vcmp.eq.f32.partialorder %v3054, 0.0
        %v3081 = vand.u32 %v3054, 2147483648
        %v3082 = vsel %vm3080, %v3081, %v3079
        %v3083 = vrsqrt.pop %v3055
        %v3084 = vmul.f32 %v3055, %v3083
        %vm3085 = vcmp.eq.f32.partialorder %v3055, inf
        %v3086 = vsel %vm3085, %v3055, %v3084
        %vm3087 = vcmp.eq.f32.partialorder %v3055, 0.0
        %v3088 = vand.u32 %v3055, 2147483648
        %v3089 = vsel %vm3087, %v3088, %v3086
        %v3090 = vrsqrt.pop %v3056
        %v3091 = vmul.f32 %v3056, %v3090
        %vm3092 = vcmp.eq.f32.partialorder %v3056, inf
        %v3093 = vsel %vm3092, %v3056, %v3091
        %vm3094 = vcmp.eq.f32.partialorder %v3056, 0.0
        %v3095 = vand.u32 %v3056, 2147483648
        %v3096 = vsel %vm3094, %v3095, %v3093
        %v3097 = vrsqrt.pop %v3057
        %v3098 = vmul.f32 %v3057, %v3097
        %vm3099 = vcmp.eq.f32.partialorder %v3057, inf
        %v3100 = vsel %vm3099, %v3057, %v3098
        %vm3101 = vcmp.eq.f32.partialorder %v3057, 0.0
        %v3102 = vand.u32 %v3057, 2147483648
        %v3103 = vsel %vm3101, %v3102, %v3100
        %v3104 = vrsqrt.pop %v3058
        %v3105 = vmul.f32 %v3058, %v3104
        %vm3106 = vcmp.eq.f32.partialorder %v3058, inf
        %v3107 = vsel %vm3106, %v3058, %v3105
        %vm3108 = vcmp.eq.f32.partialorder %v3058, 0.0
        %v3109 = vand.u32 %v3058, 2147483648
        %v3110 = vsel %vm3108, %v3109, %v3107
        %v3111 = vrsqrt.pop %v3059
        %v3112 = vmul.f32 %v3059, %v3111
        %vm3113 = vcmp.eq.f32.partialorder %v3059, inf
        %v3114 = vsel %vm3113, %v3059, %v3112
        %vm3115 = vcmp.eq.f32.partialorder %v3059, 0.0
        %v3116 = vand.u32 %v3059, 2147483648
        %v3117 = vsel %vm3115, %v3116, %v3114
        %v3118 = vrsqrt.pop %v3060
        %v3119 = vmul.f32 %v3060, %v3118
        %vm3120 = vcmp.eq.f32.partialorder %v3060, inf
        %v3121 = vsel %vm3120, %v3060, %v3119
        %vm3122 = vcmp.eq.f32.partialorder %v3060, 0.0
        %v3123 = vand.u32 %v3060, 2147483648
        %v3124 = vsel %vm3122, %v3123, %v3121
        %v3125 = vrsqrt.pop %v3061
        %v3126 = vmul.f32 %v3061, %v3125
        %vm3127 = vcmp.eq.f32.partialorder %v3061, inf
        %v3128 = vsel %vm3127, %v3061, %v3126
        %vm3129 = vcmp.eq.f32.partialorder %v3061, 0.0
        %v3130 = vand.u32 %v3061, 2147483648
        %v3131 = vsel %vm3129, %v3130, %v3128
        %v3132 = vrsqrt.pop %v3062
        %v3133 = vmul.f32 %v3062, %v3132
        %vm3134 = vcmp.eq.f32.partialorder %v3062, inf
        %v3135 = vsel %vm3134, %v3062, %v3133
        %vm3136 = vcmp.eq.f32.partialorder %v3062, 0.0
        %v3137 = vand.u32 %v3062, 2147483648
        %v3138 = vsel %vm3136, %v3137, %v3135
        %v3139 = vrsqrt.pop %v3063
        %v3140 = vmul.f32 %v3063, %v3139
        %vm3141 = vcmp.eq.f32.partialorder %v3063, inf
        %v3142 = vsel %vm3141, %v3063, %v3140
        %vm3143 = vcmp.eq.f32.partialorder %v3063, 0.0
        %v3144 = vand.u32 %v3063, 2147483648
        %v3145 = vsel %vm3143, %v3144, %v3142
        %v3146 = vrsqrt.pop %v3064
        %v3147 = vmul.f32 %v3064, %v3146
        %vm3148 = vcmp.eq.f32.partialorder %v3064, inf
        %v3149 = vsel %vm3148, %v3064, %v3147
        %vm3150 = vcmp.eq.f32.partialorder %v3064, 0.0
        %v3151 = vand.u32 %v3064, 2147483648
        %v3152 = vsel %vm3150, %v3151, %v3149
        %v3153 = vrsqrt.pop %v3065
        %v3154 = vmul.f32 %v3065, %v3153
        %vm3155 = vcmp.eq.f32.partialorder %v3065, inf
        %v3156 = vsel %vm3155, %v3065, %v3154
        %vm3157 = vcmp.eq.f32.partialorder %v3065, 0.0
        %v3158 = vand.u32 %v3065, 2147483648
        %v3159 = vsel %vm3157, %v3158, %v3156
        %v3160 = vrsqrt.pop %v3066
        %v3161 = vmul.f32 %v3066, %v3160
        %vm3162 = vcmp.eq.f32.partialorder %v3066, inf
        %v3163 = vsel %vm3162, %v3066, %v3161
        %vm3164 = vcmp.eq.f32.partialorder %v3066, 0.0
        %v3165 = vand.u32 %v3066, 2147483648
        %v3166 = vsel %vm3164, %v3165, %v3163
        %v3167 = vrsqrt.pop %v3067
        %v3168 = vmul.f32 %v3067, %v3167
        %vm3169 = vcmp.eq.f32.partialorder %v3067, inf
        %v3170 = vsel %vm3169, %v3067, %v3168
        %vm3171 = vcmp.eq.f32.partialorder %v3067, 0.0
        %v3172 = vand.u32 %v3067, 2147483648
        %v3173 = vsel %vm3171, %v3172, %v3170
        %v3174 = vrsqrt.pop %v3068
        %v3175 = vmul.f32 %v3068, %v3174
        %vm3176 = vcmp.eq.f32.partialorder %v3068, inf
        %v3177 = vsel %vm3176, %v3068, %v3175
        %vm3178 = vcmp.eq.f32.partialorder %v3068, 0.0
        %v3179 = vand.u32 %v3068, 2147483648
        %v3180 = vsel %vm3178, %v3179, %v3177
        %v3181 = vand.u32 2147483647, %v666
        %v3182 = vand.u32 2147483647, %v671
        %v3183 = vand.u32 2147483647, %v741
        %v3184 = vand.u32 2147483647, %v746
        %v3185 = vand.u32 2147483647, %v816
        %v3186 = vand.u32 2147483647, %v821
        %v3187 = vand.u32 2147483647, %v891
        %v3188 = vand.u32 2147483647, %v896
        %v3189 = vand.u32 2147483647, %v966
        %v3190 = vand.u32 2147483647, %v971
        %v3191 = vand.u32 2147483647, %v1041
        %v3192 = vand.u32 2147483647, %v1046
        %v3193 = vand.u32 2147483647, %v1116
        %v3194 = vand.u32 2147483647, %v1121
        %v3195 = vand.u32 2147483647, %v1191
        %v3196 = vand.u32 2147483647, %v1196
        %vm3197 = vcmp.lt.f32.partialorder %v3181, 1e-10
        %vm3198 = vcmp.lt.f32.partialorder %v3182, 1e-10
        %vm3199 = vcmp.lt.f32.partialorder %v3183, 1e-10
        %vm3200 = vcmp.lt.f32.partialorder %v3184, 1e-10
        %vm3201 = vcmp.lt.f32.partialorder %v3185, 1e-10
        %vm3202 = vcmp.lt.f32.partialorder %v3186, 1e-10
        %vm3203 = vcmp.lt.f32.partialorder %v3187, 1e-10
        %vm3204 = vcmp.lt.f32.partialorder %v3188, 1e-10
        %vm3205 = vcmp.lt.f32.partialorder %v3189, 1e-10
        %vm3206 = vcmp.lt.f32.partialorder %v3190, 1e-10
        %vm3207 = vcmp.lt.f32.partialorder %v3191, 1e-10
        %vm3208 = vcmp.lt.f32.partialorder %v3192, 1e-10
        %vm3209 = vcmp.lt.f32.partialorder %v3193, 1e-10
        %vm3210 = vcmp.lt.f32.partialorder %v3194, 1e-10
        %vm3211 = vcmp.lt.f32.partialorder %v3195, 1e-10
        %vm3212 = vcmp.lt.f32.partialorder %v3196, 1e-10
        %v3213 = vsel %vm3197, 1e-10, %v666
        %v3214 = vsel %vm3198, 1e-10, %v671
        %v3215 = vsel %vm3199, 1e-10, %v741
        %v3216 = vsel %vm3200, 1e-10, %v746
        %v3217 = vsel %vm3201, 1e-10, %v816
        %v3218 = vsel %vm3202, 1e-10, %v821
        %v3219 = vsel %vm3203, 1e-10, %v891
        %v3220 = vsel %vm3204, 1e-10, %v896
        %v3221 = vsel %vm3205, 1e-10, %v966
        %v3222 = vsel %vm3206, 1e-10, %v971
        %v3223 = vsel %vm3207, 1e-10, %v1041
        %v3224 = vsel %vm3208, 1e-10, %v1046
        %v3225 = vsel %vm3209, 1e-10, %v1116
        %v3226 = vsel %vm3210, 1e-10, %v1121
        %v3227 = vsel %vm3211, 1e-10, %v1191
        %v3228 = vsel %vm3212, 1e-10, %v1196
        %v3229 = vmul.f32 %v3213, %v3213
        %v3230 = vmul.f32 %v3214, %v3214
        %v3231 = vmul.f32 %v3215, %v3215
        %v3232 = vmul.f32 %v3216, %v3216
        %v3233 = vmul.f32 %v3217, %v3217
        %v3234 = vmul.f32 %v3218, %v3218
        %v3235 = vmul.f32 %v3219, %v3219
        %v3236 = vmul.f32 %v3220, %v3220
        %v3237 = vmul.f32 %v3221, %v3221
        %v3238 = vmul.f32 %v3222, %v3222
        %v3239 = vmul.f32 %v3223, %v3223
        %v3240 = vmul.f32 %v3224, %v3224
        %v3241 = vmul.f32 %v3225, %v3225
        %v3242 = vmul.f32 %v3226, %v3226
        %v3243 = vmul.f32 %v3227, %v3227
        %v3244 = vmul.f32 %v3228, %v3228
        %v3245 = vmul.f32 %v1272, %v1272
        %v3246 = vmul.f32 %v1277, %v1277
        %v3247 = vmul.f32 %v1347, %v1347
        %v3248 = vmul.f32 %v1352, %v1352
        %v3249 = vmul.f32 %v1422, %v1422
        %v3250 = vmul.f32 %v1427, %v1427
        %v3251 = vmul.f32 %v1497, %v1497
        %v3252 = vmul.f32 %v1502, %v1502
        %v3253 = vmul.f32 %v1572, %v1572
        %v3254 = vmul.f32 %v1577, %v1577
        %v3255 = vmul.f32 %v1647, %v1647
        %v3256 = vmul.f32 %v1652, %v1652
        %v3257 = vmul.f32 %v1722, %v1722
        %v3258 = vmul.f32 %v1727, %v1727
        %v3259 = vmul.f32 %v1797, %v1797
        %v3260 = vmul.f32 %v1802, %v1802
        %v3261 = vadd.f32 %v3229, %v3245
        %v3262 = vadd.f32 %v3230, %v3246
        %v3263 = vadd.f32 %v3231, %v3247
        %v3264 = vadd.f32 %v3232, %v3248
        %v3265 = vadd.f32 %v3233, %v3249
        %v3266 = vadd.f32 %v3234, %v3250
        %v3267 = vadd.f32 %v3235, %v3251
        %v3268 = vadd.f32 %v3236, %v3252
        %v3269 = vadd.f32 %v3237, %v3253
        %v3270 = vadd.f32 %v3238, %v3254
        %v3271 = vadd.f32 %v3239, %v3255
        %v3272 = vadd.f32 %v3240, %v3256
        %v3273 = vadd.f32 %v3241, %v3257
        %v3274 = vadd.f32 %v3242, %v3258
        %v3275 = vadd.f32 %v3243, %v3259
        %v3276 = vadd.f32 %v3244, %v3260
        %v3277 = vrsqrt.pop %v3261
        %v3278 = vrsqrt.pop %v3262
        %v3279 = vrsqrt.pop %v3263
        %v3280 = vrsqrt.pop %v3264
        %v3281 = vrsqrt.pop %v3265
        %v3282 = vrsqrt.pop %v3266
        %v3283 = vrsqrt.pop %v3267
        %v3284 = vrsqrt.pop %v3268
        %v3285 = vrsqrt.pop %v3269
        %v3286 = vrsqrt.pop %v3270
        %v3287 = vrsqrt.pop %v3271
        %v3288 = vrsqrt.pop %v3272
        %v3289 = vrsqrt.pop %v3273
        %v3290 = vrsqrt.pop %v3274
        %v3291 = vrsqrt.pop %v3275
        %v3292 = vrsqrt.pop %v3276
        %v3293 = vmul.f32 %v3075, %v3277
        %v3294 = vmul.f32 %v3082, %v3278
        %v3295 = vmul.f32 %v3089, %v3279
        %v3296 = vmul.f32 %v3096, %v3280
        %v3297 = vmul.f32 %v3103, %v3281
        %v3298 = vmul.f32 %v3110, %v3282
        %v3299 = vmul.f32 %v3117, %v3283
        %v3300 = vmul.f32 %v3124, %v3284
        %v3301 = vmul.f32 %v3131, %v3285
        %v3302 = vmul.f32 %v3138, %v3286
        %v3303 = vmul.f32 %v3145, %v3287
        %v3304 = vmul.f32 %v3152, %v3288
        %v3305 = vmul.f32 %v3159, %v3289
        %v3306 = vmul.f32 %v3166, %v3290
        %v3307 = vmul.f32 %v3173, %v3291
        %v3308 = vmul.f32 %v3180, %v3292
        %v3309 = vmul.f32 %v3293, 0.25
        %v3310 = vmul.f32 %v3294, 0.25
        %v3311 = vmul.f32 %v3295, 0.25
        %v3312 = vmul.f32 %v3296, 0.25
        %v3313 = vmul.f32 %v3297, 0.25
        %v3314 = vmul.f32 %v3298, 0.25
        %v3315 = vmul.f32 %v3299, 0.25
        %v3316 = vmul.f32 %v3300, 0.25
        %v3317 = vmul.f32 %v3301, 0.25
        %v3318 = vmul.f32 %v3302, 0.25
        %v3319 = vmul.f32 %v3303, 0.25
        %v3320 = vmul.f32 %v3304, 0.25
        %v3321 = vmul.f32 %v3305, 0.25
        %v3322 = vmul.f32 %v3306, 0.25
        %v3323 = vmul.f32 %v3307, 0.25
        %v3324 = vmul.f32 %v3308, 0.25
        %v3325 = vmul.f32 %v3309, %v3213
        %v3326 = vmul.f32 %v3310, %v3214
        %v3327 = vmul.f32 %v3311, %v3215
        %v3328 = vmul.f32 %v3312, %v3216
        %v3329 = vmul.f32 %v3313, %v3217
        %v3330 = vmul.f32 %v3314, %v3218
        %v3331 = vmul.f32 %v3315, %v3219
        %v3332 = vmul.f32 %v3316, %v3220
        %v3333 = vmul.f32 %v3317, %v3221
        %v3334 = vmul.f32 %v3318, %v3222
        %v3335 = vmul.f32 %v3319, %v3223
        %v3336 = vmul.f32 %v3320, %v3224
        %v3337 = vmul.f32 %v3321, %v3225
        %v3338 = vmul.f32 %v3322, %v3226
        %v3339 = vmul.f32 %v3323, %v3227
        %v3340 = vmul.f32 %v3324, %v3228
        %v3341 = vmul.f32 %v3309, %v1272
        %v3342 = vmul.f32 %v3310, %v1277
        %v3343 = vmul.f32 %v3311, %v1347
        %v3344 = vmul.f32 %v3312, %v1352
        %v3345 = vmul.f32 %v3313, %v1422
        %v3346 = vmul.f32 %v3314, %v1427
        %v3347 = vmul.f32 %v3315, %v1497
        %v3348 = vmul.f32 %v3316, %v1502
        %v3349 = vmul.f32 %v3317, %v1572
        %v3350 = vmul.f32 %v3318, %v1577
        %v3351 = vmul.f32 %v3319, %v1647
        %v3352 = vmul.f32 %v3320, %v1652
        %v3353 = vmul.f32 %v3321, %v1722
        %v3354 = vmul.f32 %v3322, %v1727
        %v3355 = vmul.f32 %v3323, %v1797
        %v3356 = vmul.f32 %v3324, %v1802
        %v3357 = vld [vmem:[#allocation8] sm:$0xff]
        %v3358 = vld [vmem:[#allocation8 + $0x8] sm:$0xff]
        %v3359 = vld [vmem:[%s4] sm:$0xff]
        %v3360 = vld [vmem:[%s4 + $0x8] sm:$0xff]
        %v3362 = vsel %vm592, %v3359, 0
        %v3365 = vsel %vm592, %v3360, 0
        %3367 = vmatprep.subr.mxu0 0.0
        %3368 = vmatpush1.msra.mxu0 %v3341
        %3369 = vmatprep.subr.mxu0 0.0
        %3370 = vmatpush1.msra.mxu0 %v3342
        %3371 = vmatprep.subr.mxu0 0.0
        %3372 = vmatpush1.msra.mxu0 0.0
        %3373 = vmatprep.subr.mxu0 0.0
        %3374 = vmatpush1.msra.mxu0 0.0
        %3375 = vmatprep.subr.mxu0 0.0
        %3376 = vmatpush1.msra.mxu0 0.0
        %3377 = vmatprep.subr.mxu0 0.0
        %3378 = vmatpush1.msra.mxu0 0.0
        %3379 = vmatprep.subr.mxu0 0.0
        %3380 = vmatpush1.msra.mxu0 0.0
        %3381 = vmatprep.subr.mxu0 0.0
        %3382 = vmatpush1.msra.mxu0 0.0
        %3383 = vmatprep.subr.mxu0 0.0
        %3384 = vmatpush1.msra.mxu0 0.0
        %3385 = vmatprep.subr.mxu0 0.0
        %3386 = vmatpush1.msra.mxu0 0.0
        %3387 = vmatprep.subr.mxu0 0.0
        %3388 = vmatpush1.msra.mxu0 0.0
        %3389 = vmatprep.subr.mxu0 0.0
        %3390 = vmatpush1.msra.mxu0 0.0
        %3391 = vmatprep.subr.mxu0 0.0
        %3392 = vmatpush1.msra.mxu0 0.0
        %3393 = vmatprep.subr.mxu0 0.0
        %3394 = vmatpush1.msra.mxu0 0.0
        %3395 = vmatprep.subr.mxu0 0.0
        %3396 = vmatpush1.msra.mxu0 0.0
        %3397 = vmatprep.subr.mxu0 0.0
        %3398 = vmatpush1.msra.mxu0 0.0
        %3399 = vmatprep.subr.mxu0 0.0
        %3400 = vmatpush1.msra.mxu0 0.0
        %3401 = vmatprep.subr.mxu0 0.0
        %3402 = vmatpush1.msra.mxu0 0.0
        %3403 = vmatprep.subr.mxu0 0.0
        %3404 = vmatpush1.msra.mxu0 0.0
        %3405 = vmatprep.subr.mxu0 0.0
        %3406 = vmatpush1.msra.mxu0 0.0
        %3407 = vmatprep.subr.mxu0 0.0
        %3408 = vmatpush1.msra.mxu0 0.0
        %3409 = vmatprep.subr.mxu0 0.0
        %3410 = vmatpush1.msra.mxu0 0.0
        %3411 = vmatprep.subr.mxu0 0.0
        %3412 = vmatpush1.msra.mxu0 0.0
        %3413 = vmatprep.subr.mxu0 0.0
        %3414 = vmatpush1.msra.mxu0 0.0
        %3415 = vmatprep.subr.mxu0 0.0
        %3416 = vmatpush1.msra.mxu0 0.0
        %3417 = vmatprep.subr.mxu0 0.0
        %3418 = vmatpush1.msra.mxu0 0.0
        %3419 = vmatprep.subr.mxu0 0.0
        %3420 = vmatpush1.msra.mxu0 0.0
        %3421 = vmatprep.subr.mxu0 0.0
        %3422 = vmatpush1.msra.mxu0 0.0
        %3423 = vmatprep.subr.mxu0 0.0
        %3424 = vmatpush1.msra.mxu0 0.0
        %3425 = vmatprep.subr.mxu0 0.0
        %3426 = vmatpush1.msra.mxu0 0.0
        %3427 = vmatprep.subr.mxu0 0.0
        %3428 = vmatpush1.msra.mxu0 0.0
        %3429 = vmatprep.subr.mxu0 0.0
        %3430 = vmatpush1.msra.mxu0 0.0
        %3431 = vmatprep.mubr.f32.mxu0 0.0
        %3432 = vmatmul.mubr.f32.gmra.mrb[0].mxu0 %v3362
        %v3433 = vpop.f32.mrb[0].mxu0
        %v3434 = vadd.f32 0.0, %v3433
        %v3435 = vpop.f32.mrb[0].mxu0
        %3436 = vmatprep.mubr.f32.mxu0 0.0
        %3437 = vmatmul.mubr.f32.gmra.mrb[0].mxu0 %v3365
        %v3438 = vpop.f32.mrb[0].mxu0
        %v3439 = vadd.f32 0.0, %v3438
        %v3440 = vpop.f32.mrb[0].mxu0
        %3441 = vdwg.mxu0
        %3442 = vmatprep.subr.mxu0 0.0
        %3443 = vmatpush1.msra.mxu0 %v3343
        %3444 = vmatprep.subr.mxu0 0.0
        %3445 = vmatpush1.msra.mxu0 %v3344
        %3446 = vmatprep.subr.mxu0 0.0
        %3447 = vmatpush1.msra.mxu0 0.0
        %3448 = vmatprep.subr.mxu0 0.0
        %3449 = vmatpush1.msra.mxu0 0.0
        %3450 = vmatprep.subr.mxu0 0.0
        %3451 = vmatpush1.msra.mxu0 0.0
        %3452 = vmatprep.subr.mxu0 0.0
        %3453 = vmatpush1.msra.mxu0 0.0
        %3454 = vmatprep.subr.mxu0 0.0
        %3455 = vmatpush1.msra.mxu0 0.0
        %3456 = vmatprep.subr.mxu0 0.0
        %3457 = vmatpush1.msra.mxu0 0.0
        %3458 = vmatprep.subr.mxu0 0.0
        %3459 = vmatpush1.msra.mxu0 0.0
        %3460 = vmatprep.subr.mxu0 0.0
        %3461 = vmatpush1.msra.mxu0 0.0
        %3462 = vmatprep.subr.mxu0 0.0
        %3463 = vmatpush1.msra.mxu0 0.0
        %3464 = vmatprep.subr.mxu0 0.0
        %3465 = vmatpush1.msra.mxu0 0.0
        %3466 = vmatprep.subr.mxu0 0.0
        %3467 = vmatpush1.msra.mxu0 0.0
        %3468 = vmatprep.subr.mxu0 0.0
        %3469 = vmatpush1.msra.mxu0 0.0
        %3470 = vmatprep.subr.mxu0 0.0
        %3471 = vmatpush1.msra.mxu0 0.0
        %3472 = vmatprep.subr.mxu0 0.0
        %3473 = vmatpush1.msra.mxu0 0.0
        %3474 = vmatprep.subr.mxu0 0.0
        %3475 = vmatpush1.msra.mxu0 0.0
        %3476 = vmatprep.subr.mxu0 0.0
        %3477 = vmatpush1.msra.mxu0 0.0
        %3478 = vmatprep.subr.mxu0 0.0
        %3479 = vmatpush1.msra.mxu0 0.0
        %3480 = vmatprep.subr.mxu0 0.0
        %3481 = vmatpush1.msra.mxu0 0.0
        %3482 = vmatprep.subr.mxu0 0.0
        %3483 = vmatpush1.msra.mxu0 0.0
        %3484 = vmatprep.subr.mxu0 0.0
        %3485 = vmatpush1.msra.mxu0 0.0
        %3486 = vmatprep.subr.mxu0 0.0
        %3487 = vmatpush1.msra.mxu0 0.0
        %3488 = vmatprep.subr.mxu0 0.0
        %3489 = vmatpush1.msra.mxu0 0.0
        %3490 = vmatprep.subr.mxu0 0.0
        %3491 = vmatpush1.msra.mxu0 0.0
        %3492 = vmatprep.subr.mxu0 0.0
        %3493 = vmatpush1.msra.mxu0 0.0
        %3494 = vmatprep.subr.mxu0 0.0
        %3495 = vmatpush1.msra.mxu0 0.0
        %3496 = vmatprep.subr.mxu0 0.0
        %3497 = vmatpush1.msra.mxu0 0.0
        %3498 = vmatprep.subr.mxu0 0.0
        %3499 = vmatpush1.msra.mxu0 0.0
        %3500 = vmatprep.subr.mxu0 0.0
        %3501 = vmatpush1.msra.mxu0 0.0
        %3502 = vmatprep.subr.mxu0 0.0
        %3503 = vmatpush1.msra.mxu0 0.0
        %3504 = vmatprep.subr.mxu0 0.0
        %3505 = vmatpush1.msra.mxu0 0.0
        %3506 = vmatprep.mubr.f32.mxu0 0.0
        %3507 = vmatmul.mubr.f32.gmra.mrb[0].mxu0 %v3362
        %v3508 = vpop.f32.mrb[0].mxu0
        %v3509 = vadd.f32 0.0, %v3508
        %v3510 = vpop.f32.mrb[0].mxu0
        %3511 = vmatprep.mubr.f32.mxu0 0.0
        %3512 = vmatmul.mubr.f32.gmra.mrb[0].mxu0 %v3365
        %v3513 = vpop.f32.mrb[0].mxu0
        %v3514 = vadd.f32 0.0, %v3513
        %v3515 = vpop.f32.mrb[0].mxu0
        %3516 = vdwg.mxu0
        %3517 = vmatprep.subr.mxu0 0.0
        %3518 = vmatpush1.msra.mxu0 %v3345
        %3519 = vmatprep.subr.mxu0 0.0
        %3520 = vmatpush1.msra.mxu0 %v3346
        %3521 = vmatprep.subr.mxu0 0.0
        %3522 = vmatpush1.msra.mxu0 0.0
        %3523 = vmatprep.subr.mxu0 0.0
        %3524 = vmatpush1.msra.mxu0 0.0
        %3525 = vmatprep.subr.mxu0 0.0
        %3526 = vmatpush1.msra.mxu0 0.0
        %3527 = vmatprep.subr.mxu0 0.0
        %3528 = vmatpush1.msra.mxu0 0.0
        %3529 = vmatprep.subr.mxu0 0.0
        %3530 = vmatpush1.msra.mxu0 0.0
        %3531 = vmatprep.subr.mxu0 0.0
        %3532 = vmatpush1.msra.mxu0 0.0
        %3533 = vmatprep.subr.mxu0 0.0
        %3534 = vmatpush1.msra.mxu0 0.0
        %3535 = vmatprep.subr.mxu0 0.0
        %3536 = vmatpush1.msra.mxu0 0.0
        %3537 = vmatprep.subr.mxu0 0.0
        %3538 = vmatpush1.msra.mxu0 0.0
        %3539 = vmatprep.subr.mxu0 0.0
        %3540 = vmatpush1.msra.mxu0 0.0
        %3541 = vmatprep.subr.mxu0 0.0
        %3542 = vmatpush1.msra.mxu0 0.0
        %3543 = vmatprep.subr.mxu0 0.0
        %3544 = vmatpush1.msra.mxu0 0.0
        %3545 = vmatprep.subr.mxu0 0.0
        %3546 = vmatpush1.msra.mxu0 0.0
        %3547 = vmatprep.subr.mxu0 0.0
        %3548 = vmatpush1.msra.mxu0 0.0
        %3549 = vmatprep.subr.mxu0 0.0
        %3550 = vmatpush1.msra.mxu0 0.0
        %3551 = vmatprep.subr.mxu0 0.0
        %3552 = vmatpush1.msra.mxu0 0.0
        %3553 = vmatprep.subr.mxu0 0.0
        %3554 = vmatpush1.msra.mxu0 0.0
        %3555 = vmatprep.subr.mxu0 0.0
        %3556 = vmatpush1.msra.mxu0 0.0
        %3557 = vmatprep.subr.mxu0 0.0
        %3558 = vmatpush1.msra.mxu0 0.0
        %3559 = vmatprep.subr.mxu0 0.0
        %3560 = vmatpush1.msra.mxu0 0.0
        %3561 = vmatprep.subr.mxu0 0.0
        %3562 = vmatpush1.msra.mxu0 0.0
        %3563 = vmatprep.subr.mxu0 0.0
        %3564 = vmatpush1.msra.mxu0 0.0
        %3565 = vmatprep.subr.mxu0 0.0
        %3566 = vmatpush1.msra.mxu0 0.0
        %3567 = vmatprep.subr.mxu0 0.0
        %3568 = vmatpush1.msra.mxu0 0.0
        %3569 = vmatprep.subr.mxu0 0.0
        %3570 = vmatpush1.msra.mxu0 0.0
        %3571 = vmatprep.subr.mxu0 0.0
        %3572 = vmatpush1.msra.mxu0 0.0
        %3573 = vmatprep.subr.mxu0 0.0
        %3574 = vmatpush1.msra.mxu0 0.0
        %3575 = vmatprep.subr.mxu0 0.0
        %3576 = vmatpush1.msra.mxu0 0.0
        %3577 = vmatprep.subr.mxu0 0.0
        %3578 = vmatpush1.msra.mxu0 0.0
        %3579 = vmatprep.subr.mxu0 0.0
        %3580 = vmatpush1.msra.mxu0 0.0
        %3581 = vmatprep.mubr.f32.mxu0 0.0
        %3582 = vmatmul.mubr.f32.gmra.mrb[0].mxu0 %v3362
        %v3583 = vpop.f32.mrb[0].mxu0
        %v3584 = vadd.f32 0.0, %v3583
        %v3585 = vpop.f32.mrb[0].mxu0
        %3586 = vmatprep.mubr.f32.mxu0 0.0
        %3587 = vmatmul.mubr.f32.gmra.mrb[0].mxu0 %v3365
        %v3588 = vpop.f32.mrb[0].mxu0
        %v3589 = vadd.f32 0.0, %v3588
        %v3590 = vpop.f32.mrb[0].mxu0
        %3591 = vdwg.mxu0
        %3592 = vmatprep.subr.mxu0 0.0
        %3593 = vmatpush1.msra.mxu0 %v3347
        %3594 = vmatprep.subr.mxu0 0.0
        %3595 = vmatpush1.msra.mxu0 %v3348
        %3596 = vmatprep.subr.mxu0 0.0
        %3597 = vmatpush1.msra.mxu0 0.0
        %3598 = vmatprep.subr.mxu0 0.0
        %3599 = vmatpush1.msra.mxu0 0.0
        %3600 = vmatprep.subr.mxu0 0.0
        %3601 = vmatpush1.msra.mxu0 0.0
        %3602 = vmatprep.subr.mxu0 0.0
        %3603 = vmatpush1.msra.mxu0 0.0
        %3604 = vmatprep.subr.mxu0 0.0
        %3605 = vmatpush1.msra.mxu0 0.0
        %3606 = vmatprep.subr.mxu0 0.0
        %3607 = vmatpush1.msra.mxu0 0.0
        %3608 = vmatprep.subr.mxu0 0.0
        %3609 = vmatpush1.msra.mxu0 0.0
        %3610 = vmatprep.subr.mxu0 0.0
        %3611 = vmatpush1.msra.mxu0 0.0
        %3612 = vmatprep.subr.mxu0 0.0
        %3613 = vmatpush1.msra.mxu0 0.0
        %3614 = vmatprep.subr.mxu0 0.0
        %3615 = vmatpush1.msra.mxu0 0.0
        %3616 = vmatprep.subr.mxu0 0.0
        %3617 = vmatpush1.msra.mxu0 0.0
        %3618 = vmatprep.subr.mxu0 0.0
        %3619 = vmatpush1.msra.mxu0 0.0
        %3620 = vmatprep.subr.mxu0 0.0
        %3621 = vmatpush1.msra.mxu0 0.0
        %3622 = vmatprep.subr.mxu0 0.0
        %3623 = vmatpush1.msra.mxu0 0.0
        %3624 = vmatprep.subr.mxu0 0.0
        %3625 = vmatpush1.msra.mxu0 0.0
        %3626 = vmatprep.subr.mxu0 0.0
        %3627 = vmatpush1.msra.mxu0 0.0
        %3628 = vmatprep.subr.mxu0 0.0
        %3629 = vmatpush1.msra.mxu0 0.0
        %3630 = vmatprep.subr.mxu0 0.0
        %3631 = vmatpush1.msra.mxu0 0.0
        %3632 = vmatprep.subr.mxu0 0.0
        %3633 = vmatpush1.msra.mxu0 0.0
        %3634 = vmatprep.subr.mxu0 0.0
        %3635 = vmatpush1.msra.mxu0 0.0
        %3636 = vmatprep.subr.mxu0 0.0
        %3637 = vmatpush1.msra.mxu0 0.0
        %3638 = vmatprep.subr.mxu0 0.0
        %3639 = vmatpush1.msra.mxu0 0.0
        %3640 = vmatprep.subr.mxu0 0.0
        %3641 = vmatpush1.msra.mxu0 0.0
        %3642 = vmatprep.subr.mxu0 0.0
        %3643 = vmatpush1.msra.mxu0 0.0
        %3644 = vmatprep.subr.mxu0 0.0
        %3645 = vmatpush1.msra.mxu0 0.0
        %3646 = vmatprep.subr.mxu0 0.0
        %3647 = vmatpush1.msra.mxu0 0.0
        %3648 = vmatprep.subr.mxu0 0.0
        %3649 = vmatpush1.msra.mxu0 0.0
        %3650 = vmatprep.subr.mxu0 0.0
        %3651 = vmatpush1.msra.mxu0 0.0
        %3652 = vmatprep.subr.mxu0 0.0
        %3653 = vmatpush1.msra.mxu0 0.0
        %3654 = vmatprep.subr.mxu0 0.0
        %3655 = vmatpush1.msra.mxu0 0.0
        %3656 = vmatprep.mubr.f32.mxu0 0.0
        %3657 = vmatmul.mubr.f32.gmra.mrb[0].mxu0 %v3362
        %v3658 = vpop.f32.mrb[0].mxu0
        %v3659 = vadd.f32 0.0, %v3658
        %v3660 = vpop.f32.mrb[0].mxu0
        %3661 = vmatprep.mubr.f32.mxu0 0.0
        %3662 = vmatmul.mubr.f32.gmra.mrb[0].mxu0 %v3365
        %v3663 = vpop.f32.mrb[0].mxu0
        %v3664 = vadd.f32 0.0, %v3663
        %v3665 = vpop.f32.mrb[0].mxu0
        %3666 = vdwg.mxu0
        %3667 = vmatprep.subr.mxu0 0.0
        %3668 = vmatpush1.msra.mxu0 %v3349
        %3669 = vmatprep.subr.mxu0 0.0
        %3670 = vmatpush1.msra.mxu0 %v3350
        %3671 = vmatprep.subr.mxu0 0.0
        %3672 = vmatpush1.msra.mxu0 0.0
        %3673 = vmatprep.subr.mxu0 0.0
        %3674 = vmatpush1.msra.mxu0 0.0
        %3675 = vmatprep.subr.mxu0 0.0
        %3676 = vmatpush1.msra.mxu0 0.0
        %3677 = vmatprep.subr.mxu0 0.0
        %3678 = vmatpush1.msra.mxu0 0.0
        %3679 = vmatprep.subr.mxu0 0.0
        %3680 = vmatpush1.msra.mxu0 0.0
        %3681 = vmatprep.subr.mxu0 0.0
        %3682 = vmatpush1.msra.mxu0 0.0
        %3683 = vmatprep.subr.mxu0 0.0
        %3684 = vmatpush1.msra.mxu0 0.0
        %3685 = vmatprep.subr.mxu0 0.0
        %3686 = vmatpush1.msra.mxu0 0.0
        %3687 = vmatprep.subr.mxu0 0.0
        %3688 = vmatpush1.msra.mxu0 0.0
        %3689 = vmatprep.subr.mxu0 0.0
        %3690 = vmatpush1.msra.mxu0 0.0
        %3691 = vmatprep.subr.mxu0 0.0
        %3692 = vmatpush1.msra.mxu0 0.0
        %3693 = vmatprep.subr.mxu0 0.0
        %3694 = vmatpush1.msra.mxu0 0.0
        %3695 = vmatprep.subr.mxu0 0.0
        %3696 = vmatpush1.msra.mxu0 0.0
        %3697 = vmatprep.subr.mxu0 0.0
        %3698 = vmatpush1.msra.mxu0 0.0
        %3699 = vmatprep.subr.mxu0 0.0
        %3700 = vmatpush1.msra.mxu0 0.0
        %3701 = vmatprep.subr.mxu0 0.0
        %3702 = vmatpush1.msra.mxu0 0.0
        %3703 = vmatprep.subr.mxu0 0.0
        %3704 = vmatpush1.msra.mxu0 0.0
        %3705 = vmatprep.subr.mxu0 0.0
        %3706 = vmatpush1.msra.mxu0 0.0
        %3707 = vmatprep.subr.mxu0 0.0
        %3708 = vmatpush1.msra.mxu0 0.0
        %3709 = vmatprep.subr.mxu0 0.0
        %3710 = vmatpush1.msra.mxu0 0.0
        %3711 = vmatprep.subr.mxu0 0.0
        %3712 = vmatpush1.msra.mxu0 0.0
        %3713 = vmatprep.subr.mxu0 0.0
        %3714 = vmatpush1.msra.mxu0 0.0
        %3715 = vmatprep.subr.mxu0 0.0
        %3716 = vmatpush1.msra.mxu0 0.0
        %3717 = vmatprep.subr.mxu0 0.0
        %3718 = vmatpush1.msra.mxu0 0.0
        %3719 = vmatprep.subr.mxu0 0.0
        %3720 = vmatpush1.msra.mxu0 0.0
        %3721 = vmatprep.subr.mxu0 0.0
        %3722 = vmatpush1.msra.mxu0 0.0
        %3723 = vmatprep.subr.mxu0 0.0
        %3724 = vmatpush1.msra.mxu0 0.0
        %3725 = vmatprep.subr.mxu0 0.0
        %3726 = vmatpush1.msra.mxu0 0.0
        %3727 = vmatprep.subr.mxu0 0.0
        %3728 = vmatpush1.msra.mxu0 0.0
        %3729 = vmatprep.subr.mxu0 0.0
        %3730 = vmatpush1.msra.mxu0 0.0
        %3731 = vmatprep.mubr.f32.mxu0 0.0
        %3732 = vmatmul.mubr.f32.gmra.mrb[0].mxu0 %v3362
        %v3733 = vpop.f32.mrb[0].mxu0
        %v3734 = vadd.f32 0.0, %v3733
        %v3735 = vpop.f32.mrb[0].mxu0
        %3736 = vmatprep.mubr.f32.mxu0 0.0
        %3737 = vmatmul.mubr.f32.gmra.mrb[0].mxu0 %v3365
        %v3738 = vpop.f32.mrb[0].mxu0
        %v3739 = vadd.f32 0.0, %v3738
        %v3740 = vpop.f32.mrb[0].mxu0
        %3741 = vdwg.mxu0
        %3742 = vmatprep.subr.mxu0 0.0
        %3743 = vmatpush1.msra.mxu0 %v3351
        %3744 = vmatprep.subr.mxu0 0.0
        %3745 = vmatpush1.msra.mxu0 %v3352
        %3746 = vmatprep.subr.mxu0 0.0
        %3747 = vmatpush1.msra.mxu0 0.0
        %3748 = vmatprep.subr.mxu0 0.0
        %3749 = vmatpush1.msra.mxu0 0.0
        %3750 = vmatprep.subr.mxu0 0.0
        %3751 = vmatpush1.msra.mxu0 0.0
        %3752 = vmatprep.subr.mxu0 0.0
        %3753 = vmatpush1.msra.mxu0 0.0
        %3754 = vmatprep.subr.mxu0 0.0
        %3755 = vmatpush1.msra.mxu0 0.0
        %3756 = vmatprep.subr.mxu0 0.0
        %3757 = vmatpush1.msra.mxu0 0.0
        %3758 = vmatprep.subr.mxu0 0.0
        %3759 = vmatpush1.msra.mxu0 0.0
        %3760 = vmatprep.subr.mxu0 0.0
        %3761 = vmatpush1.msra.mxu0 0.0
        %3762 = vmatprep.subr.mxu0 0.0
        %3763 = vmatpush1.msra.mxu0 0.0
        %3764 = vmatprep.subr.mxu0 0.0
        %3765 = vmatpush1.msra.mxu0 0.0
        %3766 = vmatprep.subr.mxu0 0.0
        %3767 = vmatpush1.msra.mxu0 0.0
        %3768 = vmatprep.subr.mxu0 0.0
        %3769 = vmatpush1.msra.mxu0 0.0
        %3770 = vmatprep.subr.mxu0 0.0
        %3771 = vmatpush1.msra.mxu0 0.0
        %3772 = vmatprep.subr.mxu0 0.0
        %3773 = vmatpush1.msra.mxu0 0.0
        %3774 = vmatprep.subr.mxu0 0.0
        %3775 = vmatpush1.msra.mxu0 0.0
        %3776 = vmatprep.subr.mxu0 0.0
        %3777 = vmatpush1.msra.mxu0 0.0
        %3778 = vmatprep.subr.mxu0 0.0
        %3779 = vmatpush1.msra.mxu0 0.0
        %3780 = vmatprep.subr.mxu0 0.0
        %3781 = vmatpush1.msra.mxu0 0.0
        %3782 = vmatprep.subr.mxu0 0.0
        %3783 = vmatpush1.msra.mxu0 0.0
        %3784 = vmatprep.subr.mxu0 0.0
        %3785 = vmatpush1.msra.mxu0 0.0
        %3786 = vmatprep.subr.mxu0 0.0
        %3787 = vmatpush1.msra.mxu0 0.0
        %3788 = vmatprep.subr.mxu0 0.0
        %3789 = vmatpush1.msra.mxu0 0.0
        %3790 = vmatprep.subr.mxu0 0.0
        %3791 = vmatpush1.msra.mxu0 0.0
        %3792 = vmatprep.subr.mxu0 0.0
        %3793 = vmatpush1.msra.mxu0 0.0
        %3794 = vmatprep.subr.mxu0 0.0
        %3795 = vmatpush1.msra.mxu0 0.0
        %3796 = vmatprep.subr.mxu0 0.0
        %3797 = vmatpush1.msra.mxu0 0.0
        %3798 = vmatprep.subr.mxu0 0.0
        %3799 = vmatpush1.msra.mxu0 0.0
        %3800 = vmatprep.subr.mxu0 0.0
        %3801 = vmatpush1.msra.mxu0 0.0
        %3802 = vmatprep.subr.mxu0 0.0
        %3803 = vmatpush1.msra.mxu0 0.0
        %3804 = vmatprep.subr.mxu0 0.0
        %3805 = vmatpush1.msra.mxu0 0.0
        %3806 = vmatprep.mubr.f32.mxu0 0.0
        %3807 = vmatmul.mubr.f32.gmra.mrb[0].mxu0 %v3362
        %v3808 = vpop.f32.mrb[0].mxu0
        %v3809 = vadd.f32 0.0, %v3808
        %v3810 = vpop.f32.mrb[0].mxu0
        %3811 = vmatprep.mubr.f32.mxu0 0.0
        %3812 = vmatmul.mubr.f32.gmra.mrb[0].mxu0 %v3365
        %v3813 = vpop.f32.mrb[0].mxu0
        %v3814 = vadd.f32 0.0, %v3813
        %v3815 = vpop.f32.mrb[0].mxu0
        %3816 = vdwg.mxu0
        %3817 = vmatprep.subr.mxu0 0.0
        %3818 = vmatpush1.msra.mxu0 %v3353
        %3819 = vmatprep.subr.mxu0 0.0
        %3820 = vmatpush1.msra.mxu0 %v3354
        %3821 = vmatprep.subr.mxu0 0.0
        %3822 = vmatpush1.msra.mxu0 0.0
        %3823 = vmatprep.subr.mxu0 0.0
        %3824 = vmatpush1.msra.mxu0 0.0
        %3825 = vmatprep.subr.mxu0 0.0
        %3826 = vmatpush1.msra.mxu0 0.0
        %3827 = vmatprep.subr.mxu0 0.0
        %3828 = vmatpush1.msra.mxu0 0.0
        %3829 = vmatprep.subr.mxu0 0.0
        %3830 = vmatpush1.msra.mxu0 0.0
        %3831 = vmatprep.subr.mxu0 0.0
        %3832 = vmatpush1.msra.mxu0 0.0
        %3833 = vmatprep.subr.mxu0 0.0
        %3834 = vmatpush1.msra.mxu0 0.0
        %3835 = vmatprep.subr.mxu0 0.0
        %3836 = vmatpush1.msra.mxu0 0.0
        %3837 = vmatprep.subr.mxu0 0.0
        %3838 = vmatpush1.msra.mxu0 0.0
        %3839 = vmatprep.subr.mxu0 0.0
        %3840 = vmatpush1.msra.mxu0 0.0
        %3841 = vmatprep.subr.mxu0 0.0
        %3842 = vmatpush1.msra.mxu0 0.0
        %3843 = vmatprep.subr.mxu0 0.0
        %3844 = vmatpush1.msra.mxu0 0.0
        %3845 = vmatprep.subr.mxu0 0.0
        %3846 = vmatpush1.msra.mxu0 0.0
        %3847 = vmatprep.subr.mxu0 0.0
        %3848 = vmatpush1.msra.mxu0 0.0
        %3849 = vmatprep.subr.mxu0 0.0
        %3850 = vmatpush1.msra.mxu0 0.0
        %3851 = vmatprep.subr.mxu0 0.0
        %3852 = vmatpush1.msra.mxu0 0.0
        %3853 = vmatprep.subr.mxu0 0.0
        %3854 = vmatpush1.msra.mxu0 0.0
        %3855 = vmatprep.subr.mxu0 0.0
        %3856 = vmatpush1.msra.mxu0 0.0
        %3857 = vmatprep.subr.mxu0 0.0
        %3858 = vmatpush1.msra.mxu0 0.0
        %3859 = vmatprep.subr.mxu0 0.0
        %3860 = vmatpush1.msra.mxu0 0.0
        %3861 = vmatprep.subr.mxu0 0.0
        %3862 = vmatpush1.msra.mxu0 0.0
        %3863 = vmatprep.subr.mxu0 0.0
        %3864 = vmatpush1.msra.mxu0 0.0
        %3865 = vmatprep.subr.mxu0 0.0
        %3866 = vmatpush1.msra.mxu0 0.0
        %3867 = vmatprep.subr.mxu0 0.0
        %3868 = vmatpush1.msra.mxu0 0.0
        %3869 = vmatprep.subr.mxu0 0.0
        %3870 = vmatpush1.msra.mxu0 0.0
        %3871 = vmatprep.subr.mxu0 0.0
        %3872 = vmatpush1.msra.mxu0 0.0
        %3873 = vmatprep.subr.mxu0 0.0
        %3874 = vmatpush1.msra.mxu0 0.0
        %3875 = vmatprep.subr.mxu0 0.0
        %3876 = vmatpush1.msra.mxu0 0.0
        %3877 = vmatprep.subr.mxu0 0.0
        %3878 = vmatpush1.msra.mxu0 0.0
        %3879 = vmatprep.subr.mxu0 0.0
        %3880 = vmatpush1.msra.mxu0 0.0
        %3881 = vmatprep.mubr.f32.mxu0 0.0
        %3882 = vmatmul.mubr.f32.gmra.mrb[0].mxu0 %v3362
        %v3883 = vpop.f32.mrb[0].mxu0
        %v3884 = vadd.f32 0.0, %v3883
        %v3885 = vpop.f32.mrb[0].mxu0
        %3886 = vmatprep.mubr.f32.mxu0 0.0
        %3887 = vmatmul.mubr.f32.gmra.mrb[0].mxu0 %v3365
        %v3888 = vpop.f32.mrb[0].mxu0
        %v3889 = vadd.f32 0.0, %v3888
        %v3890 = vpop.f32.mrb[0].mxu0
        %3891 = vdwg.mxu0
        %3892 = vmatprep.subr.mxu0 0.0
        %3893 = vmatpush1.msra.mxu0 %v3355
        %3894 = vmatprep.subr.mxu0 0.0
        %3895 = vmatpush1.msra.mxu0 %v3356
        %3896 = vmatprep.subr.mxu0 0.0
        %3897 = vmatpush1.msra.mxu0 0.0
        %3898 = vmatprep.subr.mxu0 0.0
        %3899 = vmatpush1.msra.mxu0 0.0
        %3900 = vmatprep.subr.mxu0 0.0
        %3901 = vmatpush1.msra.mxu0 0.0
        %3902 = vmatprep.subr.mxu0 0.0
        %3903 = vmatpush1.msra.mxu0 0.0
        %3904 = vmatprep.subr.mxu0 0.0
        %3905 = vmatpush1.msra.mxu0 0.0
        %3906 = vmatprep.subr.mxu0 0.0
        %3907 = vmatpush1.msra.mxu0 0.0
        %3908 = vmatprep.subr.mxu0 0.0
        %3909 = vmatpush1.msra.mxu0 0.0
        %3910 = vmatprep.subr.mxu0 0.0
        %3911 = vmatpush1.msra.mxu0 0.0
        %3912 = vmatprep.subr.mxu0 0.0
        %3913 = vmatpush1.msra.mxu0 0.0
        %3914 = vmatprep.subr.mxu0 0.0
        %3915 = vmatpush1.msra.mxu0 0.0
        %3916 = vmatprep.subr.mxu0 0.0
        %3917 = vmatpush1.msra.mxu0 0.0
        %3918 = vmatprep.subr.mxu0 0.0
        %3919 = vmatpush1.msra.mxu0 0.0
        %3920 = vmatprep.subr.mxu0 0.0
        %3921 = vmatpush1.msra.mxu0 0.0
        %3922 = vmatprep.subr.mxu0 0.0
        %3923 = vmatpush1.msra.mxu0 0.0
        %3924 = vmatprep.subr.mxu0 0.0
        %3925 = vmatpush1.msra.mxu0 0.0
        %3926 = vmatprep.subr.mxu0 0.0
        %3927 = vmatpush1.msra.mxu0 0.0
        %3928 = vmatprep.subr.mxu0 0.0
        %3929 = vmatpush1.msra.mxu0 0.0
        %3930 = vmatprep.subr.mxu0 0.0
        %3931 = vmatpush1.msra.mxu0 0.0
        %3932 = vmatprep.subr.mxu0 0.0
        %3933 = vmatpush1.msra.mxu0 0.0
        %3934 = vmatprep.subr.mxu0 0.0
        %3935 = vmatpush1.msra.mxu0 0.0
        %3936 = vmatprep.subr.mxu0 0.0
        %3937 = vmatpush1.msra.mxu0 0.0
        %3938 = vmatprep.subr.mxu0 0.0
        %3939 = vmatpush1.msra.mxu0 0.0
        %3940 = vmatprep.subr.mxu0 0.0
        %3941 = vmatpush1.msra.mxu0 0.0
        %3942 = vmatprep.subr.mxu0 0.0
        %3943 = vmatpush1.msra.mxu0 0.0
        %3944 = vmatprep.subr.mxu0 0.0
        %3945 = vmatpush1.msra.mxu0 0.0
        %3946 = vmatprep.subr.mxu0 0.0
        %3947 = vmatpush1.msra.mxu0 0.0
        %3948 = vmatprep.subr.mxu0 0.0
        %3949 = vmatpush1.msra.mxu0 0.0
        %3950 = vmatprep.subr.mxu0 0.0
        %3951 = vmatpush1.msra.mxu0 0.0
        %3952 = vmatprep.subr.mxu0 0.0
        %3953 = vmatpush1.msra.mxu0 0.0
        %3954 = vmatprep.subr.mxu0 0.0
        %3955 = vmatpush1.msra.mxu0 0.0
        %3956 = vmatprep.mubr.f32.mxu0 0.0
        %3957 = vmatmul.mubr.f32.gmra.mrb[0].mxu0 %v3362
        %v3958 = vpop.f32.mrb[0].mxu0
        %v3959 = vadd.f32 0.0, %v3958
        %v3960 = vpop.f32.mrb[0].mxu0
        %3961 = vmatprep.mubr.f32.mxu0 0.0
        %3962 = vmatmul.mubr.f32.gmra.mrb[0].mxu0 %v3365
        %v3963 = vpop.f32.mrb[0].mxu0
        %v3964 = vadd.f32 0.0, %v3963
        %v3965 = vpop.f32.mrb[0].mxu0
        %3966 = vdwg.mxu0
        %v3968 = vsel %vm592, %v3357, 0
        %v3971 = vsel %vm592, %v3358, 0
        %3973 = vmatprep.subr.mxu0 0.0
        %3974 = vmatpush1.msra.mxu0 %v3325
        %3975 = vmatprep.subr.mxu0 0.0
        %3976 = vmatpush1.msra.mxu0 %v3326
        %3977 = vmatprep.subr.mxu0 0.0
        %3978 = vmatpush1.msra.mxu0 0.0
        %3979 = vmatprep.subr.mxu0 0.0
        %3980 = vmatpush1.msra.mxu0 0.0
        %3981 = vmatprep.subr.mxu0 0.0
        %3982 = vmatpush1.msra.mxu0 0.0
        %3983 = vmatprep.subr.mxu0 0.0
        %3984 = vmatpush1.msra.mxu0 0.0
        %3985 = vmatprep.subr.mxu0 0.0
        %3986 = vmatpush1.msra.mxu0 0.0
        %3987 = vmatprep.subr.mxu0 0.0
        %3988 = vmatpush1.msra.mxu0 0.0
        %3989 = vmatprep.subr.mxu0 0.0
        %3990 = vmatpush1.msra.mxu0 0.0
        %3991 = vmatprep.subr.mxu0 0.0
        %3992 = vmatpush1.msra.mxu0 0.0
        %3993 = vmatprep.subr.mxu0 0.0
        %3994 = vmatpush1.msra.mxu0 0.0
        %3995 = vmatprep.subr.mxu0 0.0
        %3996 = vmatpush1.msra.mxu0 0.0
        %3997 = vmatprep.subr.mxu0 0.0
        %3998 = vmatpush1.msra.mxu0 0.0
        %3999 = vmatprep.subr.mxu0 0.0
        %4000 = vmatpush1.msra.mxu0 0.0
        %4001 = vmatprep.subr.mxu0 0.0
        %4002 = vmatpush1.msra.mxu0 0.0
        %4003 = vmatprep.subr.mxu0 0.0
        %4004 = vmatpush1.msra.mxu0 0.0
        %4005 = vmatprep.subr.mxu0 0.0
        %4006 = vmatpush1.msra.mxu0 0.0
        %4007 = vmatprep.subr.mxu0 0.0
        %4008 = vmatpush1.msra.mxu0 0.0
        %4009 = vmatprep.subr.mxu0 0.0
        %4010 = vmatpush1.msra.mxu0 0.0
        %4011 = vmatprep.subr.mxu0 0.0
        %4012 = vmatpush1.msra.mxu0 0.0
        %4013 = vmatprep.subr.mxu0 0.0
        %4014 = vmatpush1.msra.mxu0 0.0
        %4015 = vmatprep.subr.mxu0 0.0
        %4016 = vmatpush1.msra.mxu0 0.0
        %4017 = vmatprep.subr.mxu0 0.0
        %4018 = vmatpush1.msra.mxu0 0.0
        %4019 = vmatprep.subr.mxu0 0.0
        %4020 = vmatpush1.msra.mxu0 0.0
        %4021 = vmatprep.subr.mxu0 0.0
        %4022 = vmatpush1.msra.mxu0 0.0
        %4023 = vmatprep.subr.mxu0 0.0
        %4024 = vmatpush1.msra.mxu0 0.0
        %4025 = vmatprep.subr.mxu0 0.0
        %4026 = vmatpush1.msra.mxu0 0.0
        %4027 = vmatprep.subr.mxu0 0.0
        %4028 = vmatpush1.msra.mxu0 0.0
        %4029 = vmatprep.subr.mxu0 0.0
        %4030 = vmatpush1.msra.mxu0 0.0
        %4031 = vmatprep.subr.mxu0 0.0
        %4032 = vmatpush1.msra.mxu0 0.0
        %4033 = vmatprep.subr.mxu0 0.0
        %4034 = vmatpush1.msra.mxu0 0.0
        %4035 = vmatprep.subr.mxu0 0.0
        %4036 = vmatpush1.msra.mxu0 0.0
        %4037 = vmatprep.mubr.f32.mxu0 0.0
        %4038 = vmatmul.mubr.f32.gmra.mrb[0].mxu0 %v3968
        %v4039 = vpop.f32.mrb[0].mxu0
        %v4040 = vadd.f32 %v3434, %v4039
        %v4041 = vpop.f32.mrb[0].mxu0
        %4042 = vmatprep.mubr.f32.mxu0 0.0
        %4043 = vmatmul.mubr.f32.gmra.mrb[0].mxu0 %v3971
        %v4044 = vpop.f32.mrb[0].mxu0
        %v4045 = vadd.f32 %v3439, %v4044
        %v4046 = vpop.f32.mrb[0].mxu0
        %4047 = vdwg.mxu0
        %4048 = vmatprep.subr.mxu0 0.0
        %4049 = vmatpush1.msra.mxu0 %v3327
        %4050 = vmatprep.subr.mxu0 0.0
        %4051 = vmatpush1.msra.mxu0 %v3328
        %4052 = vmatprep.subr.mxu0 0.0
        %4053 = vmatpush1.msra.mxu0 0.0
        %4054 = vmatprep.subr.mxu0 0.0
        %4055 = vmatpush1.msra.mxu0 0.0
        %4056 = vmatprep.subr.mxu0 0.0
        %4057 = vmatpush1.msra.mxu0 0.0
        %4058 = vmatprep.subr.mxu0 0.0
        %4059 = vmatpush1.msra.mxu0 0.0
        %4060 = vmatprep.subr.mxu0 0.0
        %4061 = vmatpush1.msra.mxu0 0.0
        %4062 = vmatprep.subr.mxu0 0.0
        %4063 = vmatpush1.msra.mxu0 0.0
        %4064 = vmatprep.subr.mxu0 0.0
        %4065 = vmatpush1.msra.mxu0 0.0
        %4066 = vmatprep.subr.mxu0 0.0
        %4067 = vmatpush1.msra.mxu0 0.0
        %4068 = vmatprep.subr.mxu0 0.0
        %4069 = vmatpush1.msra.mxu0 0.0
        %4070 = vmatprep.subr.mxu0 0.0
        %4071 = vmatpush1.msra.mxu0 0.0
        %4072 = vmatprep.subr.mxu0 0.0
        %4073 = vmatpush1.msra.mxu0 0.0
        %4074 = vmatprep.subr.mxu0 0.0
        %4075 = vmatpush1.msra.mxu0 0.0
        %4076 = vmatprep.subr.mxu0 0.0
        %4077 = vmatpush1.msra.mxu0 0.0
        %4078 = vmatprep.subr.mxu0 0.0
        %4079 = vmatpush1.msra.mxu0 0.0
        %4080 = vmatprep.subr.mxu0 0.0
        %4081 = vmatpush1.msra.mxu0 0.0
        %4082 = vmatprep.subr.mxu0 0.0
        %4083 = vmatpush1.msra.mxu0 0.0
        %4084 = vmatprep.subr.mxu0 0.0
        %4085 = vmatpush1.msra.mxu0 0.0
        %4086 = vmatprep.subr.mxu0 0.0
        %4087 = vmatpush1.msra.mxu0 0.0
        %4088 = vmatprep.subr.mxu0 0.0
        %4089 = vmatpush1.msra.mxu0 0.0
        %4090 = vmatprep.subr.mxu0 0.0
        %4091 = vmatpush1.msra.mxu0 0.0
        %4092 = vmatprep.subr.mxu0 0.0
        %4093 = vmatpush1.msra.mxu0 0.0
        %4094 = vmatprep.subr.mxu0 0.0
        %4095 = vmatpush1.msra.mxu0 0.0
        %4096 = vmatprep.subr.mxu0 0.0
        %4097 = vmatpush1.msra.mxu0 0.0
        %4098 = vmatprep.subr.mxu0 0.0
        %4099 = vmatpush1.msra.mxu0 0.0
        %4100 = vmatprep.subr.mxu0 0.0
        %4101 = vmatpush1.msra.mxu0 0.0
        %4102 = vmatprep.subr.mxu0 0.0
        %4103 = vmatpush1.msra.mxu0 0.0
        %4104 = vmatprep.subr.mxu0 0.0
        %4105 = vmatpush1.msra.mxu0 0.0
        %4106 = vmatprep.subr.mxu0 0.0
        %4107 = vmatpush1.msra.mxu0 0.0
        %4108 = vmatprep.subr.mxu0 0.0
        %4109 = vmatpush1.msra.mxu0 0.0
        %4110 = vmatprep.subr.mxu0 0.0
        %4111 = vmatpush1.msra.mxu0 0.0
        %4112 = vmatprep.mubr.f32.mxu0 0.0
        %4113 = vmatmul.mubr.f32.gmra.mrb[0].mxu0 %v3968
        %v4114 = vpop.f32.mrb[0].mxu0
        %v4115 = vadd.f32 %v3509, %v4114
        %v4116 = vpop.f32.mrb[0].mxu0
        %4117 = vmatprep.mubr.f32.mxu0 0.0
        %4118 = vmatmul.mubr.f32.gmra.mrb[0].mxu0 %v3971
        %v4119 = vpop.f32.mrb[0].mxu0
        %v4120 = vadd.f32 %v3514, %v4119
        %v4121 = vpop.f32.mrb[0].mxu0
        %4122 = vdwg.mxu0
        %4123 = vmatprep.subr.mxu0 0.0
        %4124 = vmatpush1.msra.mxu0 %v3329
        %4125 = vmatprep.subr.mxu0 0.0
        %4126 = vmatpush1.msra.mxu0 %v3330
        %4127 = vmatprep.subr.mxu0 0.0
        %4128 = vmatpush1.msra.mxu0 0.0
        %4129 = vmatprep.subr.mxu0 0.0
        %4130 = vmatpush1.msra.mxu0 0.0
        %4131 = vmatprep.subr.mxu0 0.0
        %4132 = vmatpush1.msra.mxu0 0.0
        %4133 = vmatprep.subr.mxu0 0.0
        %4134 = vmatpush1.msra.mxu0 0.0
        %4135 = vmatprep.subr.mxu0 0.0
        %4136 = vmatpush1.msra.mxu0 0.0
        %4137 = vmatprep.subr.mxu0 0.0
        %4138 = vmatpush1.msra.mxu0 0.0
        %4139 = vmatprep.subr.mxu0 0.0
        %4140 = vmatpush1.msra.mxu0 0.0
        %4141 = vmatprep.subr.mxu0 0.0
        %4142 = vmatpush1.msra.mxu0 0.0
        %4143 = vmatprep.subr.mxu0 0.0
        %4144 = vmatpush1.msra.mxu0 0.0
        %4145 = vmatprep.subr.mxu0 0.0
        %4146 = vmatpush1.msra.mxu0 0.0
        %4147 = vmatprep.subr.mxu0 0.0
        %4148 = vmatpush1.msra.mxu0 0.0
        %4149 = vmatprep.subr.mxu0 0.0
        %4150 = vmatpush1.msra.mxu0 0.0
        %4151 = vmatprep.subr.mxu0 0.0
        %4152 = vmatpush1.msra.mxu0 0.0
        %4153 = vmatprep.subr.mxu0 0.0
        %4154 = vmatpush1.msra.mxu0 0.0
        %4155 = vmatprep.subr.mxu0 0.0
        %4156 = vmatpush1.msra.mxu0 0.0
        %4157 = vmatprep.subr.mxu0 0.0
        %4158 = vmatpush1.msra.mxu0 0.0
        %4159 = vmatprep.subr.mxu0 0.0
        %4160 = vmatpush1.msra.mxu0 0.0
        %4161 = vmatprep.subr.mxu0 0.0
        %4162 = vmatpush1.msra.mxu0 0.0
        %4163 = vmatprep.subr.mxu0 0.0
        %4164 = vmatpush1.msra.mxu0 0.0
        %4165 = vmatprep.subr.mxu0 0.0
        %4166 = vmatpush1.msra.mxu0 0.0
        %4167 = vmatprep.subr.mxu0 0.0
        %4168 = vmatpush1.msra.mxu0 0.0
        %4169 = vmatprep.subr.mxu0 0.0
        %4170 = vmatpush1.msra.mxu0 0.0
        %4171 = vmatprep.subr.mxu0 0.0
        %4172 = vmatpush1.msra.mxu0 0.0
        %4173 = vmatprep.subr.mxu0 0.0
        %4174 = vmatpush1.msra.mxu0 0.0
        %4175 = vmatprep.subr.mxu0 0.0
        %4176 = vmatpush1.msra.mxu0 0.0
        %4177 = vmatprep.subr.mxu0 0.0
        %4178 = vmatpush1.msra.mxu0 0.0
        %4179 = vmatprep.subr.mxu0 0.0
        %4180 = vmatpush1.msra.mxu0 0.0
        %4181 = vmatprep.subr.mxu0 0.0
        %4182 = vmatpush1.msra.mxu0 0.0
        %4183 = vmatprep.subr.mxu0 0.0
        %4184 = vmatpush1.msra.mxu0 0.0
        %4185 = vmatprep.subr.mxu0 0.0
        %4186 = vmatpush1.msra.mxu0 0.0
        %4187 = vmatprep.mubr.f32.mxu0 0.0
        %4188 = vmatmul.mubr.f32.gmra.mrb[0].mxu0 %v3968
        %v4189 = vpop.f32.mrb[0].mxu0
        %v4190 = vadd.f32 %v3584, %v4189
        %v4191 = vpop.f32.mrb[0].mxu0
        %4192 = vmatprep.mubr.f32.mxu0 0.0
        %4193 = vmatmul.mubr.f32.gmra.mrb[0].mxu0 %v3971
        %v4194 = vpop.f32.mrb[0].mxu0
        %v4195 = vadd.f32 %v3589, %v4194
        %v4196 = vpop.f32.mrb[0].mxu0
        %4197 = vdwg.mxu0
        %4198 = vmatprep.subr.mxu0 0.0
        %4199 = vmatpush1.msra.mxu0 %v3331
        %4200 = vmatprep.subr.mxu0 0.0
        %4201 = vmatpush1.msra.mxu0 %v3332
        %4202 = vmatprep.subr.mxu0 0.0
        %4203 = vmatpush1.msra.mxu0 0.0
        %4204 = vmatprep.subr.mxu0 0.0
        %4205 = vmatpush1.msra.mxu0 0.0
        %4206 = vmatprep.subr.mxu0 0.0
        %4207 = vmatpush1.msra.mxu0 0.0
        %4208 = vmatprep.subr.mxu0 0.0
        %4209 = vmatpush1.msra.mxu0 0.0
        %4210 = vmatprep.subr.mxu0 0.0
        %4211 = vmatpush1.msra.mxu0 0.0
        %4212 = vmatprep.subr.mxu0 0.0
        %4213 = vmatpush1.msra.mxu0 0.0
        %4214 = vmatprep.subr.mxu0 0.0
        %4215 = vmatpush1.msra.mxu0 0.0
        %4216 = vmatprep.subr.mxu0 0.0
        %4217 = vmatpush1.msra.mxu0 0.0
        %4218 = vmatprep.subr.mxu0 0.0
        %4219 = vmatpush1.msra.mxu0 0.0
        %4220 = vmatprep.subr.mxu0 0.0
        %4221 = vmatpush1.msra.mxu0 0.0
        %4222 = vmatprep.subr.mxu0 0.0
        %4223 = vmatpush1.msra.mxu0 0.0
        %4224 = vmatprep.subr.mxu0 0.0
        %4225 = vmatpush1.msra.mxu0 0.0
        %4226 = vmatprep.subr.mxu0 0.0
        %4227 = vmatpush1.msra.mxu0 0.0
        %4228 = vmatprep.subr.mxu0 0.0
        %4229 = vmatpush1.msra.mxu0 0.0
        %4230 = vmatprep.subr.mxu0 0.0
        %4231 = vmatpush1.msra.mxu0 0.0
        %4232 = vmatprep.subr.mxu0 0.0
        %4233 = vmatpush1.msra.mxu0 0.0
        %4234 = vmatprep.subr.mxu0 0.0
        %4235 = vmatpush1.msra.mxu0 0.0
        %4236 = vmatprep.subr.mxu0 0.0
        %4237 = vmatpush1.msra.mxu0 0.0
        %4238 = vmatprep.subr.mxu0 0.0
        %4239 = vmatpush1.msra.mxu0 0.0
        %4240 = vmatprep.subr.mxu0 0.0
        %4241 = vmatpush1.msra.mxu0 0.0
        %4242 = vmatprep.subr.mxu0 0.0
        %4243 = vmatpush1.msra.mxu0 0.0
        %4244 = vmatprep.subr.mxu0 0.0
        %4245 = vmatpush1.msra.mxu0 0.0
        %4246 = vmatprep.subr.mxu0 0.0
        %4247 = vmatpush1.msra.mxu0 0.0
        %4248 = vmatprep.subr.mxu0 0.0
        %4249 = vmatpush1.msra.mxu0 0.0
        %4250 = vmatprep.subr.mxu0 0.0
        %4251 = vmatpush1.msra.mxu0 0.0
        %4252 = vmatprep.subr.mxu0 0.0
        %4253 = vmatpush1.msra.mxu0 0.0
        %4254 = vmatprep.subr.mxu0 0.0
        %4255 = vmatpush1.msra.mxu0 0.0
        %4256 = vmatprep.subr.mxu0 0.0
        %4257 = vmatpush1.msra.mxu0 0.0
        %4258 = vmatprep.subr.mxu0 0.0
        %4259 = vmatpush1.msra.mxu0 0.0
        %4260 = vmatprep.subr.mxu0 0.0
        %4261 = vmatpush1.msra.mxu0 0.0
        %4262 = vmatprep.mubr.f32.mxu0 0.0
        %4263 = vmatmul.mubr.f32.gmra.mrb[0].mxu0 %v3968
        %v4264 = vpop.f32.mrb[0].mxu0
        %v4265 = vadd.f32 %v3659, %v4264
        %v4266 = vpop.f32.mrb[0].mxu0
        %4267 = vmatprep.mubr.f32.mxu0 0.0
        %4268 = vmatmul.mubr.f32.gmra.mrb[0].mxu0 %v3971
        %v4269 = vpop.f32.mrb[0].mxu0
        %v4270 = vadd.f32 %v3664, %v4269
        %v4271 = vpop.f32.mrb[0].mxu0
        %4272 = vdwg.mxu0
        %4273 = vmatprep.subr.mxu0 0.0
        %4274 = vmatpush1.msra.mxu0 %v3333
        %4275 = vmatprep.subr.mxu0 0.0
        %4276 = vmatpush1.msra.mxu0 %v3334
        %4277 = vmatprep.subr.mxu0 0.0
        %4278 = vmatpush1.msra.mxu0 0.0
        %4279 = vmatprep.subr.mxu0 0.0
        %4280 = vmatpush1.msra.mxu0 0.0
        %4281 = vmatprep.subr.mxu0 0.0
        %4282 = vmatpush1.msra.mxu0 0.0
        %4283 = vmatprep.subr.mxu0 0.0
        %4284 = vmatpush1.msra.mxu0 0.0
        %4285 = vmatprep.subr.mxu0 0.0
        %4286 = vmatpush1.msra.mxu0 0.0
        %4287 = vmatprep.subr.mxu0 0.0
        %4288 = vmatpush1.msra.mxu0 0.0
        %4289 = vmatprep.subr.mxu0 0.0
        %4290 = vmatpush1.msra.mxu0 0.0
        %4291 = vmatprep.subr.mxu0 0.0
        %4292 = vmatpush1.msra.mxu0 0.0
        %4293 = vmatprep.subr.mxu0 0.0
        %4294 = vmatpush1.msra.mxu0 0.0
        %4295 = vmatprep.subr.mxu0 0.0
        %4296 = vmatpush1.msra.mxu0 0.0
        %4297 = vmatprep.subr.mxu0 0.0
        %4298 = vmatpush1.msra.mxu0 0.0
        %4299 = vmatprep.subr.mxu0 0.0
        %4300 = vmatpush1.msra.mxu0 0.0
        %4301 = vmatprep.subr.mxu0 0.0
        %4302 = vmatpush1.msra.mxu0 0.0
        %4303 = vmatprep.subr.mxu0 0.0
        %4304 = vmatpush1.msra.mxu0 0.0
        %4305 = vmatprep.subr.mxu0 0.0
        %4306 = vmatpush1.msra.mxu0 0.0
        %4307 = vmatprep.subr.mxu0 0.0
        %4308 = vmatpush1.msra.mxu0 0.0
        %4309 = vmatprep.subr.mxu0 0.0
        %4310 = vmatpush1.msra.mxu0 0.0
        %4311 = vmatprep.subr.mxu0 0.0
        %4312 = vmatpush1.msra.mxu0 0.0
        %4313 = vmatprep.subr.mxu0 0.0
        %4314 = vmatpush1.msra.mxu0 0.0
        %4315 = vmatprep.subr.mxu0 0.0
        %4316 = vmatpush1.msra.mxu0 0.0
        %4317 = vmatprep.subr.mxu0 0.0
        %4318 = vmatpush1.msra.mxu0 0.0
        %4319 = vmatprep.subr.mxu0 0.0
        %4320 = vmatpush1.msra.mxu0 0.0
        %4321 = vmatprep.subr.mxu0 0.0
        %4322 = vmatpush1.msra.mxu0 0.0
        %4323 = vmatprep.subr.mxu0 0.0
        %4324 = vmatpush1.msra.mxu0 0.0
        %4325 = vmatprep.subr.mxu0 0.0
        %4326 = vmatpush1.msra.mxu0 0.0
        %4327 = vmatprep.subr.mxu0 0.0
        %4328 = vmatpush1.msra.mxu0 0.0
        %4329 = vmatprep.subr.mxu0 0.0
        %4330 = vmatpush1.msra.mxu0 0.0
        %4331 = vmatprep.subr.mxu0 0.0
        %4332 = vmatpush1.msra.mxu0 0.0
        %4333 = vmatprep.subr.mxu0 0.0
        %4334 = vmatpush1.msra.mxu0 0.0
        %4335 = vmatprep.subr.mxu0 0.0
        %4336 = vmatpush1.msra.mxu0 0.0
        %4337 = vmatprep.mubr.f32.mxu0 0.0
        %4338 = vmatmul.mubr.f32.gmra.mrb[0].mxu0 %v3968
        %v4339 = vpop.f32.mrb[0].mxu0
        %v4340 = vadd.f32 %v3734, %v4339
        %v4341 = vpop.f32.mrb[0].mxu0
        %4342 = vmatprep.mubr.f32.mxu0 0.0
        %4343 = vmatmul.mubr.f32.gmra.mrb[0].mxu0 %v3971
        %v4344 = vpop.f32.mrb[0].mxu0
        %v4345 = vadd.f32 %v3739, %v4344
        %v4346 = vpop.f32.mrb[0].mxu0
        %4347 = vdwg.mxu0
        %4348 = vmatprep.subr.mxu0 0.0
        %4349 = vmatpush1.msra.mxu0 %v3335
        %4350 = vmatprep.subr.mxu0 0.0
        %4351 = vmatpush1.msra.mxu0 %v3336
        %4352 = vmatprep.subr.mxu0 0.0
        %4353 = vmatpush1.msra.mxu0 0.0
        %4354 = vmatprep.subr.mxu0 0.0
        %4355 = vmatpush1.msra.mxu0 0.0
        %4356 = vmatprep.subr.mxu0 0.0
        %4357 = vmatpush1.msra.mxu0 0.0
        %4358 = vmatprep.subr.mxu0 0.0
        %4359 = vmatpush1.msra.mxu0 0.0
        %4360 = vmatprep.subr.mxu0 0.0
        %4361 = vmatpush1.msra.mxu0 0.0
        %4362 = vmatprep.subr.mxu0 0.0
        %4363 = vmatpush1.msra.mxu0 0.0
        %4364 = vmatprep.subr.mxu0 0.0
        %4365 = vmatpush1.msra.mxu0 0.0
        %4366 = vmatprep.subr.mxu0 0.0
        %4367 = vmatpush1.msra.mxu0 0.0
        %4368 = vmatprep.subr.mxu0 0.0
        %4369 = vmatpush1.msra.mxu0 0.0
        %4370 = vmatprep.subr.mxu0 0.0
        %4371 = vmatpush1.msra.mxu0 0.0
        %4372 = vmatprep.subr.mxu0 0.0
        %4373 = vmatpush1.msra.mxu0 0.0
        %4374 = vmatprep.subr.mxu0 0.0
        %4375 = vmatpush1.msra.mxu0 0.0
        %4376 = vmatprep.subr.mxu0 0.0
        %4377 = vmatpush1.msra.mxu0 0.0
        %4378 = vmatprep.subr.mxu0 0.0
        %4379 = vmatpush1.msra.mxu0 0.0
        %4380 = vmatprep.subr.mxu0 0.0
        %4381 = vmatpush1.msra.mxu0 0.0
        %4382 = vmatprep.subr.mxu0 0.0
        %4383 = vmatpush1.msra.mxu0 0.0
        %4384 = vmatprep.subr.mxu0 0.0
        %4385 = vmatpush1.msra.mxu0 0.0
        %4386 = vmatprep.subr.mxu0 0.0
        %4387 = vmatpush1.msra.mxu0 0.0
        %4388 = vmatprep.subr.mxu0 0.0
        %4389 = vmatpush1.msra.mxu0 0.0
        %4390 = vmatprep.subr.mxu0 0.0
        %4391 = vmatpush1.msra.mxu0 0.0
        %4392 = vmatprep.subr.mxu0 0.0
        %4393 = vmatpush1.msra.mxu0 0.0
        %4394 = vmatprep.subr.mxu0 0.0
        %4395 = vmatpush1.msra.mxu0 0.0
        %4396 = vmatprep.subr.mxu0 0.0
        %4397 = vmatpush1.msra.mxu0 0.0
        %4398 = vmatprep.subr.mxu0 0.0
        %4399 = vmatpush1.msra.mxu0 0.0
        %4400 = vmatprep.subr.mxu0 0.0
        %4401 = vmatpush1.msra.mxu0 0.0
        %4402 = vmatprep.subr.mxu0 0.0
        %4403 = vmatpush1.msra.mxu0 0.0
        %4404 = vmatprep.subr.mxu0 0.0
        %4405 = vmatpush1.msra.mxu0 0.0
        %4406 = vmatprep.subr.mxu0 0.0
        %4407 = vmatpush1.msra.mxu0 0.0
        %4408 = vmatprep.subr.mxu0 0.0
        %4409 = vmatpush1.msra.mxu0 0.0
        %4410 = vmatprep.subr.mxu0 0.0
        %4411 = vmatpush1.msra.mxu0 0.0
        %4412 = vmatprep.mubr.f32.mxu0 0.0
        %4413 = vmatmul.mubr.f32.gmra.mrb[0].mxu0 %v3968
        %v4414 = vpop.f32.mrb[0].mxu0
        %v4415 = vadd.f32 %v3809, %v4414
        %v4416 = vpop.f32.mrb[0].mxu0
        %4417 = vmatprep.mubr.f32.mxu0 0.0
        %4418 = vmatmul.mubr.f32.gmra.mrb[0].mxu0 %v3971
        %v4419 = vpop.f32.mrb[0].mxu0
        %v4420 = vadd.f32 %v3814, %v4419
        %v4421 = vpop.f32.mrb[0].mxu0
        %4422 = vdwg.mxu0
        %4423 = vmatprep.subr.mxu0 0.0
        %4424 = vmatpush1.msra.mxu0 %v3337
        %4425 = vmatprep.subr.mxu0 0.0
        %4426 = vmatpush1.msra.mxu0 %v3338
        %4427 = vmatprep.subr.mxu0 0.0
        %4428 = vmatpush1.msra.mxu0 0.0
        %4429 = vmatprep.subr.mxu0 0.0
        %4430 = vmatpush1.msra.mxu0 0.0
        %4431 = vmatprep.subr.mxu0 0.0
        %4432 = vmatpush1.msra.mxu0 0.0
        %4433 = vmatprep.subr.mxu0 0.0
        %4434 = vmatpush1.msra.mxu0 0.0
        %4435 = vmatprep.subr.mxu0 0.0
        %4436 = vmatpush1.msra.mxu0 0.0
        %4437 = vmatprep.subr.mxu0 0.0
        %4438 = vmatpush1.msra.mxu0 0.0
        %4439 = vmatprep.subr.mxu0 0.0
        %4440 = vmatpush1.msra.mxu0 0.0
        %4441 = vmatprep.subr.mxu0 0.0
        %4442 = vmatpush1.msra.mxu0 0.0
        %4443 = vmatprep.subr.mxu0 0.0
        %4444 = vmatpush1.msra.mxu0 0.0
        %4445 = vmatprep.subr.mxu0 0.0
        %4446 = vmatpush1.msra.mxu0 0.0
        %4447 = vmatprep.subr.mxu0 0.0
        %4448 = vmatpush1.msra.mxu0 0.0
        %4449 = vmatprep.subr.mxu0 0.0
        %4450 = vmatpush1.msra.mxu0 0.0
        %4451 = vmatprep.subr.mxu0 0.0
        %4452 = vmatpush1.msra.mxu0 0.0
        %4453 = vmatprep.subr.mxu0 0.0
        %4454 = vmatpush1.msra.mxu0 0.0
        %4455 = vmatprep.subr.mxu0 0.0
        %4456 = vmatpush1.msra.mxu0 0.0
        %4457 = vmatprep.subr.mxu0 0.0
        %4458 = vmatpush1.msra.mxu0 0.0
        %4459 = vmatprep.subr.mxu0 0.0
        %4460 = vmatpush1.msra.mxu0 0.0
        %4461 = vmatprep.subr.mxu0 0.0
        %4462 = vmatpush1.msra.mxu0 0.0
        %4463 = vmatprep.subr.mxu0 0.0
        %4464 = vmatpush1.msra.mxu0 0.0
        %4465 = vmatprep.subr.mxu0 0.0
        %4466 = vmatpush1.msra.mxu0 0.0
        %4467 = vmatprep.subr.mxu0 0.0
        %4468 = vmatpush1.msra.mxu0 0.0
        %4469 = vmatprep.subr.mxu0 0.0
        %4470 = vmatpush1.msra.mxu0 0.0
        %4471 = vmatprep.subr.mxu0 0.0
        %4472 = vmatpush1.msra.mxu0 0.0
        %4473 = vmatprep.subr.mxu0 0.0
        %4474 = vmatpush1.msra.mxu0 0.0
        %4475 = vmatprep.subr.mxu0 0.0
        %4476 = vmatpush1.msra.mxu0 0.0
        %4477 = vmatprep.subr.mxu0 0.0
        %4478 = vmatpush1.msra.mxu0 0.0
        %4479 = vmatprep.subr.mxu0 0.0
        %4480 = vmatpush1.msra.mxu0 0.0
        %4481 = vmatprep.subr.mxu0 0.0
        %4482 = vmatpush1.msra.mxu0 0.0
        %4483 = vmatprep.subr.mxu0 0.0
        %4484 = vmatpush1.msra.mxu0 0.0
        %4485 = vmatprep.subr.mxu0 0.0
        %4486 = vmatpush1.msra.mxu0 0.0
        %4487 = vmatprep.mubr.f32.mxu0 0.0
        %4488 = vmatmul.mubr.f32.gmra.mrb[0].mxu0 %v3968
        %v4489 = vpop.f32.mrb[0].mxu0
        %v4490 = vadd.f32 %v3884, %v4489
        %v4491 = vpop.f32.mrb[0].mxu0
        %4492 = vmatprep.mubr.f32.mxu0 0.0
        %4493 = vmatmul.mubr.f32.gmra.mrb[0].mxu0 %v3971
        %v4494 = vpop.f32.mrb[0].mxu0
        %v4495 = vadd.f32 %v3889, %v4494
        %v4496 = vpop.f32.mrb[0].mxu0
        %4497 = vdwg.mxu0
        %4498 = vmatprep.subr.mxu0 0.0
        %4499 = vmatpush1.msra.mxu0 %v3339
        %4500 = vmatprep.subr.mxu0 0.0
        %4501 = vmatpush1.msra.mxu0 %v3340
        %4502 = vmatprep.subr.mxu0 0.0
        %4503 = vmatpush1.msra.mxu0 0.0
        %4504 = vmatprep.subr.mxu0 0.0
        %4505 = vmatpush1.msra.mxu0 0.0
        %4506 = vmatprep.subr.mxu0 0.0
        %4507 = vmatpush1.msra.mxu0 0.0
        %4508 = vmatprep.subr.mxu0 0.0
        %4509 = vmatpush1.msra.mxu0 0.0
        %4510 = vmatprep.subr.mxu0 0.0
        %4511 = vmatpush1.msra.mxu0 0.0
        %4512 = vmatprep.subr.mxu0 0.0
        %4513 = vmatpush1.msra.mxu0 0.0
        %4514 = vmatprep.subr.mxu0 0.0
        %4515 = vmatpush1.msra.mxu0 0.0
        %4516 = vmatprep.subr.mxu0 0.0
        %4517 = vmatpush1.msra.mxu0 0.0
        %4518 = vmatprep.subr.mxu0 0.0
        %4519 = vmatpush1.msra.mxu0 0.0
        %4520 = vmatprep.subr.mxu0 0.0
        %4521 = vmatpush1.msra.mxu0 0.0
        %4522 = vmatprep.subr.mxu0 0.0
        %4523 = vmatpush1.msra.mxu0 0.0
        %4524 = vmatprep.subr.mxu0 0.0
        %4525 = vmatpush1.msra.mxu0 0.0
        %4526 = vmatprep.subr.mxu0 0.0
        %4527 = vmatpush1.msra.mxu0 0.0
        %4528 = vmatprep.subr.mxu0 0.0
        %4529 = vmatpush1.msra.mxu0 0.0
        %4530 = vmatprep.subr.mxu0 0.0
        %4531 = vmatpush1.msra.mxu0 0.0
        %4532 = vmatprep.subr.mxu0 0.0
        %4533 = vmatpush1.msra.mxu0 0.0
        %4534 = vmatprep.subr.mxu0 0.0
        %4535 = vmatpush1.msra.mxu0 0.0
        %4536 = vmatprep.subr.mxu0 0.0
        %4537 = vmatpush1.msra.mxu0 0.0
        %4538 = vmatprep.subr.mxu0 0.0
        %4539 = vmatpush1.msra.mxu0 0.0
        %4540 = vmatprep.subr.mxu0 0.0
        %4541 = vmatpush1.msra.mxu0 0.0
        %4542 = vmatprep.subr.mxu0 0.0
        %4543 = vmatpush1.msra.mxu0 0.0
        %4544 = vmatprep.subr.mxu0 0.0
        %4545 = vmatpush1.msra.mxu0 0.0
        %4546 = vmatprep.subr.mxu0 0.0
        %4547 = vmatpush1.msra.mxu0 0.0
        %4548 = vmatprep.subr.mxu0 0.0
        %4549 = vmatpush1.msra.mxu0 0.0
        %4550 = vmatprep.subr.mxu0 0.0
        %4551 = vmatpush1.msra.mxu0 0.0
        %4552 = vmatprep.subr.mxu0 0.0
        %4553 = vmatpush1.msra.mxu0 0.0
        %4554 = vmatprep.subr.mxu0 0.0
        %4555 = vmatpush1.msra.mxu0 0.0
        %4556 = vmatprep.subr.mxu0 0.0
        %4557 = vmatpush1.msra.mxu0 0.0
        %4558 = vmatprep.subr.mxu0 0.0
        %4559 = vmatpush1.msra.mxu0 0.0
        %4560 = vmatprep.subr.mxu0 0.0
        %4561 = vmatpush1.msra.mxu0 0.0
        %4562 = vmatprep.mubr.f32.mxu0 0.0
        %4563 = vmatmul.mubr.f32.gmra.mrb[0].mxu0 %v3968
        %v4564 = vpop.f32.mrb[0].mxu0
        %v4565 = vadd.f32 %v3959, %v4564
        %v4566 = vpop.f32.mrb[0].mxu0
        %4567 = vmatprep.mubr.f32.mxu0 0.0
        %4568 = vmatmul.mubr.f32.gmra.mrb[0].mxu0 %v3971
        %v4569 = vpop.f32.mrb[0].mxu0
        %v4570 = vadd.f32 %v3964, %v4569
        %v4571 = vpop.f32.mrb[0].mxu0
        %4572 = vdwg.mxu0
        %v4573 = vld [vmem:[%s5] sm:$0x1]
        %v4575 = vlaneseq
        %v4576 = vshrl.u32 %v4575, 7
        %v4577 = vsub.s32 0, %v4576
        %v4578 = vrot.slane %v4573, %v4577
        %v4580 = vmul.f32 %v4040, %v4578
        %v4581 = vmul.f32 %v4045, %v4578
        %v4582 = vmul.f32 %v4115, %v4578
        %v4583 = vmul.f32 %v4120, %v4578
        %v4584 = vmul.f32 %v4190, %v4578
        %v4585 = vmul.f32 %v4195, %v4578
        %v4586 = vmul.f32 %v4265, %v4578
        %v4587 = vmul.f32 %v4270, %v4578
        %v4588 = vmul.f32 %v4340, %v4578
        %v4589 = vmul.f32 %v4345, %v4578
        %v4590 = vmul.f32 %v4415, %v4578
        %v4591 = vmul.f32 %v4420, %v4578
        %v4592 = vmul.f32 %v4490, %v4578
        %v4593 = vmul.f32 %v4495, %v4578
        %v4594 = vmul.f32 %v4565, %v4578
        %v4595 = vmul.f32 %v4570, %v4578
        %v4596 = vld [vmem:[%s6] sm:$0x1]
        %v4598 = vlaneseq
        %v4599 = vshrl.u32 %v4598, 7
        %v4600 = vsub.s32 0, %v4599
        %v4601 = vrot.slane %v4596, %v4600
        %v4603 = vadd.f32 %v4580, %v4601
        %v4604 = vadd.f32 %v4581, %v4601
        %v4605 = vadd.f32 %v4582, %v4601
        %v4606 = vadd.f32 %v4583, %v4601
        %v4607 = vadd.f32 %v4584, %v4601
        %v4608 = vadd.f32 %v4585, %v4601
        %v4609 = vadd.f32 %v4586, %v4601
        %v4610 = vadd.f32 %v4587, %v4601
        %v4611 = vadd.f32 %v4588, %v4601
        %v4612 = vadd.f32 %v4589, %v4601
        %v4613 = vadd.f32 %v4590, %v4601
        %v4614 = vadd.f32 %v4591, %v4601
        %v4615 = vadd.f32 %v4592, %v4601
        %v4616 = vadd.f32 %v4593, %v4601
        %v4617 = vadd.f32 %v4594, %v4601
        %v4618 = vadd.f32 %v4595, %v4601
        %4619 = vst.msk [vmem:[%s359] sm:$0xff] %vm378, %v4603
        %4620 = vst.msk [vmem:[%s359 + $0x8] sm:$0xff] %vm378, %v4604
        %4621 = vst.msk [vmem:[%s359 + $0x10] sm:$0xff] %vm378, %v4605
        %4622 = vst.msk [vmem:[%s359 + $0x18] sm:$0xff] %vm378, %v4606
        %4623 = vst.msk [vmem:[%s359 + $0x20] sm:$0xff] %vm378, %v4607
        %4624 = vst.msk [vmem:[%s359 + $0x28] sm:$0xff] %vm378, %v4608
        %4625 = vst.msk [vmem:[%s359 + $0x30] sm:$0xff] %vm378, %v4609
        %4626 = vst.msk [vmem:[%s359 + $0x38] sm:$0xff] %vm378, %v4610
        %4627 = vst.msk [vmem:[%s359 + $0x40] sm:$0xff] %vm378, %v4611
        %4628 = vst.msk [vmem:[%s359 + $0x48] sm:$0xff] %vm378, %v4612
        %4629 = vst.msk [vmem:[%s359 + $0x50] sm:$0xff] %vm378, %v4613
        %4630 = vst.msk [vmem:[%s359 + $0x58] sm:$0xff] %vm378, %v4614
        %4631 = vst.msk [vmem:[%s359 + $0x60] sm:$0xff] %vm378, %v4615
        %4632 = vst.msk [vmem:[%s359 + $0x68] sm:$0xff] %vm378, %v4616
        %4633 = vst.msk [vmem:[%s359 + $0x70] sm:$0xff] %vm378, %v4617
        %4634 = vst.msk [vmem:[%s359 + $0x78] sm:$0xff] %vm378, %v4618
        %s4635 = sand.u32 %s202, 1
        %s4636 = scalar_lea.sflag [#allocation4], %s4635
        %s4637 = sand.u32 %s202, 1
        %s4638 = smul.addr %s4637, 128
        %s4639 = scalar_lea.vmem [#allocation10], %s4638
        // Predicated region
        $region65: #{swin_pc_forward.1} parent=47 // pred_check
          %p4640 = pneg %p212
        $region66: #{swin_pc_forward.1} parent=47 // pred_check_branch
          %4642 = sbr.rel (%p4640) target = $region68
        $region67: #{swin_pc_forward.1} parent=47 // pred_region
          %s4643 = smul.u32 8, %s31
          %s4645 = ssub.s32 2048, 2048
          %4646 = vsyncadd %s4636, %s4645
          %s4647 = smul.addr %s4643, 2
          %s4648 = smul.addr %s30, 32
          %s4649 = sadd.s32 %s4647, %s4648
          %s4650 = smul.addr %s4649, 128
          %s4651 = scalar_lea.hbm %s7, %s4650
          %s4652 = sshll.u32 %s4639, 4
          %s4653 = int_to_ptr.vmem [resolvable:$true] %s4652
          %4658 = dma.vmem_to_hbm [thread:$0]  %s4653, 2048, %s4651, %s4636, 128, 128, 8
        $region68: #{swin_pc_forward.1} parent=47 // pred_fallthru
          _
      $region48: #{swin_pc_forward.1} parent=5 // pred_fallthru
        _
      %p4659 = scmp.le.s32.totalorder 2, %s21
      // Predicated region
      $region69: #{swin_pc_forward.1} parent=5 // pred_check
        %p4660 = pneg %p4659
      $region70: #{swin_pc_forward.1} parent=5 // pred_check_branch
        %4662 = sbr.rel (%p4660) target = $region72
      $region71: #{swin_pc_forward.1} parent=5 // pred_region
        %s4663 = ssub.s32 %s21, 2
        // Predicated region
        $region73: #{swin_pc_forward.1} parent=71 // pred_check
          %p4664 = pneg %p218
        $region74: #{swin_pc_forward.1} parent=71 // pred_check_branch
          %4666 = sbr.rel (%p4664) target = $region76
        $region75: #{swin_pc_forward.1} parent=71 // pred_region
          %s4667 = sand.u32 %s203, 1
          %s4668 = scalar_lea.sflag [#allocation4], %s4667
          %s4669 = sand.u32 %s203, 1
          %s4670 = smul.addr %s4669, 128
          %s4671 = scalar_lea.vmem [#allocation10], %s4670
          %4672 = dma.done %s4668, 2048
        $region76: #{swin_pc_forward.1} parent=71 // pred_fallthru
          _
      $region72: #{swin_pc_forward.1} parent=5 // pred_fallthru
        _
    $region6: #{swin_pc_forward.1} parent=1 // loop_footer
      %s25 = sadd.s32 1, %s21
    $region7: #{swin_pc_forward.1} parent=1 // loop_footer_branch
      %20 = sbr.rel target = $region3
    $region8: #{swin_pc_forward.1} parent=1 // loop_exit
      _
    %4673 = vsyncpa [#allocation3], 1
    %s4674 = scalar_lea.sflag [#allocation3], 1
    %4675 = vsyncpa %s4674, 1
    %4676 = vsyncpa [#allocation6], 1
    %4677 = vsyncpa [#allocation9], 1
    %4678 = vsyncpa [#allocation4], 1
    %s4679 = scalar_lea.sflag [#allocation4], 1
    %4680 = vsyncpa %s4679, 1

</llo_original>
